<compile_context>
chip_gen: v7x
topology: tpu7x:2x2x1
jax: 0.10.0
libtpu: 0.0.40
codegen_flags: <defaults>
</compile_context>

<pallas_src>
import functools

import jax
import jax.numpy as jnp
from jax.experimental import pallas as pl
from jax.experimental.pallas import tpu as pltpu

# ----------------------------- config (small ViT) -----------------------------
B, C, H, W = 2, 3, 16, 16          # input image (NCHW)
PATCH = 8                          # patch size  -> 2x2 = 4 patches
NPATCH = (H // PATCH) * (W // PATCH)
SEQ = 1 + NPATCH                   # [CLS] + patches
CPP = C * PATCH * PATCH            # flattened patch length
D = 32                             # hidden size
NH = 2                             # attention heads
DH = D // NH                       # head dim
MLP = 64                           # MLP hidden
NLAYERS = 2
EPS = 1e-6
VEC_PAD = 128                      # lane padding for the bias / vector slabs


# ------------------------------ fused ViT kernel ------------------------------

def _vit_fused_kernel(patches_ref, patch_w_ref, vecs_ref, wd_ref, w2_ref,
                      bias_ref, out_ref, *, batch, patch_tokens):
    """Single invocation: the whole batch, all layers, everything in VMEM.

    Slab layouts:
      patches_ref [batch*SEQ, CPP]   (row 0 of every batch block is zeros: CLS slot)
      patch_w_ref [CPP, D]
      vecs_ref    [SEQ+2, 128]       rows 0..SEQ-1 = tok_bias, SEQ = lnf_g, SEQ+1 = lnf_b
      wd_ref      [NLAYERS, D, 3D+D+MLP]   columns = [wqkv | wo | w1]
      w2_ref      [NLAYERS, MLP, D]
      bias_ref    [NLAYERS, 8, 128]  rows = ln1_g, ln1_b, bqkv, bo, ln2_g, ln2_b, b1, b2
    """
    f32 = jnp.float32
    scale = 1.0 / (DH ** 0.5)

    def layer_norm(x, g, b):
        mu = jnp.mean(x, axis=-1, keepdims=True)
        xc = x - mu
        var = jnp.mean(xc * xc, axis=-1, keepdims=True)
        return xc * jax.lax.rsqrt(var + EPS) * g + b

    # ---- patch embedding + (CLS | pos | patch-bias) additive table -----------
    # The CLS row of `patches` is exactly zero, so its matmul row is zero and
    # tok_bias supplies the CLS token (safe in f32; would break if quantized).
    xp = patches_ref[...].astype(f32)                                  # [BS, CPP]
    h = jnp.dot(xp, patch_w_ref[...], preferred_element_type=f32)      # [BS, D]
    tok_bias = vecs_ref[0:SEQ, 0:D]                                    # [SEQ, D]
    h = h + jnp.concatenate([tok_bias] * batch, axis=0)                # tile over batch

    for l in range(NLAYERS):                        # static unroll (NLAYERS small)
        # static ref slices of the packed slabs (cheap)
        wqkv = wd_ref[l, :, 0:3 * D]                                   # [D, 3D]
        wo = wd_ref[l, :, 3 * D:4 * D]                                 # [D, D]
        w1 = wd_ref[l, :, 4 * D:4 * D + MLP]                           # [D, MLP]
        w2 = w2_ref[l]                                                 # [MLP, D]

        bias = bias_ref[l]                                             # [8, 128]
        ln1_g = bias[0:1, 0:D]
        ln1_b = bias[1:2, 0:D]
        bqkv = bias[2:3, 0:3 * D]
        bo = bias[3:4, 0:D]
        ln2_g = bias[4:5, 0:D]
        ln2_b = bias[5:6, 0:D]
        b1 = bias[6:7, 0:MLP]
        b2 = bias[7:8, 0:D]

        # --------------------------- attention block ---------------------------
        xn = layer_norm(h, ln1_g, ln1_b)                               # [BS, D]
        qkv = jnp.dot(xn, wqkv, preferred_element_type=f32) + bqkv     # [BS, 3D]

        attn_rows = []
        for b in range(batch):                       # static; only SEQxSEQ part
            qkv_b = qkv[b * SEQ:(b + 1) * SEQ, :]                      # [SEQ, 3D]
            heads = []
            for hd in range(NH):                     # static unroll over heads
                q = qkv_b[:, hd * DH:(hd + 1) * DH]
                k = qkv_b[:, D + hd * DH:D + (hd + 1) * DH]
                v = qkv_b[:, 2 * D + hd * DH:2 * D + (hd + 1) * DH]
                # scores: contract DH of q with DH of k (no explicit transpose)
                s = jax.lax.dot_general(q, k, (((1,), (1,)), ((), ())),
                                        preferred_element_type=f32) * scale
                m = jnp.max(s, axis=-1, keepdims=True)
                p = jnp.exp(s - m)
                denom = jnp.sum(p, axis=-1, keepdims=True)
                p = p * pl.reciprocal(denom, approx=True)              # EUP vrcp
                heads.append(jnp.dot(p, v, preferred_element_type=f32))  # [SEQ, DH]
            attn_rows.append(jnp.concatenate(heads, axis=-1))          # [SEQ, D]
        attn = jnp.concatenate(attn_rows, axis=0)                      # [BS, D]
        # single output projection per layer (heads + batch merged first)
        h = h + jnp.dot(attn, wo, preferred_element_type=f32) + bo

        # ------------------------------ MLP block ------------------------------
        xn2 = layer_norm(h, ln2_g, ln2_b)
        mid = jnp.dot(xn2, w1, preferred_element_type=f32) + b1
        mid = jax.nn.gelu(mid, approximate=True)
        h = h + jnp.dot(mid, w2, preferred_element_type=f32) + b2

    # final LayerNorm
    lnf_g = vecs_ref[SEQ:SEQ + 1, 0:D]
    lnf_b = vecs_ref[SEQ + 1:SEQ + 2, 0:D]
    h = layer_norm(h, lnf_g, lnf_b)                                    # [BS, D]

    if patch_tokens:
        # last_hidden_state[:, 1:, :]  -> [batch, NPATCH, D]
        for b in range(batch):
            out_ref[b] = h[b * SEQ + 1:(b + 1) * SEQ, :].astype(out_ref.dtype)
    else:
        # last_hidden_state[:, 0, :]   -> [batch, D]
        cls = jnp.concatenate(
            [h[b * SEQ:b * SEQ + 1, :] for b in range(batch)], axis=0)
        out_ref[...] = cls.astype(out_ref.dtype)


def vit_forward_tokens(params, x, *, patch_tokens):
    b = x.shape[0]
    # Patch extraction (layout glue): NCHW -> [B, NPATCH, C*P*P] in (C,Ph,Pw) order.
    # TODO(synk): at real image sizes fold this permutation into a row-permuted
    # patch_w (or gather patches in-kernel) to drop the XLA transpose copy.
    xp = x.reshape(b, C, H // PATCH, PATCH, W // PATCH, PATCH)
    xp = xp.transpose(0, 2, 4, 1, 3, 5).reshape(b, NPATCH, CPP)
    # prepend a zero row per batch element so the patch matmul yields 0 for CLS,
    # then stack the batch along rows: [b*SEQ, CPP]
    xp = jnp.pad(xp, ((0, 0), (1, 0), (0, 0))).reshape(b * SEQ, CPP)

    if patch_tokens:
        out_shape = jax.ShapeDtypeStruct((b, NPATCH, D), x.dtype)
    else:
        out_shape = jax.ShapeDtypeStruct((b, D), x.dtype)

    kernel = functools.partial(_vit_fused_kernel, batch=b,
                               patch_tokens=patch_tokens)
    # No grid: one invocation, whole-array VMEM blocks (tiny model fits easily).
    return pl.pallas_call(
        kernel,
        out_shape=out_shape,
        compiler_params=pltpu.CompilerParams(
            vmem_limit_bytes=32 * 1024 * 1024),
    )(xp, params["patch_w"], params["vecs"], params["wd"], params["w2"],
      params["bias"])


@functools.partial(jax.jit, static_argnames=("aggregation",))
def vit_wrapper_forward(params, x, aggregation):
    """Pallas equivalent of VitWrapper.forward."""
    if aggregation in ("netvlad", "gem"):
        return vit_forward_tokens(params, x, patch_tokens=True)   # [B, S-1, D]
    else:
        return vit_forward_tokens(params, x, patch_tokens=False)  # [B, D]


# --------------------------- deterministic parameters ---------------------------

def init_params(key):
    ks = iter(jax.random.split(key, 64))
    nrm = lambda shape, s=0.02: (s * jax.random.normal(next(ks), shape)).astype(jnp.float32)

    def pad_lanes(v):
        return jnp.pad(v, ((0, 0), (0, VEC_PAD - v.shape[1])))

    cls = nrm((1, D))
    pos = nrm((SEQ, D))
    patch_b = nrm((D,))
    # fold CLS token, positional embedding and patch bias into one additive table
    tok_bias = pos + jnp.concatenate(
        [cls, jnp.tile(patch_b[None, :], (NPATCH, 1))], axis=0)       # [SEQ, D]
    lnf_g = jnp.ones((1, D), jnp.float32)
    lnf_b = jnp.zeros((1, D), jnp.float32)
    # vecs slab: [SEQ+2, 128] = rows [tok_bias | lnf_g | lnf_b], lane-padded
    vecs = pad_lanes(jnp.concatenate([tok_bias, lnf_g, lnf_b], axis=0))

    wd_layers, w2_layers, bias_layers = [], [], []
    for _ in range(NLAYERS):
        # fused QKV: columns are [Q | K | V]; wd slab columns are [wqkv | wo | w1]
        wqkv = jnp.concatenate([nrm((D, D)) for _ in range(3)], axis=1)   # [D, 3D]
        wo = nrm((D, D))
        w1 = nrm((D, MLP))
        w2 = nrm((MLP, D))
        bqkv = nrm((1, 3 * D))
        bo = nrm((1, D))
        b1 = nrm((1, MLP))
        b2 = nrm((1, D))
        ln1_g = jnp.ones((1, D), jnp.float32)
        ln1_b = jnp.zeros((1, D), jnp.float32)
        ln2_g = jnp.ones((1, D), jnp.float32)
        ln2_b = jnp.zeros((1, D), jnp.float32)

        wd_layers.append(jnp.concatenate([wqkv, wo, w1], axis=1))      # [D, 3D+D+MLP]
        w2_layers.append(w2)                                           # [MLP, D]
        bias_layers.append(jnp.concatenate(
            [pad_lanes(ln1_g), pad_lanes(ln1_b), pad_lanes(bqkv),
             pad_lanes(bo), pad_lanes(ln2_g), pad_lanes(ln2_b),
             pad_lanes(b1), pad_lanes(b2)], axis=0))                   # [8, 128]

    params = {
        # conv weight [D,C,P,P] flattened in (C,Ph,Pw) order and transposed
        "patch_w": nrm((CPP, D)),
        "vecs": vecs.astype(jnp.float32),
        "wd": jnp.stack(wd_layers, axis=0).astype(jnp.float32),
        "w2": jnp.stack(w2_layers, axis=0).astype(jnp.float32),
        "bias": jnp.stack(bias_layers, axis=0).astype(jnp.float32),
    }
    return params


# ------------------------------------ main ------------------------------------

if __name__ == "__main__":
    params = init_params(jax.random.PRNGKey(42))
    x = jax.random.normal(jax.random.PRNGKey(0), (B, C, H, W), dtype=jnp.float32)

    out_gem = jax.block_until_ready(vit_wrapper_forward(params, x, "gem"))
    out_cls = jax.block_until_ready(vit_wrapper_forward(params, x, "cls"))

    assert out_gem.shape == (B, SEQ - 1, D), out_gem.shape
    assert out_cls.shape == (B, D), out_cls.shape
    assert bool(jnp.all(jnp.isfinite(out_gem))) and bool(jnp.all(jnp.isfinite(out_cls)))
    print("KERNEL_OK")
</pallas_src>

<mosaic_0001>
module attributes {stable_mosaic.version = 11 : i64} {
  func.func @_vit_fused_kernel(%arg0: memref<10x192xf32, #tpu.memory_space<vmem>>, %arg1: memref<192x32xf32, #tpu.memory_space<vmem>>, %arg2: memref<7x128xf32, #tpu.memory_space<vmem>>, %arg3: memref<2x32x192xf32, #tpu.memory_space<vmem>>, %arg4: memref<2x64x32xf32, #tpu.memory_space<vmem>>, %arg5: memref<2x8x128xf32, #tpu.memory_space<vmem>>, %arg6: memref<2x4x32xf32, #tpu.memory_space<vmem>>) attributes {dimension_semantics = [], scalar_prefetch = 0 : i64, scratch_operands = 0 : i64, tpu.core_type = #tpu.core_type<tc>} {
    %c0 = arith.constant 0 : index
    %c0_0 = arith.constant 0 : index
    %0 = vector.load %arg0[%c0, %c0_0] : memref<10x192xf32, #tpu.memory_space<vmem>>, vector<10x192xf32>
    %c0_1 = arith.constant 0 : index
    %c0_2 = arith.constant 0 : index
    %1 = vector.load %arg1[%c0_1, %c0_2] : memref<192x32xf32, #tpu.memory_space<vmem>>, vector<192x32xf32>
    %cst = arith.constant dense<0.000000e+00> : vector<10x32xf32>
    %2 = tpu.matmul %0, %1, %cst {dimension_numbers = #tpu.dot_dimension_numbers<[1], [0], [0], [1], [0, 0, 1, 1], [], []>} : vector<10x192xf32>, vector<192x32xf32>, vector<10x32xf32> -> vector<10x32xf32>
    %c0_3 = arith.constant 0 : index
    %c0_4 = arith.constant 0 : index
    %3 = vector.load %arg2[%c0_3, %c0_4] : memref<7x128xf32, #tpu.memory_space<vmem>>, vector<5x32xf32>
    %4 = tpu.concatenate %3, %3 in 0 : vector<5x32xf32>, vector<5x32xf32> -> vector<10x32xf32>
    %5 = arith.addf %2, %4 : vector<10x32xf32>
    %c0_5 = arith.constant 0 : index
    %c0_6 = arith.constant 0 : index
    %c0_7 = arith.constant 0 : index
    %6 = vector.load %arg3[%c0_5, %c0_6, %c0_7] : memref<2x32x192xf32, #tpu.memory_space<vmem>>, vector<1x32x96xf32>
    %7 = vector.shape_cast %6 : vector<1x32x96xf32> to vector<32x96xf32>
    %c0_8 = arith.constant 0 : index
    %c0_9 = arith.constant 0 : index
    %c96 = arith.constant 96 : index
    %8 = vector.load %arg3[%c0_8, %c0_9, %c96] : memref<2x32x192xf32, #tpu.memory_space<vmem>>, vector<1x32x32xf32>
    %9 = vector.shape_cast %8 : vector<1x32x32xf32> to vector<32x32xf32>
    %c0_10 = arith.constant 0 : index
    %c0_11 = arith.constant 0 : index
    %c128 = arith.constant 128 : index
    %10 = vector.load %arg3[%c0_10, %c0_11, %c128] : memref<2x32x192xf32, #tpu.memory_space<vmem>>, vector<1x32x64xf32>
    %11 = vector.shape_cast %10 : vector<1x32x64xf32> to vector<32x64xf32>
    %c0_12 = arith.constant 0 : index
    %c0_13 = arith.constant 0 : index
    %c0_14 = arith.constant 0 : index
    %12 = vector.load %arg4[%c0_12, %c0_13, %c0_14] : memref<2x64x32xf32, #tpu.memory_space<vmem>>, vector<1x64x32xf32>
    %13 = vector.shape_cast %12 : vector<1x64x32xf32> to vector<64x32xf32>
    %c0_15 = arith.constant 0 : index
    %c0_16 = arith.constant 0 : index
    %c0_17 = arith.constant 0 : index
    %14 = vector.load %arg5[%c0_15, %c0_16, %c0_17] : memref<2x8x128xf32, #tpu.memory_space<vmem>>, vector<1x8x128xf32>
    %15 = vector.shape_cast %14 : vector<1x8x128xf32> to vector<8x128xf32>
    %16 = vector.extract_strided_slice %15 {offsets = [0, 0], sizes = [1, 32], strides = [1, 1]} : vector<8x128xf32> to vector<1x32xf32>
    %17 = vector.extract_strided_slice %15 {offsets = [1, 0], sizes = [1, 32], strides = [1, 1]} : vector<8x128xf32> to vector<1x32xf32>
    %18 = vector.extract_strided_slice %15 {offsets = [2, 0], sizes = [1, 96], strides = [1, 1]} : vector<8x128xf32> to vector<1x96xf32>
    %19 = vector.extract_strided_slice %15 {offsets = [3, 0], sizes = [1, 32], strides = [1, 1]} : vector<8x128xf32> to vector<1x32xf32>
    %20 = vector.extract_strided_slice %15 {offsets = [4, 0], sizes = [1, 32], strides = [1, 1]} : vector<8x128xf32> to vector<1x32xf32>
    %21 = vector.extract_strided_slice %15 {offsets = [5, 0], sizes = [1, 32], strides = [1, 1]} : vector<8x128xf32> to vector<1x32xf32>
    %22 = vector.extract_strided_slice %15 {offsets = [6, 0], sizes = [1, 64], strides = [1, 1]} : vector<8x128xf32> to vector<1x64xf32>
    %23 = vector.extract_strided_slice %15 {offsets = [7, 0], sizes = [1, 32], strides = [1, 1]} : vector<8x128xf32> to vector<1x32xf32>
    %cst_18 = arith.constant dense<0.000000e+00> : vector<10xf32>
    %24 = vector.multi_reduction <add>, %5, %cst_18 [1] : vector<10x32xf32> to vector<10xf32>
    %25 = vector.shape_cast %24 : vector<10xf32> to vector<10x1xf32>
    %cst_19 = arith.constant 3.200000e+01 : f32
    %26 = vector.broadcast %cst_19 : f32 to vector<10x1xf32>
    %27 = arith.divf %25, %26 : vector<10x1xf32>
    %28 = vector.broadcast %27 : vector<10x1xf32> to vector<10x32xf32>
    %29 = arith.subf %5, %28 : vector<10x32xf32>
    %30 = arith.mulf %29, %29 : vector<10x32xf32>
    %cst_20 = arith.constant dense<0.000000e+00> : vector<10xf32>
    %31 = vector.multi_reduction <add>, %30, %cst_20 [1] : vector<10x32xf32> to vector<10xf32>
    %32 = vector.shape_cast %31 : vector<10xf32> to vector<10x1xf32>
    %cst_21 = arith.constant 3.200000e+01 : f32
    %33 = vector.broadcast %cst_21 : f32 to vector<10x1xf32>
    %34 = arith.divf %32, %33 : vector<10x1xf32>
    %cst_22 = arith.constant 9.99999997E-7 : f32
    %35 = vector.broadcast %cst_22 : f32 to vector<10x1xf32>
    %36 = arith.addf %34, %35 : vector<10x1xf32>
    %37 = math.rsqrt %36 : vector<10x1xf32>
    %38 = vector.broadcast %37 : vector<10x1xf32> to vector<10x32xf32>
    %39 = arith.mulf %29, %38 : vector<10x32xf32>
    %40 = vector.broadcast %16 : vector<1x32xf32> to vector<10x32xf32>
    %41 = arith.mulf %39, %40 : vector<10x32xf32>
    %42 = vector.broadcast %17 : vector<1x32xf32> to vector<10x32xf32>
    %43 = arith.addf %41, %42 : vector<10x32xf32>
    %cst_23 = arith.constant dense<0.000000e+00> : vector<10x96xf32>
    %44 = tpu.matmul %43, %7, %cst_23 {dimension_numbers = #tpu.dot_dimension_numbers<[1], [0], [0], [1], [0, 0, 1, 1], [], []>} : vector<10x32xf32>, vector<32x96xf32>, vector<10x96xf32> -> vector<10x96xf32>
    %45 = vector.broadcast %18 : vector<1x96xf32> to vector<10x96xf32>
    %46 = arith.addf %44, %45 : vector<10x96xf32>
    %47 = vector.extract_strided_slice %46 {offsets = [0, 0], sizes = [5, 96], strides = [1, 1]} : vector<10x96xf32> to vector<5x96xf32>
    %48 = vector.extract_strided_slice %47 {offsets = [0, 0], sizes = [5, 16], strides = [1, 1]} : vector<5x96xf32> to vector<5x16xf32>
    %49 = vector.extract_strided_slice %47 {offsets = [0, 32], sizes = [5, 16], strides = [1, 1]} : vector<5x96xf32> to vector<5x16xf32>
    %50 = vector.extract_strided_slice %47 {offsets = [0, 64], sizes = [5, 16], strides = [1, 1]} : vector<5x96xf32> to vector<5x16xf32>
    %cst_24 = arith.constant dense<0.000000e+00> : vector<5x5xf32>
    %51 = tpu.matmul %48, %49, %cst_24 {dimension_numbers = #tpu.dot_dimension_numbers<[1], [1], [0], [0], [0, 0, 1, 0], [], []>} : vector<5x16xf32>, vector<5x16xf32>, vector<5x5xf32> -> vector<5x5xf32>
    %cst_25 = arith.constant 2.500000e-01 : f32
    %52 = vector.broadcast %cst_25 : f32 to vector<5x5xf32>
    %53 = arith.mulf %51, %52 : vector<5x5xf32>
    %cst_26 = arith.constant dense<0xFF800000> : vector<5xf32>
    %54 = vector.multi_reduction <maximumf>, %53, %cst_26 [1] : vector<5x5xf32> to vector<5xf32>
    %55 = vector.shape_cast %54 : vector<5xf32> to vector<5x1xf32>
    %56 = vector.broadcast %55 : vector<5x1xf32> to vector<5x5xf32>
    %57 = arith.subf %53, %56 : vector<5x5xf32>
    %58 = math.exp %57 : vector<5x5xf32>
    %cst_27 = arith.constant dense<0.000000e+00> : vector<5xf32>
    %59 = vector.multi_reduction <add>, %58, %cst_27 [1] : vector<5x5xf32> to vector<5xf32>
    %60 = vector.shape_cast %59 : vector<5xf32> to vector<5x1xf32>
    %61 = tpu.reciprocal %60 {approx = true} : vector<5x1xf32> -> vector<5x1xf32>
    %62 = vector.broadcast %61 : vector<5x1xf32> to vector<5x5xf32>
    %63 = arith.mulf %58, %62 : vector<5x5xf32>
    %cst_28 = arith.constant dense<0.000000e+00> : vector<5x16xf32>
    %64 = tpu.matmul %63, %50, %cst_28 {dimension_numbers = #tpu.dot_dimension_numbers<[1], [0], [0], [1], [0, 0, 1, 1], [], []>} : vector<5x5xf32>, vector<5x16xf32>, vector<5x16xf32> -> vector<5x16xf32>
    %65 = vector.extract_strided_slice %47 {offsets = [0, 16], sizes = [5, 16], strides = [1, 1]} : vector<5x96xf32> to vector<5x16xf32>
    %66 = vector.extract_strided_slice %47 {offsets = [0, 48], sizes = [5, 16], strides = [1, 1]} : vector<5x96xf32> to vector<5x16xf32>
    %67 = vector.extract_strided_slice %47 {offsets = [0, 80], sizes = [5, 16], strides = [1, 1]} : vector<5x96xf32> to vector<5x16xf32>
    %cst_29 = arith.constant dense<0.000000e+00> : vector<5x5xf32>
    %68 = tpu.matmul %65, %66, %cst_29 {dimension_numbers = #tpu.dot_dimension_numbers<[1], [1], [0], [0], [0, 0, 1, 0], [], []>} : vector<5x16xf32>, vector<5x16xf32>, vector<5x5xf32> -> vector<5x5xf32>
    %cst_30 = arith.constant 2.500000e-01 : f32
    %69 = vector.broadcast %cst_30 : f32 to vector<5x5xf32>
    %70 = arith.mulf %68, %69 : vector<5x5xf32>
    %cst_31 = arith.constant dense<0xFF800000> : vector<5xf32>
    %71 = vector.multi_reduction <maximumf>, %70, %cst_31 [1] : vector<5x5xf32> to vector<5xf32>
    %72 = vector.shape_cast %71 : vector<5xf32> to vector<5x1xf32>
    %73 = vector.broadcast %72 : vector<5x1xf32> to vector<5x5xf32>
    %74 = arith.subf %70, %73 : vector<5x5xf32>
    %75 = math.exp %74 : vector<5x5xf32>
    %cst_32 = arith.constant dense<0.000000e+00> : vector<5xf32>
    %76 = vector.multi_reduction <add>, %75, %cst_32 [1] : vector<5x5xf32> to vector<5xf32>
    %77 = vector.shape_cast %76 : vector<5xf32> to vector<5x1xf32>
    %78 = tpu.reciprocal %77 {approx = true} : vector<5x1xf32> -> vector<5x1xf32>
    %79 = vector.broadcast %78 : vector<5x1xf32> to vector<5x5xf32>
    %80 = arith.mulf %75, %79 : vector<5x5xf32>
    %cst_33 = arith.constant dense<0.000000e+00> : vector<5x16xf32>
    %81 = tpu.matmul %80, %67, %cst_33 {dimension_numbers = #tpu.dot_dimension_numbers<[1], [0], [0], [1], [0, 0, 1, 1], [], []>} : vector<5x5xf32>, vector<5x16xf32>, vector<5x16xf32> -> vector<5x16xf32>
    %82 = tpu.concatenate %64, %81 in 1 : vector<5x16xf32>, vector<5x16xf32> -> vector<5x32xf32>
    %83 = vector.extract_strided_slice %46 {offsets = [5, 0], sizes = [5, 96], strides = [1, 1]} : vector<10x96xf32> to vector<5x96xf32>
    %84 = vector.extract_strided_slice %83 {offsets = [0, 0], sizes = [5, 16], strides = [1, 1]} : vector<5x96xf32> to vector<5x16xf32>
    %85 = vector.extract_strided_slice %83 {offsets = [0, 32], sizes = [5, 16], strides = [1, 1]} : vector<5x96xf32> to vector<5x16xf32>
    %86 = vector.extract_strided_slice %83 {offsets = [0, 64], sizes = [5, 16], strides = [1, 1]} : vector<5x96xf32> to vector<5x16xf32>
    %cst_34 = arith.constant dense<0.000000e+00> : vector<5x5xf32>
    %87 = tpu.matmul %84, %85, %cst_34 {dimension_numbers = #tpu.dot_dimension_numbers<[1], [1], [0], [0], [0, 0, 1, 0], [], []>} : vector<5x16xf32>, vector<5x16xf32>, vector<5x5xf32> -> vector<5x5xf32>
    %cst_35 = arith.constant 2.500000e-01 : f32
    %88 = vector.broadcast %cst_35 : f32 to vector<5x5xf32>
    %89 = arith.mulf %87, %88 : vector<5x5xf32>
    %cst_36 = arith.constant dense<0xFF800000> : vector<5xf32>
    %90 = vector.multi_reduction <maximumf>, %89, %cst_36 [1] : vector<5x5xf32> to vector<5xf32>
    %91 = vector.shape_cast %90 : vector<5xf32> to vector<5x1xf32>
    %92 = vector.broadcast %91 : vector<5x1xf32> to vector<5x5xf32>
    %93 = arith.subf %89, %92 : vector<5x5xf32>
    %94 = math.exp %93 : vector<5x5xf32>
    %cst_37 = arith.constant dense<0.000000e+00> : vector<5xf32>
    %95 = vector.multi_reduction <add>, %94, %cst_37 [1] : vector<5x5xf32> to vector<5xf32>
    %96 = vector.shape_cast %95 : vector<5xf32> to vector<5x1xf32>
    %97 = tpu.reciprocal %96 {approx = true} : vector<5x1xf32> -> vector<5x1xf32>
    %98 = vector.broadcast %97 : vector<5x1xf32> to vector<5x5xf32>
    %99 = arith.mulf %94, %98 : vector<5x5xf32>
    %cst_38 = arith.constant dense<0.000000e+00> : vector<5x16xf32>
    %100 = tpu.matmul %99, %86, %cst_38 {dimension_numbers = #tpu.dot_dimension_numbers<[1], [0], [0], [1], [0, 0, 1, 1], [], []>} : vector<5x5xf32>, vector<5x16xf32>, vector<5x16xf32> -> vector<5x16xf32>
    %101 = vector.extract_strided_slice %83 {offsets = [0, 16], sizes = [5, 16], strides = [1, 1]} : vector<5x96xf32> to vector<5x16xf32>
    %102 = vector.extract_strided_slice %83 {offsets = [0, 48], sizes = [5, 16], strides = [1, 1]} : vector<5x96xf32> to vector<5x16xf32>
    %103 = vector.extract_strided_slice %83 {offsets = [0, 80], sizes = [5, 16], strides = [1, 1]} : vector<5x96xf32> to vector<5x16xf32>
    %cst_39 = arith.constant dense<0.000000e+00> : vector<5x5xf32>
    %104 = tpu.matmul %101, %102, %cst_39 {dimension_numbers = #tpu.dot_dimension_numbers<[1], [1], [0], [0], [0, 0, 1, 0], [], []>} : vector<5x16xf32>, vector<5x16xf32>, vector<5x5xf32> -> vector<5x5xf32>
    %cst_40 = arith.constant 2.500000e-01 : f32
    %105 = vector.broadcast %cst_40 : f32 to vector<5x5xf32>
    %106 = arith.mulf %104, %105 : vector<5x5xf32>
    %cst_41 = arith.constant dense<0xFF800000> : vector<5xf32>
    %107 = vector.multi_reduction <maximumf>, %106, %cst_41 [1] : vector<5x5xf32> to vector<5xf32>
    %108 = vector.shape_cast %107 : vector<5xf32> to vector<5x1xf32>
    %109 = vector.broadcast %108 : vector<5x1xf32> to vector<5x5xf32>
    %110 = arith.subf %106, %109 : vector<5x5xf32>
    %111 = math.exp %110 : vector<5x5xf32>
    %cst_42 = arith.constant dense<0.000000e+00> : vector<5xf32>
    %112 = vector.multi_reduction <add>, %111, %cst_42 [1] : vector<5x5xf32> to vector<5xf32>
    %113 = vector.shape_cast %112 : vector<5xf32> to vector<5x1xf32>
    %114 = tpu.reciprocal %113 {approx = true} : vector<5x1xf32> -> vector<5x1xf32>
    %115 = vector.broadcast %114 : vector<5x1xf32> to vector<5x5xf32>
    %116 = arith.mulf %111, %115 : vector<5x5xf32>
    %cst_43 = arith.constant dense<0.000000e+00> : vector<5x16xf32>
    %117 = tpu.matmul %116, %103, %cst_43 {dimension_numbers = #tpu.dot_dimension_numbers<[1], [0], [0], [1], [0, 0, 1, 1], [], []>} : vector<5x5xf32>, vector<5x16xf32>, vector<5x16xf32> -> vector<5x16xf32>
    %118 = tpu.concatenate %100, %117 in 1 : vector<5x16xf32>, vector<5x16xf32> -> vector<5x32xf32>
    %119 = tpu.concatenate %82, %118 in 0 : vector<5x32xf32>, vector<5x32xf32> -> vector<10x32xf32>
    %cst_44 = arith.constant dense<0.000000e+00> : vector<10x32xf32>
    %120 = tpu.matmul %119, %9, %cst_44 {dimension_numbers = #tpu.dot_dimension_numbers<[1], [0], [0], [1], [0, 0, 1, 1], [], []>} : vector<10x32xf32>, vector<32x32xf32>, vector<10x32xf32> -> vector<10x32xf32>
    %121 = arith.addf %5, %120 : vector<10x32xf32>
    %122 = vector.broadcast %19 : vector<1x32xf32> to vector<10x32xf32>
    %123 = arith.addf %121, %122 : vector<10x32xf32>
    %cst_45 = arith.constant dense<0.000000e+00> : vector<10xf32>
    %124 = vector.multi_reduction <add>, %123, %cst_45 [1] : vector<10x32xf32> to vector<10xf32>
    %125 = vector.shape_cast %124 : vector<10xf32> to vector<10x1xf32>
    %cst_46 = arith.constant 3.200000e+01 : f32
    %126 = vector.broadcast %cst_46 : f32 to vector<10x1xf32>
    %127 = arith.divf %125, %126 : vector<10x1xf32>
    %128 = vector.broadcast %127 : vector<10x1xf32> to vector<10x32xf32>
    %129 = arith.subf %123, %128 : vector<10x32xf32>
    %130 = arith.mulf %129, %129 : vector<10x32xf32>
    %cst_47 = arith.constant dense<0.000000e+00> : vector<10xf32>
    %131 = vector.multi_reduction <add>, %130, %cst_47 [1] : vector<10x32xf32> to vector<10xf32>
    %132 = vector.shape_cast %131 : vector<10xf32> to vector<10x1xf32>
    %cst_48 = arith.constant 3.200000e+01 : f32
    %133 = vector.broadcast %cst_48 : f32 to vector<10x1xf32>
    %134 = arith.divf %132, %133 : vector<10x1xf32>
    %cst_49 = arith.constant 9.99999997E-7 : f32
    %135 = vector.broadcast %cst_49 : f32 to vector<10x1xf32>
    %136 = arith.addf %134, %135 : vector<10x1xf32>
    %137 = math.rsqrt %136 : vector<10x1xf32>
    %138 = vector.broadcast %137 : vector<10x1xf32> to vector<10x32xf32>
    %139 = arith.mulf %129, %138 : vector<10x32xf32>
    %140 = vector.broadcast %20 : vector<1x32xf32> to vector<10x32xf32>
    %141 = arith.mulf %139, %140 : vector<10x32xf32>
    %142 = vector.broadcast %21 : vector<1x32xf32> to vector<10x32xf32>
    %143 = arith.addf %141, %142 : vector<10x32xf32>
    %cst_50 = arith.constant dense<0.000000e+00> : vector<10x64xf32>
    %144 = tpu.matmul %143, %11, %cst_50 {dimension_numbers = #tpu.dot_dimension_numbers<[1], [0], [0], [1], [0, 0, 1, 1], [], []>} : vector<10x32xf32>, vector<32x64xf32>, vector<10x64xf32> -> vector<10x64xf32>
    %145 = vector.broadcast %22 : vector<1x64xf32> to vector<10x64xf32>
    %146 = arith.addf %144, %145 : vector<10x64xf32>
    %147 = arith.mulf %146, %146 : vector<10x64xf32>
    %148 = arith.mulf %146, %147 : vector<10x64xf32>
    %cst_51 = arith.constant 4.471500e-02 : f32
    %149 = vector.broadcast %cst_51 : f32 to vector<10x64xf32>
    %150 = arith.mulf %149, %148 : vector<10x64xf32>
    %151 = arith.addf %146, %150 : vector<10x64xf32>
    %cst_52 = arith.constant 0.797884583 : f32
    %152 = vector.broadcast %cst_52 : f32 to vector<10x64xf32>
    %153 = arith.mulf %152, %151 : vector<10x64xf32>
    %154 = math.tanh %153 : vector<10x64xf32>
    %cst_53 = arith.constant 1.000000e+00 : f32
    %155 = vector.broadcast %cst_53 : f32 to vector<10x64xf32>
    %156 = arith.addf %155, %154 : vector<10x64xf32>
    %cst_54 = arith.constant 5.000000e-01 : f32
    %157 = vector.broadcast %cst_54 : f32 to vector<10x64xf32>
    %158 = arith.mulf %157, %156 : vector<10x64xf32>
    %159 = arith.mulf %146, %158 : vector<10x64xf32>
    %cst_55 = arith.constant dense<0.000000e+00> : vector<10x32xf32>
    %160 = tpu.matmul %159, %13, %cst_55 {dimension_numbers = #tpu.dot_dimension_numbers<[1], [0], [0], [1], [0, 0, 1, 1], [], []>} : vector<10x64xf32>, vector<64x32xf32>, vector<10x32xf32> -> vector<10x32xf32>
    %161 = arith.addf %123, %160 : vector<10x32xf32>
    %162 = vector.broadcast %23 : vector<1x32xf32> to vector<10x32xf32>
    %163 = arith.addf %161, %162 : vector<10x32xf32>
    %c1 = arith.constant 1 : index
    %c0_56 = arith.constant 0 : index
    %c0_57 = arith.constant 0 : index
    %164 = vector.load %arg3[%c1, %c0_56, %c0_57] : memref<2x32x192xf32, #tpu.memory_space<vmem>>, vector<1x32x96xf32>
    %165 = vector.shape_cast %164 : vector<1x32x96xf32> to vector<32x96xf32>
    %c1_58 = arith.constant 1 : index
    %c0_59 = arith.constant 0 : index
    %c96_60 = arith.constant 96 : index
    %166 = vector.load %arg3[%c1_58, %c0_59, %c96_60] : memref<2x32x192xf32, #tpu.memory_space<vmem>>, vector<1x32x32xf32>
    %167 = vector.shape_cast %166 : vector<1x32x32xf32> to vector<32x32xf32>
    %c1_61 = arith.constant 1 : index
    %c0_62 = arith.constant 0 : index
    %c128_63 = arith.constant 128 : index
    %168 = vector.load %arg3[%c1_61, %c0_62, %c128_63] : memref<2x32x192xf32, #tpu.memory_space<vmem>>, vector<1x32x64xf32>
    %169 = vector.shape_cast %168 : vector<1x32x64xf32> to vector<32x64xf32>
    %c1_64 = arith.constant 1 : index
    %c0_65 = arith.constant 0 : index
    %c0_66 = arith.constant 0 : index
    %170 = vector.load %arg4[%c1_64, %c0_65, %c0_66] : memref<2x64x32xf32, #tpu.memory_space<vmem>>, vector<1x64x32xf32>
    %171 = vector.shape_cast %170 : vector<1x64x32xf32> to vector<64x32xf32>
    %c1_67 = arith.constant 1 : index
    %c0_68 = arith.constant 0 : index
    %c0_69 = arith.constant 0 : index
    %172 = vector.load %arg5[%c1_67, %c0_68, %c0_69] : memref<2x8x128xf32, #tpu.memory_space<vmem>>, vector<1x8x128xf32>
    %173 = vector.shape_cast %172 : vector<1x8x128xf32> to vector<8x128xf32>
    %174 = vector.extract_strided_slice %173 {offsets = [0, 0], sizes = [1, 32], strides = [1, 1]} : vector<8x128xf32> to vector<1x32xf32>
    %175 = vector.extract_strided_slice %173 {offsets = [1, 0], sizes = [1, 32], strides = [1, 1]} : vector<8x128xf32> to vector<1x32xf32>
    %176 = vector.extract_strided_slice %173 {offsets = [2, 0], sizes = [1, 96], strides = [1, 1]} : vector<8x128xf32> to vector<1x96xf32>
    %177 = vector.extract_strided_slice %173 {offsets = [3, 0], sizes = [1, 32], strides = [1, 1]} : vector<8x128xf32> to vector<1x32xf32>
    %178 = vector.extract_strided_slice %173 {offsets = [4, 0], sizes = [1, 32], strides = [1, 1]} : vector<8x128xf32> to vector<1x32xf32>
    %179 = vector.extract_strided_slice %173 {offsets = [5, 0], sizes = [1, 32], strides = [1, 1]} : vector<8x128xf32> to vector<1x32xf32>
    %180 = vector.extract_strided_slice %173 {offsets = [6, 0], sizes = [1, 64], strides = [1, 1]} : vector<8x128xf32> to vector<1x64xf32>
    %181 = vector.extract_strided_slice %173 {offsets = [7, 0], sizes = [1, 32], strides = [1, 1]} : vector<8x128xf32> to vector<1x32xf32>
    %cst_70 = arith.constant dense<0.000000e+00> : vector<10xf32>
    %182 = vector.multi_reduction <add>, %163, %cst_70 [1] : vector<10x32xf32> to vector<10xf32>
    %183 = vector.shape_cast %182 : vector<10xf32> to vector<10x1xf32>
    %cst_71 = arith.constant 3.200000e+01 : f32
    %184 = vector.broadcast %cst_71 : f32 to vector<10x1xf32>
    %185 = arith.divf %183, %184 : vector<10x1xf32>
    %186 = vector.broadcast %185 : vector<10x1xf32> to vector<10x32xf32>
    %187 = arith.subf %163, %186 : vector<10x32xf32>
    %188 = arith.mulf %187, %187 : vector<10x32xf32>
    %cst_72 = arith.constant dense<0.000000e+00> : vector<10xf32>
    %189 = vector.multi_reduction <add>, %188, %cst_72 [1] : vector<10x32xf32> to vector<10xf32>
    %190 = vector.shape_cast %189 : vector<10xf32> to vector<10x1xf32>
    %cst_73 = arith.constant 3.200000e+01 : f32
    %191 = vector.broadcast %cst_73 : f32 to vector<10x1xf32>
    %192 = arith.divf %190, %191 : vector<10x1xf32>
    %cst_74 = arith.constant 9.99999997E-7 : f32
    %193 = vector.broadcast %cst_74 : f32 to vector<10x1xf32>
    %194 = arith.addf %192, %193 : vector<10x1xf32>
    %195 = math.rsqrt %194 : vector<10x1xf32>
    %196 = vector.broadcast %195 : vector<10x1xf32> to vector<10x32xf32>
    %197 = arith.mulf %187, %196 : vector<10x32xf32>
    %198 = vector.broadcast %174 : vector<1x32xf32> to vector<10x32xf32>
    %199 = arith.mulf %197, %198 : vector<10x32xf32>
    %200 = vector.broadcast %175 : vector<1x32xf32> to vector<10x32xf32>
    %201 = arith.addf %199, %200 : vector<10x32xf32>
    %cst_75 = arith.constant dense<0.000000e+00> : vector<10x96xf32>
    %202 = tpu.matmul %201, %165, %cst_75 {dimension_numbers = #tpu.dot_dimension_numbers<[1], [0], [0], [1], [0, 0, 1, 1], [], []>} : vector<10x32xf32>, vector<32x96xf32>, vector<10x96xf32> -> vector<10x96xf32>
    %203 = vector.broadcast %176 : vector<1x96xf32> to vector<10x96xf32>
    %204 = arith.addf %202, %203 : vector<10x96xf32>
    %205 = vector.extract_strided_slice %204 {offsets = [0, 0], sizes = [5, 96], strides = [1, 1]} : vector<10x96xf32> to vector<5x96xf32>
    %206 = vector.extract_strided_slice %205 {offsets = [0, 0], sizes = [5, 16], strides = [1, 1]} : vector<5x96xf32> to vector<5x16xf32>
    %207 = vector.extract_strided_slice %205 {offsets = [0, 32], sizes = [5, 16], strides = [1, 1]} : vector<5x96xf32> to vector<5x16xf32>
    %208 = vector.extract_strided_slice %205 {offsets = [0, 64], sizes = [5, 16], strides = [1, 1]} : vector<5x96xf32> to vector<5x16xf32>
    %cst_76 = arith.constant dense<0.000000e+00> : vector<5x5xf32>
    %209 = tpu.matmul %206, %207, %cst_76 {dimension_numbers = #tpu.dot_dimension_numbers<[1], [1], [0], [0], [0, 0, 1, 0], [], []>} : vector<5x16xf32>, vector<5x16xf32>, vector<5x5xf32> -> vector<5x5xf32>
    %cst_77 = arith.constant 2.500000e-01 : f32
    %210 = vector.broadcast %cst_77 : f32 to vector<5x5xf32>
    %211 = arith.mulf %209, %210 : vector<5x5xf32>
    %cst_78 = arith.constant dense<0xFF800000> : vector<5xf32>
    %212 = vector.multi_reduction <maximumf>, %211, %cst_78 [1] : vector<5x5xf32> to vector<5xf32>
    %213 = vector.shape_cast %212 : vector<5xf32> to vector<5x1xf32>
    %214 = vector.broadcast %213 : vector<5x1xf32> to vector<5x5xf32>
    %215 = arith.subf %211, %214 : vector<5x5xf32>
    %216 = math.exp %215 : vector<5x5xf32>
    %cst_79 = arith.constant dense<0.000000e+00> : vector<5xf32>
    %217 = vector.multi_reduction <add>, %216, %cst_79 [1] : vector<5x5xf32> to vector<5xf32>
    %218 = vector.shape_cast %217 : vector<5xf32> to vector<5x1xf32>
    %219 = tpu.reciprocal %218 {approx = true} : vector<5x1xf32> -> vector<5x1xf32>
    %220 = vector.broadcast %219 : vector<5x1xf32> to vector<5x5xf32>
    %221 = arith.mulf %216, %220 : vector<5x5xf32>
    %cst_80 = arith.constant dense<0.000000e+00> : vector<5x16xf32>
    %222 = tpu.matmul %221, %208, %cst_80 {dimension_numbers = #tpu.dot_dimension_numbers<[1], [0], [0], [1], [0, 0, 1, 1], [], []>} : vector<5x5xf32>, vector<5x16xf32>, vector<5x16xf32> -> vector<5x16xf32>
    %223 = vector.extract_strided_slice %205 {offsets = [0, 16], sizes = [5, 16], strides = [1, 1]} : vector<5x96xf32> to vector<5x16xf32>
    %224 = vector.extract_strided_slice %205 {offsets = [0, 48], sizes = [5, 16], strides = [1, 1]} : vector<5x96xf32> to vector<5x16xf32>
    %225 = vector.extract_strided_slice %205 {offsets = [0, 80], sizes = [5, 16], strides = [1, 1]} : vector<5x96xf32> to vector<5x16xf32>
    %cst_81 = arith.constant dense<0.000000e+00> : vector<5x5xf32>
    %226 = tpu.matmul %223, %224, %cst_81 {dimension_numbers = #tpu.dot_dimension_numbers<[1], [1], [0], [0], [0, 0, 1, 0], [], []>} : vector<5x16xf32>, vector<5x16xf32>, vector<5x5xf32> -> vector<5x5xf32>
    %cst_82 = arith.constant 2.500000e-01 : f32
    %227 = vector.broadcast %cst_82 : f32 to vector<5x5xf32>
    %228 = arith.mulf %226, %227 : vector<5x5xf32>
    %cst_83 = arith.constant dense<0xFF800000> : vector<5xf32>
    %229 = vector.multi_reduction <maximumf>, %228, %cst_83 [1] : vector<5x5xf32> to vector<5xf32>
    %230 = vector.shape_cast %229 : vector<5xf32> to vector<5x1xf32>
    %231 = vector.broadcast %230 : vector<5x1xf32> to vector<5x5xf32>
    %232 = arith.subf %228, %231 : vector<5x5xf32>
    %233 = math.exp %232 : vector<5x5xf32>
    %cst_84 = arith.constant dense<0.000000e+00> : vector<5xf32>
    %234 = vector.multi_reduction <add>, %233, %cst_84 [1] : vector<5x5xf32> to vector<5xf32>
    %235 = vector.shape_cast %234 : vector<5xf32> to vector<5x1xf32>
    %236 = tpu.reciprocal %235 {approx = true} : vector<5x1xf32> -> vector<5x1xf32>
    %237 = vector.broadcast %236 : vector<5x1xf32> to vector<5x5xf32>
    %238 = arith.mulf %233, %237 : vector<5x5xf32>
    %cst_85 = arith.constant dense<0.000000e+00> : vector<5x16xf32>
    %239 = tpu.matmul %238, %225, %cst_85 {dimension_numbers = #tpu.dot_dimension_numbers<[1], [0], [0], [1], [0, 0, 1, 1], [], []>} : vector<5x5xf32>, vector<5x16xf32>, vector<5x16xf32> -> vector<5x16xf32>
    %240 = tpu.concatenate %222, %239 in 1 : vector<5x16xf32>, vector<5x16xf32> -> vector<5x32xf32>
    %241 = vector.extract_strided_slice %204 {offsets = [5, 0], sizes = [5, 96], strides = [1, 1]} : vector<10x96xf32> to vector<5x96xf32>
    %242 = vector.extract_strided_slice %241 {offsets = [0, 0], sizes = [5, 16], strides = [1, 1]} : vector<5x96xf32> to vector<5x16xf32>
    %243 = vector.extract_strided_slice %241 {offsets = [0, 32], sizes = [5, 16], strides = [1, 1]} : vector<5x96xf32> to vector<5x16xf32>
    %244 = vector.extract_strided_slice %241 {offsets = [0, 64], sizes = [5, 16], strides = [1, 1]} : vector<5x96xf32> to vector<5x16xf32>
    %cst_86 = arith.constant dense<0.000000e+00> : vector<5x5xf32>
    %245 = tpu.matmul %242, %243, %cst_86 {dimension_numbers = #tpu.dot_dimension_numbers<[1], [1], [0], [0], [0, 0, 1, 0], [], []>} : vector<5x16xf32>, vector<5x16xf32>, vector<5x5xf32> -> vector<5x5xf32>
    %cst_87 = arith.constant 2.500000e-01 : f32
    %246 = vector.broadcast %cst_87 : f32 to vector<5x5xf32>
    %247 = arith.mulf %245, %246 : vector<5x5xf32>
    %cst_88 = arith.constant dense<0xFF800000> : vector<5xf32>
    %248 = vector.multi_reduction <maximumf>, %247, %cst_88 [1] : vector<5x5xf32> to vector<5xf32>
    %249 = vector.shape_cast %248 : vector<5xf32> to vector<5x1xf32>
    %250 = vector.broadcast %249 : vector<5x1xf32> to vector<5x5xf32>
    %251 = arith.subf %247, %250 : vector<5x5xf32>
    %252 = math.exp %251 : vector<5x5xf32>
    %cst_89 = arith.constant dense<0.000000e+00> : vector<5xf32>
    %253 = vector.multi_reduction <add>, %252, %cst_89 [1] : vector<5x5xf32> to vector<5xf32>
    %254 = vector.shape_cast %253 : vector<5xf32> to vector<5x1xf32>
    %255 = tpu.reciprocal %254 {approx = true} : vector<5x1xf32> -> vector<5x1xf32>
    %256 = vector.broadcast %255 : vector<5x1xf32> to vector<5x5xf32>
    %257 = arith.mulf %252, %256 : vector<5x5xf32>
    %cst_90 = arith.constant dense<0.000000e+00> : vector<5x16xf32>
    %258 = tpu.matmul %257, %244, %cst_90 {dimension_numbers = #tpu.dot_dimension_numbers<[1], [0], [0], [1], [0, 0, 1, 1], [], []>} : vector<5x5xf32>, vector<5x16xf32>, vector<5x16xf32> -> vector<5x16xf32>
    %259 = vector.extract_strided_slice %241 {offsets = [0, 16], sizes = [5, 16], strides = [1, 1]} : vector<5x96xf32> to vector<5x16xf32>
    %260 = vector.extract_strided_slice %241 {offsets = [0, 48], sizes = [5, 16], strides = [1, 1]} : vector<5x96xf32> to vector<5x16xf32>
    %261 = vector.extract_strided_slice %241 {offsets = [0, 80], sizes = [5, 16], strides = [1, 1]} : vector<5x96xf32> to vector<5x16xf32>
    %cst_91 = arith.constant dense<0.000000e+00> : vector<5x5xf32>
    %262 = tpu.matmul %259, %260, %cst_91 {dimension_numbers = #tpu.dot_dimension_numbers<[1], [1], [0], [0], [0, 0, 1, 0], [], []>} : vector<5x16xf32>, vector<5x16xf32>, vector<5x5xf32> -> vector<5x5xf32>
    %cst_92 = arith.constant 2.500000e-01 : f32
    %263 = vector.broadcast %cst_92 : f32 to vector<5x5xf32>
    %264 = arith.mulf %262, %263 : vector<5x5xf32>
    %cst_93 = arith.constant dense<0xFF800000> : vector<5xf32>
    %265 = vector.multi_reduction <maximumf>, %264, %cst_93 [1] : vector<5x5xf32> to vector<5xf32>
    %266 = vector.shape_cast %265 : vector<5xf32> to vector<5x1xf32>
    %267 = vector.broadcast %266 : vector<5x1xf32> to vector<5x5xf32>
    %268 = arith.subf %264, %267 : vector<5x5xf32>
    %269 = math.exp %268 : vector<5x5xf32>
    %cst_94 = arith.constant dense<0.000000e+00> : vector<5xf32>
    %270 = vector.multi_reduction <add>, %269, %cst_94 [1] : vector<5x5xf32> to vector<5xf32>
    %271 = vector.shape_cast %270 : vector<5xf32> to vector<5x1xf32>
    %272 = tpu.reciprocal %271 {approx = true} : vector<5x1xf32> -> vector<5x1xf32>
    %273 = vector.broadcast %272 : vector<5x1xf32> to vector<5x5xf32>
    %274 = arith.mulf %269, %273 : vector<5x5xf32>
    %cst_95 = arith.constant dense<0.000000e+00> : vector<5x16xf32>
    %275 = tpu.matmul %274, %261, %cst_95 {dimension_numbers = #tpu.dot_dimension_numbers<[1], [0], [0], [1], [0, 0, 1, 1], [], []>} : vector<5x5xf32>, vector<5x16xf32>, vector<5x16xf32> -> vector<5x16xf32>
    %276 = tpu.concatenate %258, %275 in 1 : vector<5x16xf32>, vector<5x16xf32> -> vector<5x32xf32>
    %277 = tpu.concatenate %240, %276 in 0 : vector<5x32xf32>, vector<5x32xf32> -> vector<10x32xf32>
    %cst_96 = arith.constant dense<0.000000e+00> : vector<10x32xf32>
    %278 = tpu.matmul %277, %167, %cst_96 {dimension_numbers = #tpu.dot_dimension_numbers<[1], [0], [0], [1], [0, 0, 1, 1], [], []>} : vector<10x32xf32>, vector<32x32xf32>, vector<10x32xf32> -> vector<10x32xf32>
    %279 = arith.addf %163, %278 : vector<10x32xf32>
    %280 = vector.broadcast %177 : vector<1x32xf32> to vector<10x32xf32>
    %281 = arith.addf %279, %280 : vector<10x32xf32>
    %cst_97 = arith.constant dense<0.000000e+00> : vector<10xf32>
    %282 = vector.multi_reduction <add>, %281, %cst_97 [1] : vector<10x32xf32> to vector<10xf32>
    %283 = vector.shape_cast %282 : vector<10xf32> to vector<10x1xf32>
    %cst_98 = arith.constant 3.200000e+01 : f32
    %284 = vector.broadcast %cst_98 : f32 to vector<10x1xf32>
    %285 = arith.divf %283, %284 : vector<10x1xf32>
    %286 = vector.broadcast %285 : vector<10x1xf32> to vector<10x32xf32>
    %287 = arith.subf %281, %286 : vector<10x32xf32>
    %288 = arith.mulf %287, %287 : vector<10x32xf32>
    %cst_99 = arith.constant dense<0.000000e+00> : vector<10xf32>
    %289 = vector.multi_reduction <add>, %288, %cst_99 [1] : vector<10x32xf32> to vector<10xf32>
    %290 = vector.shape_cast %289 : vector<10xf32> to vector<10x1xf32>
    %cst_100 = arith.constant 3.200000e+01 : f32
    %291 = vector.broadcast %cst_100 : f32 to vector<10x1xf32>
    %292 = arith.divf %290, %291 : vector<10x1xf32>
    %cst_101 = arith.constant 9.99999997E-7 : f32
    %293 = vector.broadcast %cst_101 : f32 to vector<10x1xf32>
    %294 = arith.addf %292, %293 : vector<10x1xf32>
    %295 = math.rsqrt %294 : vector<10x1xf32>
    %296 = vector.broadcast %295 : vector<10x1xf32> to vector<10x32xf32>
    %297 = arith.mulf %287, %296 : vector<10x32xf32>
    %298 = vector.broadcast %178 : vector<1x32xf32> to vector<10x32xf32>
    %299 = arith.mulf %297, %298 : vector<10x32xf32>
    %300 = vector.broadcast %179 : vector<1x32xf32> to vector<10x32xf32>
    %301 = arith.addf %299, %300 : vector<10x32xf32>
    %cst_102 = arith.constant dense<0.000000e+00> : vector<10x64xf32>
    %302 = tpu.matmul %301, %169, %cst_102 {dimension_numbers = #tpu.dot_dimension_numbers<[1], [0], [0], [1], [0, 0, 1, 1], [], []>} : vector<10x32xf32>, vector<32x64xf32>, vector<10x64xf32> -> vector<10x64xf32>
    %303 = vector.broadcast %180 : vector<1x64xf32> to vector<10x64xf32>
    %304 = arith.addf %302, %303 : vector<10x64xf32>
    %305 = arith.mulf %304, %304 : vector<10x64xf32>
    %306 = arith.mulf %304, %305 : vector<10x64xf32>
    %cst_103 = arith.constant 4.471500e-02 : f32
    %307 = vector.broadcast %cst_103 : f32 to vector<10x64xf32>
    %308 = arith.mulf %307, %306 : vector<10x64xf32>
    %309 = arith.addf %304, %308 : vector<10x64xf32>
    %cst_104 = arith.constant 0.797884583 : f32
    %310 = vector.broadcast %cst_104 : f32 to vector<10x64xf32>
    %311 = arith.mulf %310, %309 : vector<10x64xf32>
    %312 = math.tanh %311 : vector<10x64xf32>
    %cst_105 = arith.constant 1.000000e+00 : f32
    %313 = vector.broadcast %cst_105 : f32 to vector<10x64xf32>
    %314 = arith.addf %313, %312 : vector<10x64xf32>
    %cst_106 = arith.constant 5.000000e-01 : f32
    %315 = vector.broadcast %cst_106 : f32 to vector<10x64xf32>
    %316 = arith.mulf %315, %314 : vector<10x64xf32>
    %317 = arith.mulf %304, %316 : vector<10x64xf32>
    %cst_107 = arith.constant dense<0.000000e+00> : vector<10x32xf32>
    %318 = tpu.matmul %317, %171, %cst_107 {dimension_numbers = #tpu.dot_dimension_numbers<[1], [0], [0], [1], [0, 0, 1, 1], [], []>} : vector<10x64xf32>, vector<64x32xf32>, vector<10x32xf32> -> vector<10x32xf32>
    %319 = arith.addf %281, %318 : vector<10x32xf32>
    %320 = vector.broadcast %181 : vector<1x32xf32> to vector<10x32xf32>
    %321 = arith.addf %319, %320 : vector<10x32xf32>
    %c5 = arith.constant 5 : index
    %c0_108 = arith.constant 0 : index
    %322 = vector.load %arg2[%c5, %c0_108] : memref<7x128xf32, #tpu.memory_space<vmem>>, vector<1x32xf32>
    %c6 = arith.constant 6 : index
    %c0_109 = arith.constant 0 : index
    %323 = vector.load %arg2[%c6, %c0_109] : memref<7x128xf32, #tpu.memory_space<vmem>>, vector<1x32xf32>
    %cst_110 = arith.constant dense<0.000000e+00> : vector<10xf32>
    %324 = vector.multi_reduction <add>, %321, %cst_110 [1] : vector<10x32xf32> to vector<10xf32>
    %325 = vector.shape_cast %324 : vector<10xf32> to vector<10x1xf32>
    %cst_111 = arith.constant 3.200000e+01 : f32
    %326 = vector.broadcast %cst_111 : f32 to vector<10x1xf32>
    %327 = arith.divf %325, %326 : vector<10x1xf32>
    %328 = vector.broadcast %327 : vector<10x1xf32> to vector<10x32xf32>
    %329 = arith.subf %321, %328 : vector<10x32xf32>
    %330 = arith.mulf %329, %329 : vector<10x32xf32>
    %cst_112 = arith.constant dense<0.000000e+00> : vector<10xf32>
    %331 = vector.multi_reduction <add>, %330, %cst_112 [1] : vector<10x32xf32> to vector<10xf32>
    %332 = vector.shape_cast %331 : vector<10xf32> to vector<10x1xf32>
    %cst_113 = arith.constant 3.200000e+01 : f32
    %333 = vector.broadcast %cst_113 : f32 to vector<10x1xf32>
    %334 = arith.divf %332, %333 : vector<10x1xf32>
    %cst_114 = arith.constant 9.99999997E-7 : f32
    %335 = vector.broadcast %cst_114 : f32 to vector<10x1xf32>
    %336 = arith.addf %334, %335 : vector<10x1xf32>
    %337 = math.rsqrt %336 : vector<10x1xf32>
    %338 = vector.broadcast %337 : vector<10x1xf32> to vector<10x32xf32>
    %339 = arith.mulf %329, %338 : vector<10x32xf32>
    %340 = vector.broadcast %322 : vector<1x32xf32> to vector<10x32xf32>
    %341 = arith.mulf %339, %340 : vector<10x32xf32>
    %342 = vector.broadcast %323 : vector<1x32xf32> to vector<10x32xf32>
    %343 = arith.addf %341, %342 : vector<10x32xf32>
    %344 = vector.extract_strided_slice %343 {offsets = [1, 0], sizes = [4, 32], strides = [1, 1]} : vector<10x32xf32> to vector<4x32xf32>
    %c0_115 = arith.constant 0 : index
    %c0_116 = arith.constant 0 : index
    %c0_117 = arith.constant 0 : index
    %345 = vector.load %arg6[%c0_115, %c0_116, %c0_117] : memref<2x4x32xf32, #tpu.memory_space<vmem>>, vector<1x4x32xf32>
    %346 = vector.shape_cast %345 : vector<1x4x32xf32> to vector<4x32xf32>
    %347 = vector.shape_cast %344 : vector<4x32xf32> to vector<1x4x32xf32>
    tpu.vector_store %arg6[%c0_115, %c0_116, %c0_117], %347 {strides = array<i32>} : memref<2x4x32xf32, #tpu.memory_space<vmem>>, vector<1x4x32xf32>,
    %348 = vector.extract_strided_slice %343 {offsets = [6, 0], sizes = [4, 32], strides = [1, 1]} : vector<10x32xf32> to vector<4x32xf32>
    %c1_118 = arith.constant 1 : index
    %c0_119 = arith.constant 0 : index
    %c0_120 = arith.constant 0 : index
    %349 = vector.load %arg6[%c1_118, %c0_119, %c0_120] : memref<2x4x32xf32, #tpu.memory_space<vmem>>, vector<1x4x32xf32>
    %350 = vector.shape_cast %349 : vector<1x4x32xf32> to vector<4x32xf32>
    %351 = vector.shape_cast %348 : vector<4x32xf32> to vector<1x4x32xf32>
    tpu.vector_store %arg6[%c1_118, %c0_119, %c0_120], %351 {strides = array<i32>} : memref<2x4x32xf32, #tpu.memory_space<vmem>>, vector<1x4x32xf32>,
    return
  }
}

</mosaic_0001>

<llo_original>
// kernel: vit_wrapper_forward.1
$region0: #{vit_wrapper_forward.1}
  #allocation0 [shape = 'u32[]', space=smem, size = 0x4, offset = 0x4, fixed_abs, tag = 'smem constant byte address 0x4 - core index']
  #allocation1 [shape = 'u32[144,128]{1,0:T(1,128)}', space=vmem, size = 0x12000, scoped, tag = 'internal scratch']
  %s0 = inlined_call_operand.vmem [shape: f32[10,192], index: 0, kind: input, shape index: {}]
  %s1 = inlined_call_operand.vmem [shape: f32[192,32], index: 1, kind: input, shape index: {}]
  %s2 = inlined_call_operand.vmem [shape: f32[7,128], index: 2, kind: input, shape index: {}]
  %s3 = inlined_call_operand.vmem [shape: f32[2,32,192], index: 3, kind: input, shape index: {}]
  %s4 = inlined_call_operand.vmem [shape: f32[2,64,32], index: 4, kind: input, shape index: {}]
  %s5 = inlined_call_operand.vmem [shape: f32[2,8,128], index: 5, kind: input, shape index: {}]
  %s6 = inlined_call_operand.hbm [shape: f32[2,4,32], index: 6, kind: output, shape index: {}]
  %s7 = sld [smem:[#allocation0]]
  $region34: #{vit_wrapper_forward.1} parent=0
    _
  %s9 = ssub.s32 1, %s7
  %s10 = scalar_select 0, %s9, %s7
  $region1: #{vit_wrapper_forward.1} parent=0
    #allocation2 [shape = 'u8[4096]{0}', space=vmem, size = 0x1000, scoped, tag = 'output window, operand 0, single buffered']
    #allocation3 [shape = 's32[1]{0}', space=sflag, size = 0x4, scoped, tag = 'scoped memory for vit_wrapper_forward.1']
    %11 = vsyncpa [#allocation3], 0
    // Predicated region
    $region2: #{vit_wrapper_forward.1} parent=1 // pred_check
      _
    $region3: #{vit_wrapper_forward.1} parent=1 // pred_check_branch
      %13 = sbr.rel (0) target = $region5
    $region4: #{vit_wrapper_forward.1} parent=1 // pred_region
      _
    $region5: #{vit_wrapper_forward.1} parent=1 // pred_fallthru
      _
    // Predicated region
    $region6: #{vit_wrapper_forward.1} parent=1 // pred_check
      _
    $region7: #{vit_wrapper_forward.1} parent=1 // pred_check_branch
      %15 = sbr.rel (0) target = $region9
    $region8: #{vit_wrapper_forward.1} parent=1 // pred_region
      _
    $region9: #{vit_wrapper_forward.1} parent=1 // pred_fallthru
      _
    // Predicated region
    $region10: #{vit_wrapper_forward.1} parent=1 // pred_check
      _
    $region11: #{vit_wrapper_forward.1} parent=1 // pred_check_branch
      %17 = sbr.rel (0) target = $region13
    $region12: #{vit_wrapper_forward.1} parent=1 // pred_region
      _
    $region13: #{vit_wrapper_forward.1} parent=1 // pred_fallthru
      _
    // Predicated region
    $region14: #{vit_wrapper_forward.1} parent=1 // pred_check
      _
    $region15: #{vit_wrapper_forward.1} parent=1 // pred_check_branch
      %19 = sbr.rel (0) target = $region17
    $region16: #{vit_wrapper_forward.1} parent=1 // pred_region
      _
    $region17: #{vit_wrapper_forward.1} parent=1 // pred_fallthru
      _
    // Predicated region
    $region18: #{vit_wrapper_forward.1} parent=1 // pred_check
      _
    $region19: #{vit_wrapper_forward.1} parent=1 // pred_check_branch
      %21 = sbr.rel (0) target = $region21
    $region20: #{vit_wrapper_forward.1} parent=1 // pred_region
      _
    $region21: #{vit_wrapper_forward.1} parent=1 // pred_fallthru
      _
    // Predicated region
    $region22: #{vit_wrapper_forward.1} parent=1 // pred_check
      _
    $region23: #{vit_wrapper_forward.1} parent=1 // pred_check_branch
      %23 = sbr.rel (0) target = $region25
    $region24: #{vit_wrapper_forward.1} parent=1 // pred_region
      _
    $region25: #{vit_wrapper_forward.1} parent=1 // pred_fallthru
      _
    %v24 = vld [vmem:[%s0] sm:$0xff]
    %v25 = vld [vmem:[%s0 + $0x8] sm:$0xff]
    %v26 = vld [vmem:[%s0 + $0x10] sm:$0x3]
    %v27 = vld [vmem:[%s0 + $0x18] sm:$0x3]
    %v28 = vld [vmem:[%s1] sm:$0xff]
    %v29 = vld [vmem:[%s1 + $0x8] sm:$0xff]
    %v30 = vld [vmem:[%s1 + $0x10] sm:$0xff]
    %v31 = vld [vmem:[%s1 + $0x18] sm:$0xff]
    %v32 = vld [vmem:[%s1 + $0x20] sm:$0xff]
    %v33 = vld [vmem:[%s1 + $0x28] sm:$0xff]
    %v34 = vld [vmem:[%s1 + $0x30] sm:$0xff]
    %v35 = vld [vmem:[%s1 + $0x38] sm:$0xff]
    %v36 = vld [vmem:[%s1 + $0x40] sm:$0xff]
    %v37 = vld [vmem:[%s1 + $0x48] sm:$0xff]
    %v38 = vld [vmem:[%s1 + $0x50] sm:$0xff]
    %v39 = vld [vmem:[%s1 + $0x58] sm:$0xff]
    %v40 = vld [vmem:[%s1 + $0x60] sm:$0xff]
    %v41 = vld [vmem:[%s1 + $0x68] sm:$0xff]
    %v42 = vld [vmem:[%s1 + $0x70] sm:$0xff]
    %v43 = vld [vmem:[%s1 + $0x78] sm:$0xff]
    %v44 = vld [vmem:[%s1 + $0x80] sm:$0xff]
    %v45 = vld [vmem:[%s1 + $0x88] sm:$0xff]
    %v46 = vld [vmem:[%s1 + $0x90] sm:$0xff]
    %v47 = vld [vmem:[%s1 + $0x98] sm:$0xff]
    %v48 = vld [vmem:[%s1 + $0xa0] sm:$0xff]
    %v49 = vld [vmem:[%s1 + $0xa8] sm:$0xff]
    %v50 = vld [vmem:[%s1 + $0xb0] sm:$0xff]
    %v51 = vld [vmem:[%s1 + $0xb8] sm:$0xff]
    %v52 = vld [vmem:[%s2] sm:$0x1f]
    %v54 = vrot.slane %v52, 3
    %vm56 = vcmask 1044480
    %v57 = vsel %vm56, %v52, %v54
    %vm58 = vcmask 523264
    %v60 = vsel %vm58, %v25, 0
    %v63 = vsel %vm58, %v27, 0
    %65 = vmatprep.subr.mxu0 0.0
    %66 = vmatpush1.msra.mxu0 %v28
    %67 = vmatprep.subr.mxu0 0.0
    %68 = vmatpush1.msra.mxu0 %v29
    %69 = vmatprep.subr.mxu0 0.0
    %70 = vmatpush1.msra.mxu0 %v30
    %71 = vmatprep.subr.mxu0 0.0
    %72 = vmatpush1.msra.mxu0 %v31
    %73 = vmatprep.subr.mxu0 0.0
    %74 = vmatpush1.msra.mxu0 %v32
    %75 = vmatprep.subr.mxu0 0.0
    %76 = vmatpush1.msra.mxu0 %v33
    %77 = vmatprep.subr.mxu0 0.0
    %78 = vmatpush1.msra.mxu0 %v34
    %79 = vmatprep.subr.mxu0 0.0
    %80 = vmatpush1.msra.mxu0 %v35
    %81 = vmatprep.subr.mxu0 0.0
    %82 = vmatpush1.msra.mxu0 %v36
    %83 = vmatprep.subr.mxu0 0.0
    %84 = vmatpush1.msra.mxu0 %v37
    %85 = vmatprep.subr.mxu0 0.0
    %86 = vmatpush1.msra.mxu0 %v38
    %87 = vmatprep.subr.mxu0 0.0
    %88 = vmatpush1.msra.mxu0 %v39
    %89 = vmatprep.subr.mxu0 0.0
    %90 = vmatpush1.msra.mxu0 %v40
    %91 = vmatprep.subr.mxu0 0.0
    %92 = vmatpush1.msra.mxu0 %v41
    %93 = vmatprep.subr.mxu0 0.0
    %94 = vmatpush1.msra.mxu0 %v42
    %95 = vmatprep.subr.mxu0 0.0
    %96 = vmatpush1.msra.mxu0 %v43
    %97 = vmatprep.subr.mxu0 0.0
    %98 = vmatpush1.msra.mxu0 %v44
    %99 = vmatprep.subr.mxu0 0.0
    %100 = vmatpush1.msra.mxu0 %v45
    %101 = vmatprep.subr.mxu0 0.0
    %102 = vmatpush1.msra.mxu0 %v46
    %103 = vmatprep.subr.mxu0 0.0
    %104 = vmatpush1.msra.mxu0 %v47
    %105 = vmatprep.subr.mxu0 0.0
    %106 = vmatpush1.msra.mxu0 %v48
    %107 = vmatprep.subr.mxu0 0.0
    %108 = vmatpush1.msra.mxu0 %v49
    %109 = vmatprep.subr.mxu0 0.0
    %110 = vmatpush1.msra.mxu0 %v50
    %111 = vmatprep.subr.mxu0 0.0
    %112 = vmatpush1.msra.mxu0 %v51
    %113 = vmatprep.subr.mxu0 0.0
    %114 = vmatpush1.msra.mxu0 0.0
    %115 = vmatprep.subr.mxu0 0.0
    %116 = vmatpush1.msra.mxu0 0.0
    %117 = vmatprep.subr.mxu0 0.0
    %118 = vmatpush1.msra.mxu0 0.0
    %119 = vmatprep.subr.mxu0 0.0
    %120 = vmatpush1.msra.mxu0 0.0
    %121 = vmatprep.subr.mxu0 0.0
    %122 = vmatpush1.msra.mxu0 0.0
    %123 = vmatprep.subr.mxu0 0.0
    %124 = vmatpush1.msra.mxu0 0.0
    %125 = vmatprep.subr.mxu0 0.0
    %126 = vmatpush1.msra.mxu0 0.0
    %127 = vmatprep.subr.mxu0 0.0
    %128 = vmatpush1.msra.mxu0 0.0
    %129 = vmatprep.mubr.f32.mxu0 %v60
    %130 = vmatmul.mubr.f32.gmra.mrb[0].mxu0 %v24
    %v131 = vpop.f32.mrb[0].mxu0
    %v132 = vadd.f32 %v57, %v131
    %v133 = vpop.f32.mrb[0].mxu0
    %134 = vmatprep.mubr.f32.mxu0 %v63
    %135 = vmatmul.mubr.f32.gmra.mrb[0].mxu0 %v26
    %v136 = vpop.f32.mrb[0].mxu0
    %v137 = vadd.f32 %v54, %v136
    %v138 = vpop.f32.mrb[0].mxu0
    %139 = vdwg.mxu0
    %v140 = vld [vmem:[%s3] sm:$0xff]
    %v141 = vld [vmem:[%s3 + $0x10] sm:$0xff]
    %v142 = vld [vmem:[%s3 + $0x20] sm:$0xff]
    %v143 = vld [vmem:[%s3 + $0x30] sm:$0xff]
    %v144 = vld [vmem:[%s3 + $0x8] sm:$0xff]
    %v145 = vld [vmem:[%s3 + $0x18] sm:$0xff]
    %v146 = vld [vmem:[%s3 + $0x28] sm:$0xff]
    %v147 = vld [vmem:[%s3 + $0x38] sm:$0xff]
    %v148 = vld [vmem:[%s4] sm:$0xff]
    %v149 = vld [vmem:[%s4 + $0x8] sm:$0xff]
    %v150 = vld [vmem:[%s4 + $0x10] sm:$0xff]
    %v151 = vld [vmem:[%s4 + $0x18] sm:$0xff]
    %v152 = vld [vmem:[%s4 + $0x20] sm:$0xff]
    %v153 = vld [vmem:[%s4 + $0x28] sm:$0xff]
    %v154 = vld [vmem:[%s4 + $0x30] sm:$0xff]
    %v155 = vld [vmem:[%s4 + $0x38] sm:$0xff]
    %v156 = vld [vmem:[%s5] sm:$0xff]
    %vm157 = vcmask 261120
    %v158 = vsel %vm157, %v132, 0.0
    %159 = vadd.xlane.f32.xlu0 %v158
    %v160 = vpop.xlane.xlu0 %159
    %vm161 = vcmask 254976
    %v162 = vsel %vm161, %v137, 0.0
    %163 = vadd.xlane.f32.xlu0 %v162
    %v164 = vpop.xlane.xlu0 %163
    %v165 = vrcp.pop 32.0
    %v166 = vmul.f32 %v160, %v165
    %v167 = vmul.f32 %v164, %v165
    %v168 = vsub.f32 %v132, %v166
    %v169 = vsub.f32 %v137, %v167
    %v170 = vmul.f32 %v168, %v168
    %v171 = vmul.f32 %v169, %v169
    %v172 = vsel %vm157, %v170, 0.0
    %173 = vadd.xlane.f32.xlu0 %v172
    %v174 = vpop.xlane.xlu0 %173
    %v175 = vsel %vm161, %v171, 0.0
    %176 = vadd.xlane.f32.xlu0 %v175
    %v177 = vpop.xlane.xlu0 %176
    %v178 = vmul.f32 %v174, %v165
    %v179 = vmul.f32 %v177, %v165
    %v180 = vadd.f32 %v178, 1e-06
    %v181 = vadd.f32 %v179, 1e-06
    %v182 = vrsqrt.pop %v180
    %v183 = vrsqrt.pop %v181
    %v184 = vmul.f32 %v168, %v182
    %v185 = vmul.f32 %v169, %v183
    %v186 = vlaneseq
    %v187 = vshrl.u32 %v186, 7
    %v188 = vsub.s32 0, %v187
    %v189 = vrot.slane %v156, %v188
    %v190 = vmul.f32 %v184, %v189
    %v191 = vmul.f32 %v185, %v189
    %v192 = vlaneseq
    %v193 = vshrl.u32 %v192, 7
    %v194 = vsub.s32 1, %v193
    %v195 = vrot.slane %v156, %v194
    %v196 = vadd.f32 %v190, %v195
    %v197 = vadd.f32 %v191, %v195
    %v198 = vlaneseq
    %v199 = vshrl.u32 %v198, 7
    %v200 = vsub.s32 2, %v199
    %v201 = vrot.slane %v156, %v200
    %v203 = vsel %vm157, %v196, 0
    %v206 = vsel %vm157, %v197, 0
    %208 = vmatprep.subr.mxu0 0.0
    %209 = vmatpush1.msra.mxu0 %v140
    %210 = vmatprep.subr.mxu0 0.0
    %211 = vmatpush1.msra.mxu0 %v141
    %212 = vmatprep.subr.mxu0 0.0
    %213 = vmatpush1.msra.mxu0 %v142
    %214 = vmatprep.subr.mxu0 0.0
    %215 = vmatpush1.msra.mxu0 %v143
    %216 = vmatprep.subr.mxu0 0.0
    %217 = vmatpush1.msra.mxu0 0.0
    %218 = vmatprep.subr.mxu0 0.0
    %219 = vmatpush1.msra.mxu0 0.0
    %220 = vmatprep.subr.mxu0 0.0
    %221 = vmatpush1.msra.mxu0 0.0
    %222 = vmatprep.subr.mxu0 0.0
    %223 = vmatpush1.msra.mxu0 0.0
    %224 = vmatprep.subr.mxu0 0.0
    %225 = vmatpush1.msra.mxu0 0.0
    %226 = vmatprep.subr.mxu0 0.0
    %227 = vmatpush1.msra.mxu0 0.0
    %228 = vmatprep.subr.mxu0 0.0
    %229 = vmatpush1.msra.mxu0 0.0
    %230 = vmatprep.subr.mxu0 0.0
    %231 = vmatpush1.msra.mxu0 0.0
    %232 = vmatprep.subr.mxu0 0.0
    %233 = vmatpush1.msra.mxu0 0.0
    %234 = vmatprep.subr.mxu0 0.0
    %235 = vmatpush1.msra.mxu0 0.0
    %236 = vmatprep.subr.mxu0 0.0
    %237 = vmatpush1.msra.mxu0 0.0
    %238 = vmatprep.subr.mxu0 0.0
    %239 = vmatpush1.msra.mxu0 0.0
    %240 = vmatprep.subr.mxu0 0.0
    %241 = vmatpush1.msra.mxu0 0.0
    %242 = vmatprep.subr.mxu0 0.0
    %243 = vmatpush1.msra.mxu0 0.0
    %244 = vmatprep.subr.mxu0 0.0
    %245 = vmatpush1.msra.mxu0 0.0
    %246 = vmatprep.subr.mxu0 0.0
    %247 = vmatpush1.msra.mxu0 0.0
    %248 = vmatprep.subr.mxu0 0.0
    %249 = vmatpush1.msra.mxu0 0.0
    %250 = vmatprep.subr.mxu0 0.0
    %251 = vmatpush1.msra.mxu0 0.0
    %252 = vmatprep.subr.mxu0 0.0
    %253 = vmatpush1.msra.mxu0 0.0
    %254 = vmatprep.subr.mxu0 0.0
    %255 = vmatpush1.msra.mxu0 0.0
    %256 = vmatprep.subr.mxu0 0.0
    %257 = vmatpush1.msra.mxu0 0.0
    %258 = vmatprep.subr.mxu0 0.0
    %259 = vmatpush1.msra.mxu0 0.0
    %260 = vmatprep.subr.mxu0 0.0
    %261 = vmatpush1.msra.mxu0 0.0
    %262 = vmatprep.subr.mxu0 0.0
    %263 = vmatpush1.msra.mxu0 0.0
    %264 = vmatprep.subr.mxu0 0.0
    %265 = vmatpush1.msra.mxu0 0.0
    %266 = vmatprep.subr.mxu0 0.0
    %267 = vmatpush1.msra.mxu0 0.0
    %268 = vmatprep.subr.mxu0 0.0
    %269 = vmatpush1.msra.mxu0 0.0
    %270 = vmatprep.subr.mxu0 0.0
    %271 = vmatpush1.msra.mxu0 0.0
    %272 = vmatprep.mubr.f32.mxu0 0.0
    %273 = vmatmul.mubr.f32.gmra.mrb[0].mxu0 %v203
    %v274 = vpop.f32.mrb[0].mxu0
    %v275 = vadd.f32 %v201, %v274
    %v276 = vpop.f32.mrb[0].mxu0
    %277 = vmatprep.mubr.f32.mxu0 0.0
    %278 = vmatmul.mubr.f32.gmra.mrb[0].mxu0 %v206
    %v279 = vpop.f32.mrb[0].mxu0
    %v280 = vadd.f32 %v201, %v279
    %v281 = vpop.f32.mrb[0].mxu0
    %282 = vdwg.mxu0
    %284 = vrot.lane.b32.xlu0 %v275, 96
    %v285 = vpop.permute.xlu0 %284
    %vm286 = vcmask 130048
    %v287 = vsel %vm286, %v275, 0
    %v289 = vsel %vm286, %v285, 0
    %291 = vmatprep.subr.mxu0 0.0
    %292 = vmatpush1.xpose.msra.mxu0 %v289
    %293 = vmatprep.subr.mxu0 0.0
    %294 = vmatpush1.xpose.msra.mxu0 0.0
    %295 = vmatprep.subr.mxu0 0.0
    %296 = vmatpush1.xpose.msra.mxu0 0.0
    %297 = vmatprep.subr.mxu0 0.0
    %298 = vmatpush1.xpose.msra.mxu0 0.0
    %299 = vmatprep.subr.mxu0 0.0
    %300 = vmatpush1.xpose.msra.mxu0 0.0
    %301 = vmatprep.subr.mxu0 0.0
    %302 = vmatpush1.xpose.msra.mxu0 0.0
    %303 = vmatprep.subr.mxu0 0.0
    %304 = vmatpush1.xpose.msra.mxu0 0.0
    %305 = vmatprep.subr.mxu0 0.0
    %306 = vmatpush1.xpose.msra.mxu0 0.0
    %307 = vmatprep.subr.mxu0 0.0
    %308 = vmatpush1.xpose.msra.mxu0 0.0
    %309 = vmatprep.subr.mxu0 0.0
    %310 = vmatpush1.xpose.msra.mxu0 0.0
    %311 = vmatprep.subr.mxu0 0.0
    %312 = vmatpush1.xpose.msra.mxu0 0.0
    %313 = vmatprep.subr.mxu0 0.0
    %314 = vmatpush1.xpose.msra.mxu0 0.0
    %315 = vmatprep.subr.mxu0 0.0
    %316 = vmatpush1.xpose.msra.mxu0 0.0
    %317 = vmatprep.subr.mxu0 0.0
    %318 = vmatpush1.xpose.msra.mxu0 0.0
    %319 = vmatprep.subr.mxu0 0.0
    %320 = vmatpush1.xpose.msra.mxu0 0.0
    %321 = vmatprep.subr.mxu0 0.0
    %322 = vmatpush1.xpose.msra.mxu0 0.0
    %323 = vmatprep.subr.mxu0 0.0
    %324 = vmatpush1.xpose.msra.mxu0 0.0
    %325 = vmatprep.subr.mxu0 0.0
    %326 = vmatpush1.xpose.msra.mxu0 0.0
    %327 = vmatprep.subr.mxu0 0.0
    %328 = vmatpush1.xpose.msra.mxu0 0.0
    %329 = vmatprep.subr.mxu0 0.0
    %330 = vmatpush1.xpose.msra.mxu0 0.0
    %331 = vmatprep.subr.mxu0 0.0
    %332 = vmatpush1.xpose.msra.mxu0 0.0
    %333 = vmatprep.subr.mxu0 0.0
    %334 = vmatpush1.xpose.msra.mxu0 0.0
    %335 = vmatprep.subr.mxu0 0.0
    %336 = vmatpush1.xpose.msra.mxu0 0.0
    %337 = vmatprep.subr.mxu0 0.0
    %338 = vmatpush1.xpose.msra.mxu0 0.0
    %339 = vmatprep.subr.mxu0 0.0
    %340 = vmatpush1.xpose.msra.mxu0 0.0
    %341 = vmatprep.subr.mxu0 0.0
    %342 = vmatpush1.xpose.msra.mxu0 0.0
    %343 = vmatprep.subr.mxu0 0.0
    %344 = vmatpush1.xpose.msra.mxu0 0.0
    %345 = vmatprep.subr.mxu0 0.0
    %346 = vmatpush1.xpose.msra.mxu0 0.0
    %347 = vmatprep.subr.mxu0 0.0
    %348 = vmatpush1.xpose.msra.mxu0 0.0
    %349 = vmatprep.subr.mxu0 0.0
    %350 = vmatpush1.xpose.msra.mxu0 0.0
    %351 = vmatprep.subr.mxu0 0.0
    %352 = vmatpush1.xpose.msra.mxu0 0.0
    %353 = vmatprep.subr.mxu0 0.0
    %354 = vmatpush1.xpose.msra.mxu0 0.0
    %355 = vmatprep.mubr.f32.mxu0 0.0
    %356 = vmatmul.mubr.f32.gmra.mrb[0].mxu0 %v287
    %v357 = vpop.f32.mrb[0].mxu0
    %v358 = vadd.f32 0.0, %v357
    %v359 = vpop.f32.mrb[0].mxu0
    %360 = vdwg.mxu0
    %v361 = vmul.f32 %v358, 0.25
    %vm362 = vcmask 36864
    %v363 = vsel %vm362, %v361, -inf
    %364 = vmax.xlane.f32.xlu0 %v363
    %v365 = vpop.xlane.xlu0 %364
    %v366 = vsub.f32 %v361, %v365
    %v367 = vmul.f32 %v366, 1.442695
    %v368 = vpow.pop %v367
    %v369 = vsel %vm362, %v368, 0.0
    %370 = vadd.xlane.f32.xlu0 %v369
    %v371 = vpop.xlane.xlu0 %370
    %v372 = vrcp.pop %v371
    %v373 = vmul.f32 %v368, %v372
    %374 = vrot.lane.b32.xlu0 %v275, 64
    %v375 = vpop.permute.xlu0 %374
    %vm376 = vcmask 39936
    %v378 = vsel %vm376, %v373, 0
    %v380 = vsel %vm56, %v375, 0
    %382 = vmatprep.subr.mxu0 0.0
    %383 = vmatpush1.msra.mxu0 %v380
    %384 = vmatprep.subr.mxu0 0.0
    %385 = vmatpush1.msra.mxu0 0.0
    %386 = vmatprep.subr.mxu0 0.0
    %387 = vmatpush1.msra.mxu0 0.0
    %388 = vmatprep.subr.mxu0 0.0
    %389 = vmatpush1.msra.mxu0 0.0
    %390 = vmatprep.subr.mxu0 0.0
    %391 = vmatpush1.msra.mxu0 0.0
    %392 = vmatprep.subr.mxu0 0.0
    %393 = vmatpush1.msra.mxu0 0.0
    %394 = vmatprep.subr.mxu0 0.0
    %395 = vmatpush1.msra.mxu0 0.0
    %396 = vmatprep.subr.mxu0 0.0
    %397 = vmatpush1.msra.mxu0 0.0
    %398 = vmatprep.subr.mxu0 0.0
    %399 = vmatpush1.msra.mxu0 0.0
    %400 = vmatprep.subr.mxu0 0.0
    %401 = vmatpush1.msra.mxu0 0.0
    %402 = vmatprep.subr.mxu0 0.0
    %403 = vmatpush1.msra.mxu0 0.0
    %404 = vmatprep.subr.mxu0 0.0
    %405 = vmatpush1.msra.mxu0 0.0
    %406 = vmatprep.subr.mxu0 0.0
    %407 = vmatpush1.msra.mxu0 0.0
    %408 = vmatprep.subr.mxu0 0.0
    %409 = vmatpush1.msra.mxu0 0.0
    %410 = vmatprep.subr.mxu0 0.0
    %411 = vmatpush1.msra.mxu0 0.0
    %412 = vmatprep.subr.mxu0 0.0
    %413 = vmatpush1.msra.mxu0 0.0
    %414 = vmatprep.subr.mxu0 0.0
    %415 = vmatpush1.msra.mxu0 0.0
    %416 = vmatprep.subr.mxu0 0.0
    %417 = vmatpush1.msra.mxu0 0.0
    %418 = vmatprep.subr.mxu0 0.0
    %419 = vmatpush1.msra.mxu0 0.0
    %420 = vmatprep.subr.mxu0 0.0
    %421 = vmatpush1.msra.mxu0 0.0
    %422 = vmatprep.subr.mxu0 0.0
    %423 = vmatpush1.msra.mxu0 0.0
    %424 = vmatprep.subr.mxu0 0.0
    %425 = vmatpush1.msra.mxu0 0.0
    %426 = vmatprep.subr.mxu0 0.0
    %427 = vmatpush1.msra.mxu0 0.0
    %428 = vmatprep.subr.mxu0 0.0
    %429 = vmatpush1.msra.mxu0 0.0
    %430 = vmatprep.subr.mxu0 0.0
    %431 = vmatpush1.msra.mxu0 0.0
    %432 = vmatprep.subr.mxu0 0.0
    %433 = vmatpush1.msra.mxu0 0.0
    %434 = vmatprep.subr.mxu0 0.0
    %435 = vmatpush1.msra.mxu0 0.0
    %436 = vmatprep.subr.mxu0 0.0
    %437 = vmatpush1.msra.mxu0 0.0
    %438 = vmatprep.subr.mxu0 0.0
    %439 = vmatpush1.msra.mxu0 0.0
    %440 = vmatprep.subr.mxu0 0.0
    %441 = vmatpush1.msra.mxu0 0.0
    %442 = vmatprep.subr.mxu0 0.0
    %443 = vmatpush1.msra.mxu0 0.0
    %444 = vmatprep.subr.mxu0 0.0
    %445 = vmatpush1.msra.mxu0 0.0
    %446 = vmatprep.mubr.f32.mxu0 0.0
    %447 = vmatmul.mubr.f32.gmra.mrb[0].mxu0 %v378
    %v448 = vpop.f32.mrb[0].mxu0
    %v449 = vadd.f32 0.0, %v448
    %v450 = vpop.f32.mrb[0].mxu0
    %451 = vdwg.mxu0
    %452 = vrot.lane.b32.xlu0 %v275, 112
    %v453 = vpop.permute.xlu0 %452
    %454 = vrot.lane.b32.xlu0 %v275, 80
    %v455 = vpop.permute.xlu0 %454
    %v456 = vsel %vm286, %v453, 0
    %v458 = vsel %vm286, %v455, 0
    %460 = vmatprep.subr.mxu0 0.0
    %461 = vmatpush1.xpose.msra.mxu0 %v458
    %462 = vmatprep.subr.mxu0 0.0
    %463 = vmatpush1.xpose.msra.mxu0 0.0
    %464 = vmatprep.subr.mxu0 0.0
    %465 = vmatpush1.xpose.msra.mxu0 0.0
    %466 = vmatprep.subr.mxu0 0.0
    %467 = vmatpush1.xpose.msra.mxu0 0.0
    %468 = vmatprep.subr.mxu0 0.0
    %469 = vmatpush1.xpose.msra.mxu0 0.0
    %470 = vmatprep.subr.mxu0 0.0
    %471 = vmatpush1.xpose.msra.mxu0 0.0
    %472 = vmatprep.subr.mxu0 0.0
    %473 = vmatpush1.xpose.msra.mxu0 0.0
    %474 = vmatprep.subr.mxu0 0.0
    %475 = vmatpush1.xpose.msra.mxu0 0.0
    %476 = vmatprep.subr.mxu0 0.0
    %477 = vmatpush1.xpose.msra.mxu0 0.0
    %478 = vmatprep.subr.mxu0 0.0
    %479 = vmatpush1.xpose.msra.mxu0 0.0
    %480 = vmatprep.subr.mxu0 0.0
    %481 = vmatpush1.xpose.msra.mxu0 0.0
    %482 = vmatprep.subr.mxu0 0.0
    %483 = vmatpush1.xpose.msra.mxu0 0.0
    %484 = vmatprep.subr.mxu0 0.0
    %485 = vmatpush1.xpose.msra.mxu0 0.0
    %486 = vmatprep.subr.mxu0 0.0
    %487 = vmatpush1.xpose.msra.mxu0 0.0
    %488 = vmatprep.subr.mxu0 0.0
    %489 = vmatpush1.xpose.msra.mxu0 0.0
    %490 = vmatprep.subr.mxu0 0.0
    %491 = vmatpush1.xpose.msra.mxu0 0.0
    %492 = vmatprep.subr.mxu0 0.0
    %493 = vmatpush1.xpose.msra.mxu0 0.0
    %494 = vmatprep.subr.mxu0 0.0
    %495 = vmatpush1.xpose.msra.mxu0 0.0
    %496 = vmatprep.subr.mxu0 0.0
    %497 = vmatpush1.xpose.msra.mxu0 0.0
    %498 = vmatprep.subr.mxu0 0.0
    %499 = vmatpush1.xpose.msra.mxu0 0.0
    %500 = vmatprep.subr.mxu0 0.0
    %501 = vmatpush1.xpose.msra.mxu0 0.0
    %502 = vmatprep.subr.mxu0 0.0
    %503 = vmatpush1.xpose.msra.mxu0 0.0
    %504 = vmatprep.subr.mxu0 0.0
    %505 = vmatpush1.xpose.msra.mxu0 0.0
    %506 = vmatprep.subr.mxu0 0.0
    %507 = vmatpush1.xpose.msra.mxu0 0.0
    %508 = vmatprep.subr.mxu0 0.0
    %509 = vmatpush1.xpose.msra.mxu0 0.0
    %510 = vmatprep.subr.mxu0 0.0
    %511 = vmatpush1.xpose.msra.mxu0 0.0
    %512 = vmatprep.subr.mxu0 0.0
    %513 = vmatpush1.xpose.msra.mxu0 0.0
    %514 = vmatprep.subr.mxu0 0.0
    %515 = vmatpush1.xpose.msra.mxu0 0.0
    %516 = vmatprep.subr.mxu0 0.0
    %517 = vmatpush1.xpose.msra.mxu0 0.0
    %518 = vmatprep.subr.mxu0 0.0
    %519 = vmatpush1.xpose.msra.mxu0 0.0
    %520 = vmatprep.subr.mxu0 0.0
    %521 = vmatpush1.xpose.msra.mxu0 0.0
    %522 = vmatprep.subr.mxu0 0.0
    %523 = vmatpush1.xpose.msra.mxu0 0.0
    %524 = vmatprep.mubr.f32.mxu0 0.0
    %525 = vmatmul.mubr.f32.gmra.mrb[0].mxu0 %v456
    %v526 = vpop.f32.mrb[0].mxu0
    %v527 = vadd.f32 0.0, %v526
    %v528 = vpop.f32.mrb[0].mxu0
    %529 = vdwg.mxu0
    %v530 = vmul.f32 %v527, 0.25
    %v531 = vsel %vm362, %v530, -inf
    %532 = vmax.xlane.f32.xlu0 %v531
    %v533 = vpop.xlane.xlu0 %532
    %v534 = vsub.f32 %v530, %v533
    %v535 = vmul.f32 %v534, 1.442695
    %v536 = vpow.pop %v535
    %v537 = vsel %vm362, %v536, 0.0
    %538 = vadd.xlane.f32.xlu0 %v537
    %v539 = vpop.xlane.xlu0 %538
    %v540 = vrcp.pop %v539
    %v541 = vmul.f32 %v536, %v540
    %542 = vrot.lane.b32.xlu0 %v275, 48
    %v543 = vpop.permute.xlu0 %542
    %v545 = vsel %vm376, %v541, 0
    %v547 = vsel %vm56, %v543, 0
    %549 = vmatprep.subr.mxu0 0.0
    %550 = vmatpush1.msra.mxu0 %v547
    %551 = vmatprep.subr.mxu0 0.0
    %552 = vmatpush1.msra.mxu0 0.0
    %553 = vmatprep.subr.mxu0 0.0
    %554 = vmatpush1.msra.mxu0 0.0
    %555 = vmatprep.subr.mxu0 0.0
    %556 = vmatpush1.msra.mxu0 0.0
    %557 = vmatprep.subr.mxu0 0.0
    %558 = vmatpush1.msra.mxu0 0.0
    %559 = vmatprep.subr.mxu0 0.0
    %560 = vmatpush1.msra.mxu0 0.0
    %561 = vmatprep.subr.mxu0 0.0
    %562 = vmatpush1.msra.mxu0 0.0
    %563 = vmatprep.subr.mxu0 0.0
    %564 = vmatpush1.msra.mxu0 0.0
    %565 = vmatprep.subr.mxu0 0.0
    %566 = vmatpush1.msra.mxu0 0.0
    %567 = vmatprep.subr.mxu0 0.0
    %568 = vmatpush1.msra.mxu0 0.0
    %569 = vmatprep.subr.mxu0 0.0
    %570 = vmatpush1.msra.mxu0 0.0
    %571 = vmatprep.subr.mxu0 0.0
    %572 = vmatpush1.msra.mxu0 0.0
    %573 = vmatprep.subr.mxu0 0.0
    %574 = vmatpush1.msra.mxu0 0.0
    %575 = vmatprep.subr.mxu0 0.0
    %576 = vmatpush1.msra.mxu0 0.0
    %577 = vmatprep.subr.mxu0 0.0
    %578 = vmatpush1.msra.mxu0 0.0
    %579 = vmatprep.subr.mxu0 0.0
    %580 = vmatpush1.msra.mxu0 0.0
    %581 = vmatprep.subr.mxu0 0.0
    %582 = vmatpush1.msra.mxu0 0.0
    %583 = vmatprep.subr.mxu0 0.0
    %584 = vmatpush1.msra.mxu0 0.0
    %585 = vmatprep.subr.mxu0 0.0
    %586 = vmatpush1.msra.mxu0 0.0
    %587 = vmatprep.subr.mxu0 0.0
    %588 = vmatpush1.msra.mxu0 0.0
    %589 = vmatprep.subr.mxu0 0.0
    %590 = vmatpush1.msra.mxu0 0.0
    %591 = vmatprep.subr.mxu0 0.0
    %592 = vmatpush1.msra.mxu0 0.0
    %593 = vmatprep.subr.mxu0 0.0
    %594 = vmatpush1.msra.mxu0 0.0
    %595 = vmatprep.subr.mxu0 0.0
    %596 = vmatpush1.msra.mxu0 0.0
    %597 = vmatprep.subr.mxu0 0.0
    %598 = vmatpush1.msra.mxu0 0.0
    %599 = vmatprep.subr.mxu0 0.0
    %600 = vmatpush1.msra.mxu0 0.0
    %601 = vmatprep.subr.mxu0 0.0
    %602 = vmatpush1.msra.mxu0 0.0
    %603 = vmatprep.subr.mxu0 0.0
    %604 = vmatpush1.msra.mxu0 0.0
    %605 = vmatprep.subr.mxu0 0.0
    %606 = vmatpush1.msra.mxu0 0.0
    %607 = vmatprep.subr.mxu0 0.0
    %608 = vmatpush1.msra.mxu0 0.0
    %609 = vmatprep.subr.mxu0 0.0
    %610 = vmatpush1.msra.mxu0 0.0
    %611 = vmatprep.subr.mxu0 0.0
    %612 = vmatpush1.msra.mxu0 0.0
    %613 = vmatprep.mubr.f32.mxu0 0.0
    %614 = vmatmul.mubr.f32.gmra.mrb[0].mxu0 %v545
    %v615 = vpop.f32.mrb[0].mxu0
    %v616 = vadd.f32 0.0, %v615
    %v617 = vpop.f32.mrb[0].mxu0
    %618 = vdwg.mxu0
    %620 = vrot.lane.b32.xlu0 %v616, 16
    %v621 = vpop.permute.xlu0 %620
    %v623 = vsel %vm286, %v449, %v621
    %vm625 = vcmask 1042432
    %v626 = vrot.slane %v275, 5
    %v627 = vrot.slane %v280, 5
    %v628 = vsel %vm625, %v626, %v627
    %629 = vrot.lane.b32.xlu0 %v628, 96
    %v630 = vpop.permute.xlu0 %629
    %v631 = vsel %vm286, %v628, 0
    %v633 = vsel %vm286, %v630, 0
    %635 = vmatprep.subr.mxu0 0.0
    %636 = vmatpush1.xpose.msra.mxu0 %v633
    %637 = vmatprep.subr.mxu0 0.0
    %638 = vmatpush1.xpose.msra.mxu0 0.0
    %639 = vmatprep.subr.mxu0 0.0
    %640 = vmatpush1.xpose.msra.mxu0 0.0
    %641 = vmatprep.subr.mxu0 0.0
    %642 = vmatpush1.xpose.msra.mxu0 0.0
    %643 = vmatprep.subr.mxu0 0.0
    %644 = vmatpush1.xpose.msra.mxu0 0.0
    %645 = vmatprep.subr.mxu0 0.0
    %646 = vmatpush1.xpose.msra.mxu0 0.0
    %647 = vmatprep.subr.mxu0 0.0
    %648 = vmatpush1.xpose.msra.mxu0 0.0
    %649 = vmatprep.subr.mxu0 0.0
    %650 = vmatpush1.xpose.msra.mxu0 0.0
    %651 = vmatprep.subr.mxu0 0.0
    %652 = vmatpush1.xpose.msra.mxu0 0.0
    %653 = vmatprep.subr.mxu0 0.0
    %654 = vmatpush1.xpose.msra.mxu0 0.0
    %655 = vmatprep.subr.mxu0 0.0
    %656 = vmatpush1.xpose.msra.mxu0 0.0
    %657 = vmatprep.subr.mxu0 0.0
    %658 = vmatpush1.xpose.msra.mxu0 0.0
    %659 = vmatprep.subr.mxu0 0.0
    %660 = vmatpush1.xpose.msra.mxu0 0.0
    %661 = vmatprep.subr.mxu0 0.0
    %662 = vmatpush1.xpose.msra.mxu0 0.0
    %663 = vmatprep.subr.mxu0 0.0
    %664 = vmatpush1.xpose.msra.mxu0 0.0
    %665 = vmatprep.subr.mxu0 0.0
    %666 = vmatpush1.xpose.msra.mxu0 0.0
    %667 = vmatprep.subr.mxu0 0.0
    %668 = vmatpush1.xpose.msra.mxu0 0.0
    %669 = vmatprep.subr.mxu0 0.0
    %670 = vmatpush1.xpose.msra.mxu0 0.0
    %671 = vmatprep.subr.mxu0 0.0
    %672 = vmatpush1.xpose.msra.mxu0 0.0
    %673 = vmatprep.subr.mxu0 0.0
    %674 = vmatpush1.xpose.msra.mxu0 0.0
    %675 = vmatprep.subr.mxu0 0.0
    %676 = vmatpush1.xpose.msra.mxu0 0.0
    %677 = vmatprep.subr.mxu0 0.0
    %678 = vmatpush1.xpose.msra.mxu0 0.0
    %679 = vmatprep.subr.mxu0 0.0
    %680 = vmatpush1.xpose.msra.mxu0 0.0
    %681 = vmatprep.subr.mxu0 0.0
    %682 = vmatpush1.xpose.msra.mxu0 0.0
    %683 = vmatprep.subr.mxu0 0.0
    %684 = vmatpush1.xpose.msra.mxu0 0.0
    %685 = vmatprep.subr.mxu0 0.0
    %686 = vmatpush1.xpose.msra.mxu0 0.0
    %687 = vmatprep.subr.mxu0 0.0
    %688 = vmatpush1.xpose.msra.mxu0 0.0
    %689 = vmatprep.subr.mxu0 0.0
    %690 = vmatpush1.xpose.msra.mxu0 0.0
    %691 = vmatprep.subr.mxu0 0.0
    %692 = vmatpush1.xpose.msra.mxu0 0.0
    %693 = vmatprep.subr.mxu0 0.0
    %694 = vmatpush1.xpose.msra.mxu0 0.0
    %695 = vmatprep.subr.mxu0 0.0
    %696 = vmatpush1.xpose.msra.mxu0 0.0
    %697 = vmatprep.subr.mxu0 0.0
    %698 = vmatpush1.xpose.msra.mxu0 0.0
    %699 = vmatprep.mubr.f32.mxu0 0.0
    %700 = vmatmul.mubr.f32.gmra.mrb[0].mxu0 %v631
    %v701 = vpop.f32.mrb[0].mxu0
    %v702 = vadd.f32 0.0, %v701
    %v703 = vpop.f32.mrb[0].mxu0
    %704 = vdwg.mxu0
    %v705 = vmul.f32 %v702, 0.25
    %v706 = vsel %vm362, %v705, -inf
    %707 = vmax.xlane.f32.xlu0 %v706
    %v708 = vpop.xlane.xlu0 %707
    %v709 = vsub.f32 %v705, %v708
    %v710 = vmul.f32 %v709, 1.442695
    %v711 = vpow.pop %v710
    %v712 = vsel %vm362, %v711, 0.0
    %713 = vadd.xlane.f32.xlu0 %v712
    %v714 = vpop.xlane.xlu0 %713
    %v715 = vrcp.pop %v714
    %v716 = vmul.f32 %v711, %v715
    %717 = vrot.lane.b32.xlu0 %v628, 64
    %v718 = vpop.permute.xlu0 %717
    %v720 = vsel %vm376, %v716, 0
    %v722 = vsel %vm56, %v718, 0
    %724 = vmatprep.subr.mxu0 0.0
    %725 = vmatpush1.msra.mxu0 %v722
    %726 = vmatprep.subr.mxu0 0.0
    %727 = vmatpush1.msra.mxu0 0.0
    %728 = vmatprep.subr.mxu0 0.0
    %729 = vmatpush1.msra.mxu0 0.0
    %730 = vmatprep.subr.mxu0 0.0
    %731 = vmatpush1.msra.mxu0 0.0
    %732 = vmatprep.subr.mxu0 0.0
    %733 = vmatpush1.msra.mxu0 0.0
    %734 = vmatprep.subr.mxu0 0.0
    %735 = vmatpush1.msra.mxu0 0.0
    %736 = vmatprep.subr.mxu0 0.0
    %737 = vmatpush1.msra.mxu0 0.0
    %738 = vmatprep.subr.mxu0 0.0
    %739 = vmatpush1.msra.mxu0 0.0
    %740 = vmatprep.subr.mxu0 0.0
    %741 = vmatpush1.msra.mxu0 0.0
    %742 = vmatprep.subr.mxu0 0.0
    %743 = vmatpush1.msra.mxu0 0.0
    %744 = vmatprep.subr.mxu0 0.0
    %745 = vmatpush1.msra.mxu0 0.0
    %746 = vmatprep.subr.mxu0 0.0
    %747 = vmatpush1.msra.mxu0 0.0
    %748 = vmatprep.subr.mxu0 0.0
    %749 = vmatpush1.msra.mxu0 0.0
    %750 = vmatprep.subr.mxu0 0.0
    %751 = vmatpush1.msra.mxu0 0.0
    %752 = vmatprep.subr.mxu0 0.0
    %753 = vmatpush1.msra.mxu0 0.0
    %754 = vmatprep.subr.mxu0 0.0
    %755 = vmatpush1.msra.mxu0 0.0
    %756 = vmatprep.subr.mxu0 0.0
    %757 = vmatpush1.msra.mxu0 0.0
    %758 = vmatprep.subr.mxu0 0.0
    %759 = vmatpush1.msra.mxu0 0.0
    %760 = vmatprep.subr.mxu0 0.0
    %761 = vmatpush1.msra.mxu0 0.0
    %762 = vmatprep.subr.mxu0 0.0
    %763 = vmatpush1.msra.mxu0 0.0
    %764 = vmatprep.subr.mxu0 0.0
    %765 = vmatpush1.msra.mxu0 0.0
    %766 = vmatprep.subr.mxu0 0.0
    %767 = vmatpush1.msra.mxu0 0.0
    %768 = vmatprep.subr.mxu0 0.0
    %769 = vmatpush1.msra.mxu0 0.0
    %770 = vmatprep.subr.mxu0 0.0
    %771 = vmatpush1.msra.mxu0 0.0
    %772 = vmatprep.subr.mxu0 0.0
    %773 = vmatpush1.msra.mxu0 0.0
    %774 = vmatprep.subr.mxu0 0.0
    %775 = vmatpush1.msra.mxu0 0.0
    %776 = vmatprep.subr.mxu0 0.0
    %777 = vmatpush1.msra.mxu0 0.0
    %778 = vmatprep.subr.mxu0 0.0
    %779 = vmatpush1.msra.mxu0 0.0
    %780 = vmatprep.subr.mxu0 0.0
    %781 = vmatpush1.msra.mxu0 0.0
    %782 = vmatprep.subr.mxu0 0.0
    %783 = vmatpush1.msra.mxu0 0.0
    %784 = vmatprep.subr.mxu0 0.0
    %785 = vmatpush1.msra.mxu0 0.0
    %786 = vmatprep.subr.mxu0 0.0
    %787 = vmatpush1.msra.mxu0 0.0
    %788 = vmatprep.mubr.f32.mxu0 0.0
    %789 = vmatmul.mubr.f32.gmra.mrb[0].mxu0 %v720
    %v790 = vpop.f32.mrb[0].mxu0
    %v791 = vadd.f32 0.0, %v790
    %v792 = vpop.f32.mrb[0].mxu0
    %793 = vdwg.mxu0
    %794 = vrot.lane.b32.xlu0 %v628, 112
    %v795 = vpop.permute.xlu0 %794
    %796 = vrot.lane.b32.xlu0 %v628, 80
    %v797 = vpop.permute.xlu0 %796
    %v798 = vsel %vm286, %v795, 0
    %v800 = vsel %vm286, %v797, 0
    %802 = vmatprep.subr.mxu0 0.0
    %803 = vmatpush1.xpose.msra.mxu0 %v800
    %804 = vmatprep.subr.mxu0 0.0
    %805 = vmatpush1.xpose.msra.mxu0 0.0
    %806 = vmatprep.subr.mxu0 0.0
    %807 = vmatpush1.xpose.msra.mxu0 0.0
    %808 = vmatprep.subr.mxu0 0.0
    %809 = vmatpush1.xpose.msra.mxu0 0.0
    %810 = vmatprep.subr.mxu0 0.0
    %811 = vmatpush1.xpose.msra.mxu0 0.0
    %812 = vmatprep.subr.mxu0 0.0
    %813 = vmatpush1.xpose.msra.mxu0 0.0
    %814 = vmatprep.subr.mxu0 0.0
    %815 = vmatpush1.xpose.msra.mxu0 0.0
    %816 = vmatprep.subr.mxu0 0.0
    %817 = vmatpush1.xpose.msra.mxu0 0.0
    %818 = vmatprep.subr.mxu0 0.0
    %819 = vmatpush1.xpose.msra.mxu0 0.0
    %820 = vmatprep.subr.mxu0 0.0
    %821 = vmatpush1.xpose.msra.mxu0 0.0
    %822 = vmatprep.subr.mxu0 0.0
    %823 = vmatpush1.xpose.msra.mxu0 0.0
    %824 = vmatprep.subr.mxu0 0.0
    %825 = vmatpush1.xpose.msra.mxu0 0.0
    %826 = vmatprep.subr.mxu0 0.0
    %827 = vmatpush1.xpose.msra.mxu0 0.0
    %828 = vmatprep.subr.mxu0 0.0
    %829 = vmatpush1.xpose.msra.mxu0 0.0
    %830 = vmatprep.subr.mxu0 0.0
    %831 = vmatpush1.xpose.msra.mxu0 0.0
    %832 = vmatprep.subr.mxu0 0.0
    %833 = vmatpush1.xpose.msra.mxu0 0.0
    %834 = vmatprep.subr.mxu0 0.0
    %835 = vmatpush1.xpose.msra.mxu0 0.0
    %836 = vmatprep.subr.mxu0 0.0
    %837 = vmatpush1.xpose.msra.mxu0 0.0
    %838 = vmatprep.subr.mxu0 0.0
    %839 = vmatpush1.xpose.msra.mxu0 0.0
    %840 = vmatprep.subr.mxu0 0.0
    %841 = vmatpush1.xpose.msra.mxu0 0.0
    %842 = vmatprep.subr.mxu0 0.0
    %843 = vmatpush1.xpose.msra.mxu0 0.0
    %844 = vmatprep.subr.mxu0 0.0
    %845 = vmatpush1.xpose.msra.mxu0 0.0
    %846 = vmatprep.subr.mxu0 0.0
    %847 = vmatpush1.xpose.msra.mxu0 0.0
    %848 = vmatprep.subr.mxu0 0.0
    %849 = vmatpush1.xpose.msra.mxu0 0.0
    %850 = vmatprep.subr.mxu0 0.0
    %851 = vmatpush1.xpose.msra.mxu0 0.0
    %852 = vmatprep.subr.mxu0 0.0
    %853 = vmatpush1.xpose.msra.mxu0 0.0
    %854 = vmatprep.subr.mxu0 0.0
    %855 = vmatpush1.xpose.msra.mxu0 0.0
    %856 = vmatprep.subr.mxu0 0.0
    %857 = vmatpush1.xpose.msra.mxu0 0.0
    %858 = vmatprep.subr.mxu0 0.0
    %859 = vmatpush1.xpose.msra.mxu0 0.0
    %860 = vmatprep.subr.mxu0 0.0
    %861 = vmatpush1.xpose.msra.mxu0 0.0
    %862 = vmatprep.subr.mxu0 0.0
    %863 = vmatpush1.xpose.msra.mxu0 0.0
    %864 = vmatprep.subr.mxu0 0.0
    %865 = vmatpush1.xpose.msra.mxu0 0.0
    %866 = vmatprep.mubr.f32.mxu0 0.0
    %867 = vmatmul.mubr.f32.gmra.mrb[0].mxu0 %v798
    %v868 = vpop.f32.mrb[0].mxu0
    %v869 = vadd.f32 0.0, %v868
    %v870 = vpop.f32.mrb[0].mxu0
    %871 = vdwg.mxu0
    %v872 = vmul.f32 %v869, 0.25
    %v873 = vsel %vm362, %v872, -inf
    %874 = vmax.xlane.f32.xlu0 %v873
    %v875 = vpop.xlane.xlu0 %874
    %v876 = vsub.f32 %v872, %v875
    %v877 = vmul.f32 %v876, 1.442695
    %v878 = vpow.pop %v877
    %v879 = vsel %vm362, %v878, 0.0
    %880 = vadd.xlane.f32.xlu0 %v879
    %v881 = vpop.xlane.xlu0 %880
    %v882 = vrcp.pop %v881
    %v883 = vmul.f32 %v878, %v882
    %884 = vrot.lane.b32.xlu0 %v628, 48
    %v885 = vpop.permute.xlu0 %884
    %v887 = vsel %vm376, %v883, 0
    %v889 = vsel %vm56, %v885, 0
    %891 = vmatprep.subr.mxu0 0.0
    %892 = vmatpush1.msra.mxu0 %v889
    %893 = vmatprep.subr.mxu0 0.0
    %894 = vmatpush1.msra.mxu0 0.0
    %895 = vmatprep.subr.mxu0 0.0
    %896 = vmatpush1.msra.mxu0 0.0
    %897 = vmatprep.subr.mxu0 0.0
    %898 = vmatpush1.msra.mxu0 0.0
    %899 = vmatprep.subr.mxu0 0.0
    %900 = vmatpush1.msra.mxu0 0.0
    %901 = vmatprep.subr.mxu0 0.0
    %902 = vmatpush1.msra.mxu0 0.0
    %903 = vmatprep.subr.mxu0 0.0
    %904 = vmatpush1.msra.mxu0 0.0
    %905 = vmatprep.subr.mxu0 0.0
    %906 = vmatpush1.msra.mxu0 0.0
    %907 = vmatprep.subr.mxu0 0.0
    %908 = vmatpush1.msra.mxu0 0.0
    %909 = vmatprep.subr.mxu0 0.0
    %910 = vmatpush1.msra.mxu0 0.0
    %911 = vmatprep.subr.mxu0 0.0
    %912 = vmatpush1.msra.mxu0 0.0
    %913 = vmatprep.subr.mxu0 0.0
    %914 = vmatpush1.msra.mxu0 0.0
    %915 = vmatprep.subr.mxu0 0.0
    %916 = vmatpush1.msra.mxu0 0.0
    %917 = vmatprep.subr.mxu0 0.0
    %918 = vmatpush1.msra.mxu0 0.0
    %919 = vmatprep.subr.mxu0 0.0
    %920 = vmatpush1.msra.mxu0 0.0
    %921 = vmatprep.subr.mxu0 0.0
    %922 = vmatpush1.msra.mxu0 0.0
    %923 = vmatprep.subr.mxu0 0.0
    %924 = vmatpush1.msra.mxu0 0.0
    %925 = vmatprep.subr.mxu0 0.0
    %926 = vmatpush1.msra.mxu0 0.0
    %927 = vmatprep.subr.mxu0 0.0
    %928 = vmatpush1.msra.mxu0 0.0
    %929 = vmatprep.subr.mxu0 0.0
    %930 = vmatpush1.msra.mxu0 0.0
    %931 = vmatprep.subr.mxu0 0.0
    %932 = vmatpush1.msra.mxu0 0.0
    %933 = vmatprep.subr.mxu0 0.0
    %934 = vmatpush1.msra.mxu0 0.0
    %935 = vmatprep.subr.mxu0 0.0
    %936 = vmatpush1.msra.mxu0 0.0
    %937 = vmatprep.subr.mxu0 0.0
    %938 = vmatpush1.msra.mxu0 0.0
    %939 = vmatprep.subr.mxu0 0.0
    %940 = vmatpush1.msra.mxu0 0.0
    %941 = vmatprep.subr.mxu0 0.0
    %942 = vmatpush1.msra.mxu0 0.0
    %943 = vmatprep.subr.mxu0 0.0
    %944 = vmatpush1.msra.mxu0 0.0
    %945 = vmatprep.subr.mxu0 0.0
    %946 = vmatpush1.msra.mxu0 0.0
    %947 = vmatprep.subr.mxu0 0.0
    %948 = vmatpush1.msra.mxu0 0.0
    %949 = vmatprep.subr.mxu0 0.0
    %950 = vmatpush1.msra.mxu0 0.0
    %951 = vmatprep.subr.mxu0 0.0
    %952 = vmatpush1.msra.mxu0 0.0
    %953 = vmatprep.subr.mxu0 0.0
    %954 = vmatpush1.msra.mxu0 0.0
    %955 = vmatprep.mubr.f32.mxu0 0.0
    %956 = vmatmul.mubr.f32.gmra.mrb[0].mxu0 %v887
    %v957 = vpop.f32.mrb[0].mxu0
    %v958 = vadd.f32 0.0, %v957
    %v959 = vpop.f32.mrb[0].mxu0
    %960 = vdwg.mxu0
    %962 = vrot.lane.b32.xlu0 %v958, 16
    %v963 = vpop.permute.xlu0 %962
    %v965 = vsel %vm286, %v791, %v963
    %v967 = vrot.slane %v965, 3
    %v969 = vsel %vm56, %v623, %v967
    %974 = vrot.lane.b32.xlu0 %v140, 32
    %v975 = vpop.permute.xlu0 %974
    %976 = vrot.lane.b32.xlu0 %v141, 32
    %v977 = vpop.permute.xlu0 %976
    %978 = vrot.lane.b32.xlu0 %v142, 32
    %v979 = vpop.permute.xlu0 %978
    %980 = vrot.lane.b32.xlu0 %v143, 32
    %v981 = vpop.permute.xlu0 %980
    %v987 = vsel %vm157, %v969, 0
    %v989 = vsel %vm157, %v967, 0
    %991 = vmatprep.subr.mxu0 0.0
    %992 = vmatpush1.msra.mxu0 %v975
    %993 = vmatprep.subr.mxu0 0.0
    %994 = vmatpush1.msra.mxu0 %v977
    %995 = vmatprep.subr.mxu0 0.0
    %996 = vmatpush1.msra.mxu0 %v979
    %997 = vmatprep.subr.mxu0 0.0
    %998 = vmatpush1.msra.mxu0 %v981
    %999 = vmatprep.subr.mxu0 0.0
    %1000 = vmatpush1.msra.mxu0 0.0
    %1001 = vmatprep.subr.mxu0 0.0
    %1002 = vmatpush1.msra.mxu0 0.0
    %1003 = vmatprep.subr.mxu0 0.0
    %1004 = vmatpush1.msra.mxu0 0.0
    %1005 = vmatprep.subr.mxu0 0.0
    %1006 = vmatpush1.msra.mxu0 0.0
    %1007 = vmatprep.subr.mxu0 0.0
    %1008 = vmatpush1.msra.mxu0 0.0
    %1009 = vmatprep.subr.mxu0 0.0
    %1010 = vmatpush1.msra.mxu0 0.0
    %1011 = vmatprep.subr.mxu0 0.0
    %1012 = vmatpush1.msra.mxu0 0.0
    %1013 = vmatprep.subr.mxu0 0.0
    %1014 = vmatpush1.msra.mxu0 0.0
    %1015 = vmatprep.subr.mxu0 0.0
    %1016 = vmatpush1.msra.mxu0 0.0
    %1017 = vmatprep.subr.mxu0 0.0
    %1018 = vmatpush1.msra.mxu0 0.0
    %1019 = vmatprep.subr.mxu0 0.0
    %1020 = vmatpush1.msra.mxu0 0.0
    %1021 = vmatprep.subr.mxu0 0.0
    %1022 = vmatpush1.msra.mxu0 0.0
    %1023 = vmatprep.subr.mxu0 0.0
    %1024 = vmatpush1.msra.mxu0 0.0
    %1025 = vmatprep.subr.mxu0 0.0
    %1026 = vmatpush1.msra.mxu0 0.0
    %1027 = vmatprep.subr.mxu0 0.0
    %1028 = vmatpush1.msra.mxu0 0.0
    %1029 = vmatprep.subr.mxu0 0.0
    %1030 = vmatpush1.msra.mxu0 0.0
    %1031 = vmatprep.subr.mxu0 0.0
    %1032 = vmatpush1.msra.mxu0 0.0
    %1033 = vmatprep.subr.mxu0 0.0
    %1034 = vmatpush1.msra.mxu0 0.0
    %1035 = vmatprep.subr.mxu0 0.0
    %1036 = vmatpush1.msra.mxu0 0.0
    %1037 = vmatprep.subr.mxu0 0.0
    %1038 = vmatpush1.msra.mxu0 0.0
    %1039 = vmatprep.subr.mxu0 0.0
    %1040 = vmatpush1.msra.mxu0 0.0
    %1041 = vmatprep.subr.mxu0 0.0
    %1042 = vmatpush1.msra.mxu0 0.0
    %1043 = vmatprep.subr.mxu0 0.0
    %1044 = vmatpush1.msra.mxu0 0.0
    %1045 = vmatprep.subr.mxu0 0.0
    %1046 = vmatpush1.msra.mxu0 0.0
    %1047 = vmatprep.subr.mxu0 0.0
    %1048 = vmatpush1.msra.mxu0 0.0
    %1049 = vmatprep.subr.mxu0 0.0
    %1050 = vmatpush1.msra.mxu0 0.0
    %1051 = vmatprep.subr.mxu0 0.0
    %1052 = vmatpush1.msra.mxu0 0.0
    %1053 = vmatprep.subr.mxu0 0.0
    %1054 = vmatpush1.msra.mxu0 0.0
    %1055 = vmatprep.mubr.f32.mxu0 0.0
    %1056 = vmatmul.mubr.f32.gmra.mrb[0].mxu0 %v987
    %v1057 = vpop.f32.mrb[0].mxu0
    %v1058 = vadd.f32 0.0, %v1057
    %v1059 = vpop.f32.mrb[0].mxu0
    %1060 = vmatprep.mubr.f32.mxu0 0.0
    %1061 = vmatmul.mubr.f32.gmra.mrb[0].mxu0 %v989
    %v1062 = vpop.f32.mrb[0].mxu0
    %v1063 = vadd.f32 0.0, %v1062
    %v1064 = vpop.f32.mrb[0].mxu0
    %1065 = vdwg.mxu0
    %v1066 = vadd.f32 %v132, %v1058
    %v1067 = vadd.f32 %v137, %v1063
    %v1068 = vlaneseq
    %v1069 = vshrl.u32 %v1068, 7
    %v1070 = vsub.s32 3, %v1069
    %v1071 = vrot.slane %v156, %v1070
    %v1072 = vadd.f32 %v1066, %v1071
    %v1073 = vadd.f32 %v1067, %v1071
    %v1074 = vsel %vm157, %v1072, 0.0
    %1075 = vadd.xlane.f32.xlu0 %v1074
    %v1076 = vpop.xlane.xlu0 %1075
    %v1077 = vsel %vm161, %v1073, 0.0
    %1078 = vadd.xlane.f32.xlu0 %v1077
    %v1079 = vpop.xlane.xlu0 %1078
    %v1080 = vmul.f32 %v1076, %v165
    %v1081 = vmul.f32 %v1079, %v165
    %v1082 = vsub.f32 %v1072, %v1080
    %v1083 = vsub.f32 %v1073, %v1081
    %v1084 = vmul.f32 %v1082, %v1082
    %v1085 = vmul.f32 %v1083, %v1083
    %v1086 = vsel %vm157, %v1084, 0.0
    %1087 = vadd.xlane.f32.xlu0 %v1086
    %v1088 = vpop.xlane.xlu0 %1087
    %v1089 = vsel %vm161, %v1085, 0.0
    %1090 = vadd.xlane.f32.xlu0 %v1089
    %v1091 = vpop.xlane.xlu0 %1090
    %v1092 = vmul.f32 %v1088, %v165
    %v1093 = vmul.f32 %v1091, %v165
    %v1094 = vadd.f32 %v1092, 1e-06
    %v1095 = vadd.f32 %v1093, 1e-06
    %v1096 = vrsqrt.pop %v1094
    %v1097 = vrsqrt.pop %v1095
    %v1098 = vmul.f32 %v1082, %v1096
    %v1099 = vmul.f32 %v1083, %v1097
    %v1100 = vlaneseq
    %v1101 = vshrl.u32 %v1100, 7
    %v1102 = vsub.s32 4, %v1101
    %v1103 = vrot.slane %v156, %v1102
    %v1104 = vmul.f32 %v1098, %v1103
    %v1105 = vmul.f32 %v1099, %v1103
    %v1106 = vlaneseq
    %v1107 = vshrl.u32 %v1106, 7
    %v1108 = vsub.s32 5, %v1107
    %v1109 = vrot.slane %v156, %v1108
    %v1110 = vadd.f32 %v1104, %v1109
    %v1111 = vadd.f32 %v1105, %v1109
    %v1112 = vlaneseq
    %v1113 = vshrl.u32 %v1112, 7
    %v1114 = vsub.s32 6, %v1113
    %v1115 = vrot.slane %v156, %v1114
    %v1117 = vsel %vm157, %v1110, 0
    %v1120 = vsel %vm157, %v1111, 0
    %1122 = vmatprep.subr.mxu0 0.0
    %1123 = vmatpush1.msra.mxu0 %v144
    %1124 = vmatprep.subr.mxu0 0.0
    %1125 = vmatpush1.msra.mxu0 %v145
    %1126 = vmatprep.subr.mxu0 0.0
    %1127 = vmatpush1.msra.mxu0 %v146
    %1128 = vmatprep.subr.mxu0 0.0
    %1129 = vmatpush1.msra.mxu0 %v147
    %1130 = vmatprep.subr.mxu0 0.0
    %1131 = vmatpush1.msra.mxu0 0.0
    %1132 = vmatprep.subr.mxu0 0.0
    %1133 = vmatpush1.msra.mxu0 0.0
    %1134 = vmatprep.subr.mxu0 0.0
    %1135 = vmatpush1.msra.mxu0 0.0
    %1136 = vmatprep.subr.mxu0 0.0
    %1137 = vmatpush1.msra.mxu0 0.0
    %1138 = vmatprep.subr.mxu0 0.0
    %1139 = vmatpush1.msra.mxu0 0.0
    %1140 = vmatprep.subr.mxu0 0.0
    %1141 = vmatpush1.msra.mxu0 0.0
    %1142 = vmatprep.subr.mxu0 0.0
    %1143 = vmatpush1.msra.mxu0 0.0
    %1144 = vmatprep.subr.mxu0 0.0
    %1145 = vmatpush1.msra.mxu0 0.0
    %1146 = vmatprep.subr.mxu0 0.0
    %1147 = vmatpush1.msra.mxu0 0.0
    %1148 = vmatprep.subr.mxu0 0.0
    %1149 = vmatpush1.msra.mxu0 0.0
    %1150 = vmatprep.subr.mxu0 0.0
    %1151 = vmatpush1.msra.mxu0 0.0
    %1152 = vmatprep.subr.mxu0 0.0
    %1153 = vmatpush1.msra.mxu0 0.0
    %1154 = vmatprep.subr.mxu0 0.0
    %1155 = vmatpush1.msra.mxu0 0.0
    %1156 = vmatprep.subr.mxu0 0.0
    %1157 = vmatpush1.msra.mxu0 0.0
    %1158 = vmatprep.subr.mxu0 0.0
    %1159 = vmatpush1.msra.mxu0 0.0
    %1160 = vmatprep.subr.mxu0 0.0
    %1161 = vmatpush1.msra.mxu0 0.0
    %1162 = vmatprep.subr.mxu0 0.0
    %1163 = vmatpush1.msra.mxu0 0.0
    %1164 = vmatprep.subr.mxu0 0.0
    %1165 = vmatpush1.msra.mxu0 0.0
    %1166 = vmatprep.subr.mxu0 0.0
    %1167 = vmatpush1.msra.mxu0 0.0
    %1168 = vmatprep.subr.mxu0 0.0
    %1169 = vmatpush1.msra.mxu0 0.0
    %1170 = vmatprep.subr.mxu0 0.0
    %1171 = vmatpush1.msra.mxu0 0.0
    %1172 = vmatprep.subr.mxu0 0.0
    %1173 = vmatpush1.msra.mxu0 0.0
    %1174 = vmatprep.subr.mxu0 0.0
    %1175 = vmatpush1.msra.mxu0 0.0
    %1176 = vmatprep.subr.mxu0 0.0
    %1177 = vmatpush1.msra.mxu0 0.0
    %1178 = vmatprep.subr.mxu0 0.0
    %1179 = vmatpush1.msra.mxu0 0.0
    %1180 = vmatprep.subr.mxu0 0.0
    %1181 = vmatpush1.msra.mxu0 0.0
    %1182 = vmatprep.subr.mxu0 0.0
    %1183 = vmatpush1.msra.mxu0 0.0
    %1184 = vmatprep.subr.mxu0 0.0
    %1185 = vmatpush1.msra.mxu0 0.0
    %1186 = vmatprep.mubr.f32.mxu0 0.0
    %1187 = vmatmul.mubr.f32.gmra.mrb[0].mxu0 %v1117
    %v1188 = vpop.f32.mrb[0].mxu0
    %v1189 = vadd.f32 %v1115, %v1188
    %v1190 = vpop.f32.mrb[0].mxu0
    %1191 = vmatprep.mubr.f32.mxu0 0.0
    %1192 = vmatmul.mubr.f32.gmra.mrb[0].mxu0 %v1120
    %v1193 = vpop.f32.mrb[0].mxu0
    %v1194 = vadd.f32 %v1115, %v1193
    %v1195 = vpop.f32.mrb[0].mxu0
    %1196 = vdwg.mxu0
    %v1197 = vmul.f32 %v1189, %v1189
    %v1198 = vmul.f32 %v1194, %v1194
    %v1199 = vmul.f32 %v1189, %v1197
    %v1200 = vmul.f32 %v1194, %v1198
    %v1201 = vmul.f32 %v1199, 0.044715
    %v1202 = vmul.f32 %v1200, 0.044715
    %v1203 = vadd.f32 %v1189, %v1201
    %v1204 = vadd.f32 %v1194, %v1202
    %v1205 = vmul.f32 %v1203, 0.7978846
    %v1206 = vmul.f32 %v1204, 0.7978846
    %v1207 = vtanh.pop %v1205
    %v1208 = vtanh.pop %v1206
    %v1209 = vadd.f32 %v1207, 1.0
    %v1210 = vadd.f32 %v1208, 1.0
    %v1211 = vmul.f32 %v1209, 0.5
    %v1212 = vmul.f32 %v1210, 0.5
    %v1213 = vmul.f32 %v1189, %v1211
    %v1214 = vmul.f32 %v1194, %v1212
    %v1216 = vsel %vm58, %v1213, 0
    %v1219 = vsel %vm58, %v1214, 0
    %1221 = vmatprep.subr.mxu0 0.0
    %1222 = vmatpush1.msra.mxu0 %v148
    %1223 = vmatprep.subr.mxu0 0.0
    %1224 = vmatpush1.msra.mxu0 %v149
    %1225 = vmatprep.subr.mxu0 0.0
    %1226 = vmatpush1.msra.mxu0 %v150
    %1227 = vmatprep.subr.mxu0 0.0
    %1228 = vmatpush1.msra.mxu0 %v151
    %1229 = vmatprep.subr.mxu0 0.0
    %1230 = vmatpush1.msra.mxu0 %v152
    %1231 = vmatprep.subr.mxu0 0.0
    %1232 = vmatpush1.msra.mxu0 %v153
    %1233 = vmatprep.subr.mxu0 0.0
    %1234 = vmatpush1.msra.mxu0 %v154
    %1235 = vmatprep.subr.mxu0 0.0
    %1236 = vmatpush1.msra.mxu0 %v155
    %1237 = vmatprep.subr.mxu0 0.0
    %1238 = vmatpush1.msra.mxu0 0.0
    %1239 = vmatprep.subr.mxu0 0.0
    %1240 = vmatpush1.msra.mxu0 0.0
    %1241 = vmatprep.subr.mxu0 0.0
    %1242 = vmatpush1.msra.mxu0 0.0
    %1243 = vmatprep.subr.mxu0 0.0
    %1244 = vmatpush1.msra.mxu0 0.0
    %1245 = vmatprep.subr.mxu0 0.0
    %1246 = vmatpush1.msra.mxu0 0.0
    %1247 = vmatprep.subr.mxu0 0.0
    %1248 = vmatpush1.msra.mxu0 0.0
    %1249 = vmatprep.subr.mxu0 0.0
    %1250 = vmatpush1.msra.mxu0 0.0
    %1251 = vmatprep.subr.mxu0 0.0
    %1252 = vmatpush1.msra.mxu0 0.0
    %1253 = vmatprep.subr.mxu0 0.0
    %1254 = vmatpush1.msra.mxu0 0.0
    %1255 = vmatprep.subr.mxu0 0.0
    %1256 = vmatpush1.msra.mxu0 0.0
    %1257 = vmatprep.subr.mxu0 0.0
    %1258 = vmatpush1.msra.mxu0 0.0
    %1259 = vmatprep.subr.mxu0 0.0
    %1260 = vmatpush1.msra.mxu0 0.0
    %1261 = vmatprep.subr.mxu0 0.0
    %1262 = vmatpush1.msra.mxu0 0.0
    %1263 = vmatprep.subr.mxu0 0.0
    %1264 = vmatpush1.msra.mxu0 0.0
    %1265 = vmatprep.subr.mxu0 0.0
    %1266 = vmatpush1.msra.mxu0 0.0
    %1267 = vmatprep.subr.mxu0 0.0
    %1268 = vmatpush1.msra.mxu0 0.0
    %1269 = vmatprep.subr.mxu0 0.0
    %1270 = vmatpush1.msra.mxu0 0.0
    %1271 = vmatprep.subr.mxu0 0.0
    %1272 = vmatpush1.msra.mxu0 0.0
    %1273 = vmatprep.subr.mxu0 0.0
    %1274 = vmatpush1.msra.mxu0 0.0
    %1275 = vmatprep.subr.mxu0 0.0
    %1276 = vmatpush1.msra.mxu0 0.0
    %1277 = vmatprep.subr.mxu0 0.0
    %1278 = vmatpush1.msra.mxu0 0.0
    %1279 = vmatprep.subr.mxu0 0.0
    %1280 = vmatpush1.msra.mxu0 0.0
    %1281 = vmatprep.subr.mxu0 0.0
    %1282 = vmatpush1.msra.mxu0 0.0
    %1283 = vmatprep.subr.mxu0 0.0
    %1284 = vmatpush1.msra.mxu0 0.0
    %1285 = vmatprep.mubr.f32.mxu0 0.0
    %1286 = vmatmul.mubr.f32.gmra.mrb[0].mxu0 %v1216
    %v1287 = vpop.f32.mrb[0].mxu0
    %v1288 = vadd.f32 0.0, %v1287
    %v1289 = vpop.f32.mrb[0].mxu0
    %1290 = vmatprep.mubr.f32.mxu0 0.0
    %1291 = vmatmul.mubr.f32.gmra.mrb[0].mxu0 %v1219
    %v1292 = vpop.f32.mrb[0].mxu0
    %v1293 = vadd.f32 0.0, %v1292
    %v1294 = vpop.f32.mrb[0].mxu0
    %1295 = vdwg.mxu0
    %v1296 = vadd.f32 %v1072, %v1288
    %v1297 = vadd.f32 %v1073, %v1293
    %v1298 = vlaneseq
    %v1299 = vshrl.u32 %v1298, 7
    %v1300 = vsub.s32 7, %v1299
    %v1301 = vrot.slane %v156, %v1300
    %v1302 = vadd.f32 %v1296, %v1301
    %v1303 = vadd.f32 %v1297, %v1301
    %s1304 = scalar_lea.vmem %s3, 64
    %v1305 = vld [vmem:[%s1304] sm:$0xff]
    %v1306 = vld [vmem:[%s1304 + $0x10] sm:$0xff]
    %v1307 = vld [vmem:[%s1304 + $0x20] sm:$0xff]
    %v1308 = vld [vmem:[%s1304 + $0x30] sm:$0xff]
    %v1309 = vld [vmem:[%s1304 + $0x8] sm:$0xff]
    %v1310 = vld [vmem:[%s1304 + $0x18] sm:$0xff]
    %v1311 = vld [vmem:[%s1304 + $0x28] sm:$0xff]
    %v1312 = vld [vmem:[%s1304 + $0x38] sm:$0xff]
    %s1313 = scalar_lea.vmem %s4, 64
    %v1314 = vld [vmem:[%s1313] sm:$0xff]
    %v1315 = vld [vmem:[%s1313 + $0x8] sm:$0xff]
    %v1316 = vld [vmem:[%s1313 + $0x10] sm:$0xff]
    %v1317 = vld [vmem:[%s1313 + $0x18] sm:$0xff]
    %v1318 = vld [vmem:[%s1313 + $0x20] sm:$0xff]
    %v1319 = vld [vmem:[%s1313 + $0x28] sm:$0xff]
    %v1320 = vld [vmem:[%s1313 + $0x30] sm:$0xff]
    %v1321 = vld [vmem:[%s1313 + $0x38] sm:$0xff]
    %s1322 = scalar_lea.vmem %s5, 8
    %v1323 = vld [vmem:[%s1322] sm:$0xff]
    %v1324 = vsel %vm157, %v1302, 0.0
    %1325 = vadd.xlane.f32.xlu0 %v1324
    %v1326 = vpop.xlane.xlu0 %1325
    %v1327 = vsel %vm161, %v1303, 0.0
    %1328 = vadd.xlane.f32.xlu0 %v1327
    %v1329 = vpop.xlane.xlu0 %1328
    %v1330 = vmul.f32 %v1326, %v165
    %v1331 = vmul.f32 %v1329, %v165
    %v1332 = vsub.f32 %v1302, %v1330
    %v1333 = vsub.f32 %v1303, %v1331
    %v1334 = vmul.f32 %v1332, %v1332
    %v1335 = vmul.f32 %v1333, %v1333
    %v1336 = vsel %vm157, %v1334, 0.0
    %1337 = vadd.xlane.f32.xlu0 %v1336
    %v1338 = vpop.xlane.xlu0 %1337
    %v1339 = vsel %vm161, %v1335, 0.0
    %1340 = vadd.xlane.f32.xlu0 %v1339
    %v1341 = vpop.xlane.xlu0 %1340
    %v1342 = vmul.f32 %v1338, %v165
    %v1343 = vmul.f32 %v1341, %v165
    %v1344 = vadd.f32 %v1342, 1e-06
    %v1345 = vadd.f32 %v1343, 1e-06
    %v1346 = vrsqrt.pop %v1344
    %v1347 = vrsqrt.pop %v1345
    %v1348 = vmul.f32 %v1332, %v1346
    %v1349 = vmul.f32 %v1333, %v1347
    %v1350 = vlaneseq
    %v1351 = vshrl.u32 %v1350, 7
    %v1352 = vsub.s32 0, %v1351
    %v1353 = vrot.slane %v1323, %v1352
    %v1354 = vmul.f32 %v1348, %v1353
    %v1355 = vmul.f32 %v1349, %v1353
    %v1356 = vlaneseq
    %v1357 = vshrl.u32 %v1356, 7
    %v1358 = vsub.s32 1, %v1357
    %v1359 = vrot.slane %v1323, %v1358
    %v1360 = vadd.f32 %v1354, %v1359
    %v1361 = vadd.f32 %v1355, %v1359
    %v1362 = vlaneseq
    %v1363 = vshrl.u32 %v1362, 7
    %v1364 = vsub.s32 2, %v1363
    %v1365 = vrot.slane %v1323, %v1364
    %v1367 = vsel %vm157, %v1360, 0
    %v1370 = vsel %vm157, %v1361, 0
    %1372 = vmatprep.subr.mxu0 0.0
    %1373 = vmatpush1.msra.mxu0 %v1305
    %1374 = vmatprep.subr.mxu0 0.0
    %1375 = vmatpush1.msra.mxu0 %v1306
    %1376 = vmatprep.subr.mxu0 0.0
    %1377 = vmatpush1.msra.mxu0 %v1307
    %1378 = vmatprep.subr.mxu0 0.0
    %1379 = vmatpush1.msra.mxu0 %v1308
    %1380 = vmatprep.subr.mxu0 0.0
    %1381 = vmatpush1.msra.mxu0 0.0
    %1382 = vmatprep.subr.mxu0 0.0
    %1383 = vmatpush1.msra.mxu0 0.0
    %1384 = vmatprep.subr.mxu0 0.0
    %1385 = vmatpush1.msra.mxu0 0.0
    %1386 = vmatprep.subr.mxu0 0.0
    %1387 = vmatpush1.msra.mxu0 0.0
    %1388 = vmatprep.subr.mxu0 0.0
    %1389 = vmatpush1.msra.mxu0 0.0
    %1390 = vmatprep.subr.mxu0 0.0
    %1391 = vmatpush1.msra.mxu0 0.0
    %1392 = vmatprep.subr.mxu0 0.0
    %1393 = vmatpush1.msra.mxu0 0.0
    %1394 = vmatprep.subr.mxu0 0.0
    %1395 = vmatpush1.msra.mxu0 0.0
    %1396 = vmatprep.subr.mxu0 0.0
    %1397 = vmatpush1.msra.mxu0 0.0
    %1398 = vmatprep.subr.mxu0 0.0
    %1399 = vmatpush1.msra.mxu0 0.0
    %1400 = vmatprep.subr.mxu0 0.0
    %1401 = vmatpush1.msra.mxu0 0.0
    %1402 = vmatprep.subr.mxu0 0.0
    %1403 = vmatpush1.msra.mxu0 0.0
    %1404 = vmatprep.subr.mxu0 0.0
    %1405 = vmatpush1.msra.mxu0 0.0
    %1406 = vmatprep.subr.mxu0 0.0
    %1407 = vmatpush1.msra.mxu0 0.0
    %1408 = vmatprep.subr.mxu0 0.0
    %1409 = vmatpush1.msra.mxu0 0.0
    %1410 = vmatprep.subr.mxu0 0.0
    %1411 = vmatpush1.msra.mxu0 0.0
    %1412 = vmatprep.subr.mxu0 0.0
    %1413 = vmatpush1.msra.mxu0 0.0
    %1414 = vmatprep.subr.mxu0 0.0
    %1415 = vmatpush1.msra.mxu0 0.0
    %1416 = vmatprep.subr.mxu0 0.0
    %1417 = vmatpush1.msra.mxu0 0.0
    %1418 = vmatprep.subr.mxu0 0.0
    %1419 = vmatpush1.msra.mxu0 0.0
    %1420 = vmatprep.subr.mxu0 0.0
    %1421 = vmatpush1.msra.mxu0 0.0
    %1422 = vmatprep.subr.mxu0 0.0
    %1423 = vmatpush1.msra.mxu0 0.0
    %1424 = vmatprep.subr.mxu0 0.0
    %1425 = vmatpush1.msra.mxu0 0.0
    %1426 = vmatprep.subr.mxu0 0.0
    %1427 = vmatpush1.msra.mxu0 0.0
    %1428 = vmatprep.subr.mxu0 0.0
    %1429 = vmatpush1.msra.mxu0 0.0
    %1430 = vmatprep.subr.mxu0 0.0
    %1431 = vmatpush1.msra.mxu0 0.0
    %1432 = vmatprep.subr.mxu0 0.0
    %1433 = vmatpush1.msra.mxu0 0.0
    %1434 = vmatprep.subr.mxu0 0.0
    %1435 = vmatpush1.msra.mxu0 0.0
    %1436 = vmatprep.mubr.f32.mxu0 0.0
    %1437 = vmatmul.mubr.f32.gmra.mrb[0].mxu0 %v1367
    %v1438 = vpop.f32.mrb[0].mxu0
    %v1439 = vadd.f32 %v1365, %v1438
    %v1440 = vpop.f32.mrb[0].mxu0
    %1441 = vmatprep.mubr.f32.mxu0 0.0
    %1442 = vmatmul.mubr.f32.gmra.mrb[0].mxu0 %v1370
    %v1443 = vpop.f32.mrb[0].mxu0
    %v1444 = vadd.f32 %v1365, %v1443
    %v1445 = vpop.f32.mrb[0].mxu0
    %1446 = vdwg.mxu0
    %1448 = vrot.lane.b32.xlu0 %v1439, 96
    %v1449 = vpop.permute.xlu0 %1448
    %v1450 = vsel %vm286, %v1439, 0
    %v1452 = vsel %vm286, %v1449, 0
    %1454 = vmatprep.subr.mxu0 0.0
    %1455 = vmatpush1.xpose.msra.mxu0 %v1452
    %1456 = vmatprep.subr.mxu0 0.0
    %1457 = vmatpush1.xpose.msra.mxu0 0.0
    %1458 = vmatprep.subr.mxu0 0.0
    %1459 = vmatpush1.xpose.msra.mxu0 0.0
    %1460 = vmatprep.subr.mxu0 0.0
    %1461 = vmatpush1.xpose.msra.mxu0 0.0
    %1462 = vmatprep.subr.mxu0 0.0
    %1463 = vmatpush1.xpose.msra.mxu0 0.0
    %1464 = vmatprep.subr.mxu0 0.0
    %1465 = vmatpush1.xpose.msra.mxu0 0.0
    %1466 = vmatprep.subr.mxu0 0.0
    %1467 = vmatpush1.xpose.msra.mxu0 0.0
    %1468 = vmatprep.subr.mxu0 0.0
    %1469 = vmatpush1.xpose.msra.mxu0 0.0
    %1470 = vmatprep.subr.mxu0 0.0
    %1471 = vmatpush1.xpose.msra.mxu0 0.0
    %1472 = vmatprep.subr.mxu0 0.0
    %1473 = vmatpush1.xpose.msra.mxu0 0.0
    %1474 = vmatprep.subr.mxu0 0.0
    %1475 = vmatpush1.xpose.msra.mxu0 0.0
    %1476 = vmatprep.subr.mxu0 0.0
    %1477 = vmatpush1.xpose.msra.mxu0 0.0
    %1478 = vmatprep.subr.mxu0 0.0
    %1479 = vmatpush1.xpose.msra.mxu0 0.0
    %1480 = vmatprep.subr.mxu0 0.0
    %1481 = vmatpush1.xpose.msra.mxu0 0.0
    %1482 = vmatprep.subr.mxu0 0.0
    %1483 = vmatpush1.xpose.msra.mxu0 0.0
    %1484 = vmatprep.subr.mxu0 0.0
    %1485 = vmatpush1.xpose.msra.mxu0 0.0
    %1486 = vmatprep.subr.mxu0 0.0
    %1487 = vmatpush1.xpose.msra.mxu0 0.0
    %1488 = vmatprep.subr.mxu0 0.0
    %1489 = vmatpush1.xpose.msra.mxu0 0.0
    %1490 = vmatprep.subr.mxu0 0.0
    %1491 = vmatpush1.xpose.msra.mxu0 0.0
    %1492 = vmatprep.subr.mxu0 0.0
    %1493 = vmatpush1.xpose.msra.mxu0 0.0
    %1494 = vmatprep.subr.mxu0 0.0
    %1495 = vmatpush1.xpose.msra.mxu0 0.0
    %1496 = vmatprep.subr.mxu0 0.0
    %1497 = vmatpush1.xpose.msra.mxu0 0.0
    %1498 = vmatprep.subr.mxu0 0.0
    %1499 = vmatpush1.xpose.msra.mxu0 0.0
    %1500 = vmatprep.subr.mxu0 0.0
    %1501 = vmatpush1.xpose.msra.mxu0 0.0
    %1502 = vmatprep.subr.mxu0 0.0
    %1503 = vmatpush1.xpose.msra.mxu0 0.0
    %1504 = vmatprep.subr.mxu0 0.0
    %1505 = vmatpush1.xpose.msra.mxu0 0.0
    %1506 = vmatprep.subr.mxu0 0.0
    %1507 = vmatpush1.xpose.msra.mxu0 0.0
    %1508 = vmatprep.subr.mxu0 0.0
    %1509 = vmatpush1.xpose.msra.mxu0 0.0
    %1510 = vmatprep.subr.mxu0 0.0
    %1511 = vmatpush1.xpose.msra.mxu0 0.0
    %1512 = vmatprep.subr.mxu0 0.0
    %1513 = vmatpush1.xpose.msra.mxu0 0.0
    %1514 = vmatprep.subr.mxu0 0.0
    %1515 = vmatpush1.xpose.msra.mxu0 0.0
    %1516 = vmatprep.subr.mxu0 0.0
    %1517 = vmatpush1.xpose.msra.mxu0 0.0
    %1518 = vmatprep.mubr.f32.mxu0 0.0
    %1519 = vmatmul.mubr.f32.gmra.mrb[0].mxu0 %v1450
    %v1520 = vpop.f32.mrb[0].mxu0
    %v1521 = vadd.f32 0.0, %v1520
    %v1522 = vpop.f32.mrb[0].mxu0
    %1523 = vdwg.mxu0
    %v1524 = vmul.f32 %v1521, 0.25
    %v1525 = vsel %vm362, %v1524, -inf
    %1526 = vmax.xlane.f32.xlu0 %v1525
    %v1527 = vpop.xlane.xlu0 %1526
    %v1528 = vsub.f32 %v1524, %v1527
    %v1529 = vmul.f32 %v1528, 1.442695
    %v1530 = vpow.pop %v1529
    %v1531 = vsel %vm362, %v1530, 0.0
    %1532 = vadd.xlane.f32.xlu0 %v1531
    %v1533 = vpop.xlane.xlu0 %1532
    %v1534 = vrcp.pop %v1533
    %v1535 = vmul.f32 %v1530, %v1534
    %1536 = vrot.lane.b32.xlu0 %v1439, 64
    %v1537 = vpop.permute.xlu0 %1536
    %v1539 = vsel %vm376, %v1535, 0
    %v1541 = vsel %vm56, %v1537, 0
    %1543 = vmatprep.subr.mxu0 0.0
    %1544 = vmatpush1.msra.mxu0 %v1541
    %1545 = vmatprep.subr.mxu0 0.0
    %1546 = vmatpush1.msra.mxu0 0.0
    %1547 = vmatprep.subr.mxu0 0.0
    %1548 = vmatpush1.msra.mxu0 0.0
    %1549 = vmatprep.subr.mxu0 0.0
    %1550 = vmatpush1.msra.mxu0 0.0
    %1551 = vmatprep.subr.mxu0 0.0
    %1552 = vmatpush1.msra.mxu0 0.0
    %1553 = vmatprep.subr.mxu0 0.0
    %1554 = vmatpush1.msra.mxu0 0.0
    %1555 = vmatprep.subr.mxu0 0.0
    %1556 = vmatpush1.msra.mxu0 0.0
    %1557 = vmatprep.subr.mxu0 0.0
    %1558 = vmatpush1.msra.mxu0 0.0
    %1559 = vmatprep.subr.mxu0 0.0
    %1560 = vmatpush1.msra.mxu0 0.0
    %1561 = vmatprep.subr.mxu0 0.0
    %1562 = vmatpush1.msra.mxu0 0.0
    %1563 = vmatprep.subr.mxu0 0.0
    %1564 = vmatpush1.msra.mxu0 0.0
    %1565 = vmatprep.subr.mxu0 0.0
    %1566 = vmatpush1.msra.mxu0 0.0
    %1567 = vmatprep.subr.mxu0 0.0
    %1568 = vmatpush1.msra.mxu0 0.0
    %1569 = vmatprep.subr.mxu0 0.0
    %1570 = vmatpush1.msra.mxu0 0.0
    %1571 = vmatprep.subr.mxu0 0.0
    %1572 = vmatpush1.msra.mxu0 0.0
    %1573 = vmatprep.subr.mxu0 0.0
    %1574 = vmatpush1.msra.mxu0 0.0
    %1575 = vmatprep.subr.mxu0 0.0
    %1576 = vmatpush1.msra.mxu0 0.0
    %1577 = vmatprep.subr.mxu0 0.0
    %1578 = vmatpush1.msra.mxu0 0.0
    %1579 = vmatprep.subr.mxu0 0.0
    %1580 = vmatpush1.msra.mxu0 0.0
    %1581 = vmatprep.subr.mxu0 0.0
    %1582 = vmatpush1.msra.mxu0 0.0
    %1583 = vmatprep.subr.mxu0 0.0
    %1584 = vmatpush1.msra.mxu0 0.0
    %1585 = vmatprep.subr.mxu0 0.0
    %1586 = vmatpush1.msra.mxu0 0.0
    %1587 = vmatprep.subr.mxu0 0.0
    %1588 = vmatpush1.msra.mxu0 0.0
    %1589 = vmatprep.subr.mxu0 0.0
    %1590 = vmatpush1.msra.mxu0 0.0
    %1591 = vmatprep.subr.mxu0 0.0
    %1592 = vmatpush1.msra.mxu0 0.0
    %1593 = vmatprep.subr.mxu0 0.0
    %1594 = vmatpush1.msra.mxu0 0.0
    %1595 = vmatprep.subr.mxu0 0.0
    %1596 = vmatpush1.msra.mxu0 0.0
    %1597 = vmatprep.subr.mxu0 0.0
    %1598 = vmatpush1.msra.mxu0 0.0
    %1599 = vmatprep.subr.mxu0 0.0
    %1600 = vmatpush1.msra.mxu0 0.0
    %1601 = vmatprep.subr.mxu0 0.0
    %1602 = vmatpush1.msra.mxu0 0.0
    %1603 = vmatprep.subr.mxu0 0.0
    %1604 = vmatpush1.msra.mxu0 0.0
    %1605 = vmatprep.subr.mxu0 0.0
    %1606 = vmatpush1.msra.mxu0 0.0
    %1607 = vmatprep.mubr.f32.mxu0 0.0
    %1608 = vmatmul.mubr.f32.gmra.mrb[0].mxu0 %v1539
    %v1609 = vpop.f32.mrb[0].mxu0
    %v1610 = vadd.f32 0.0, %v1609
    %v1611 = vpop.f32.mrb[0].mxu0
    %1612 = vdwg.mxu0
    %1613 = vrot.lane.b32.xlu0 %v1439, 112
    %v1614 = vpop.permute.xlu0 %1613
    %1615 = vrot.lane.b32.xlu0 %v1439, 80
    %v1616 = vpop.permute.xlu0 %1615
    %v1617 = vsel %vm286, %v1614, 0
    %v1619 = vsel %vm286, %v1616, 0
    %1621 = vmatprep.subr.mxu0 0.0
    %1622 = vmatpush1.xpose.msra.mxu0 %v1619
    %1623 = vmatprep.subr.mxu0 0.0
    %1624 = vmatpush1.xpose.msra.mxu0 0.0
    %1625 = vmatprep.subr.mxu0 0.0
    %1626 = vmatpush1.xpose.msra.mxu0 0.0
    %1627 = vmatprep.subr.mxu0 0.0
    %1628 = vmatpush1.xpose.msra.mxu0 0.0
    %1629 = vmatprep.subr.mxu0 0.0
    %1630 = vmatpush1.xpose.msra.mxu0 0.0
    %1631 = vmatprep.subr.mxu0 0.0
    %1632 = vmatpush1.xpose.msra.mxu0 0.0
    %1633 = vmatprep.subr.mxu0 0.0
    %1634 = vmatpush1.xpose.msra.mxu0 0.0
    %1635 = vmatprep.subr.mxu0 0.0
    %1636 = vmatpush1.xpose.msra.mxu0 0.0
    %1637 = vmatprep.subr.mxu0 0.0
    %1638 = vmatpush1.xpose.msra.mxu0 0.0
    %1639 = vmatprep.subr.mxu0 0.0
    %1640 = vmatpush1.xpose.msra.mxu0 0.0
    %1641 = vmatprep.subr.mxu0 0.0
    %1642 = vmatpush1.xpose.msra.mxu0 0.0
    %1643 = vmatprep.subr.mxu0 0.0
    %1644 = vmatpush1.xpose.msra.mxu0 0.0
    %1645 = vmatprep.subr.mxu0 0.0
    %1646 = vmatpush1.xpose.msra.mxu0 0.0
    %1647 = vmatprep.subr.mxu0 0.0
    %1648 = vmatpush1.xpose.msra.mxu0 0.0
    %1649 = vmatprep.subr.mxu0 0.0
    %1650 = vmatpush1.xpose.msra.mxu0 0.0
    %1651 = vmatprep.subr.mxu0 0.0
    %1652 = vmatpush1.xpose.msra.mxu0 0.0
    %1653 = vmatprep.subr.mxu0 0.0
    %1654 = vmatpush1.xpose.msra.mxu0 0.0
    %1655 = vmatprep.subr.mxu0 0.0
    %1656 = vmatpush1.xpose.msra.mxu0 0.0
    %1657 = vmatprep.subr.mxu0 0.0
    %1658 = vmatpush1.xpose.msra.mxu0 0.0
    %1659 = vmatprep.subr.mxu0 0.0
    %1660 = vmatpush1.xpose.msra.mxu0 0.0
    %1661 = vmatprep.subr.mxu0 0.0
    %1662 = vmatpush1.xpose.msra.mxu0 0.0
    %1663 = vmatprep.subr.mxu0 0.0
    %1664 = vmatpush1.xpose.msra.mxu0 0.0
    %1665 = vmatprep.subr.mxu0 0.0
    %1666 = vmatpush1.xpose.msra.mxu0 0.0
    %1667 = vmatprep.subr.mxu0 0.0
    %1668 = vmatpush1.xpose.msra.mxu0 0.0
    %1669 = vmatprep.subr.mxu0 0.0
    %1670 = vmatpush1.xpose.msra.mxu0 0.0
    %1671 = vmatprep.subr.mxu0 0.0
    %1672 = vmatpush1.xpose.msra.mxu0 0.0
    %1673 = vmatprep.subr.mxu0 0.0
    %1674 = vmatpush1.xpose.msra.mxu0 0.0
    %1675 = vmatprep.subr.mxu0 0.0
    %1676 = vmatpush1.xpose.msra.mxu0 0.0
    %1677 = vmatprep.subr.mxu0 0.0
    %1678 = vmatpush1.xpose.msra.mxu0 0.0
    %1679 = vmatprep.subr.mxu0 0.0
    %1680 = vmatpush1.xpose.msra.mxu0 0.0
    %1681 = vmatprep.subr.mxu0 0.0
    %1682 = vmatpush1.xpose.msra.mxu0 0.0
    %1683 = vmatprep.subr.mxu0 0.0
    %1684 = vmatpush1.xpose.msra.mxu0 0.0
    %1685 = vmatprep.mubr.f32.mxu0 0.0
    %1686 = vmatmul.mubr.f32.gmra.mrb[0].mxu0 %v1617
    %v1687 = vpop.f32.mrb[0].mxu0
    %v1688 = vadd.f32 0.0, %v1687
    %v1689 = vpop.f32.mrb[0].mxu0
    %1690 = vdwg.mxu0
    %v1691 = vmul.f32 %v1688, 0.25
    %v1692 = vsel %vm362, %v1691, -inf
    %1693 = vmax.xlane.f32.xlu0 %v1692
    %v1694 = vpop.xlane.xlu0 %1693
    %v1695 = vsub.f32 %v1691, %v1694
    %v1696 = vmul.f32 %v1695, 1.442695
    %v1697 = vpow.pop %v1696
    %v1698 = vsel %vm362, %v1697, 0.0
    %1699 = vadd.xlane.f32.xlu0 %v1698
    %v1700 = vpop.xlane.xlu0 %1699
    %v1701 = vrcp.pop %v1700
    %v1702 = vmul.f32 %v1697, %v1701
    %1703 = vrot.lane.b32.xlu0 %v1439, 48
    %v1704 = vpop.permute.xlu0 %1703
    %v1706 = vsel %vm376, %v1702, 0
    %v1708 = vsel %vm56, %v1704, 0
    %1710 = vmatprep.subr.mxu0 0.0
    %1711 = vmatpush1.msra.mxu0 %v1708
    %1712 = vmatprep.subr.mxu0 0.0
    %1713 = vmatpush1.msra.mxu0 0.0
    %1714 = vmatprep.subr.mxu0 0.0
    %1715 = vmatpush1.msra.mxu0 0.0
    %1716 = vmatprep.subr.mxu0 0.0
    %1717 = vmatpush1.msra.mxu0 0.0
    %1718 = vmatprep.subr.mxu0 0.0
    %1719 = vmatpush1.msra.mxu0 0.0
    %1720 = vmatprep.subr.mxu0 0.0
    %1721 = vmatpush1.msra.mxu0 0.0
    %1722 = vmatprep.subr.mxu0 0.0
    %1723 = vmatpush1.msra.mxu0 0.0
    %1724 = vmatprep.subr.mxu0 0.0
    %1725 = vmatpush1.msra.mxu0 0.0
    %1726 = vmatprep.subr.mxu0 0.0
    %1727 = vmatpush1.msra.mxu0 0.0
    %1728 = vmatprep.subr.mxu0 0.0
    %1729 = vmatpush1.msra.mxu0 0.0
    %1730 = vmatprep.subr.mxu0 0.0
    %1731 = vmatpush1.msra.mxu0 0.0
    %1732 = vmatprep.subr.mxu0 0.0
    %1733 = vmatpush1.msra.mxu0 0.0
    %1734 = vmatprep.subr.mxu0 0.0
    %1735 = vmatpush1.msra.mxu0 0.0
    %1736 = vmatprep.subr.mxu0 0.0
    %1737 = vmatpush1.msra.mxu0 0.0
    %1738 = vmatprep.subr.mxu0 0.0
    %1739 = vmatpush1.msra.mxu0 0.0
    %1740 = vmatprep.subr.mxu0 0.0
    %1741 = vmatpush1.msra.mxu0 0.0
    %1742 = vmatprep.subr.mxu0 0.0
    %1743 = vmatpush1.msra.mxu0 0.0
    %1744 = vmatprep.subr.mxu0 0.0
    %1745 = vmatpush1.msra.mxu0 0.0
    %1746 = vmatprep.subr.mxu0 0.0
    %1747 = vmatpush1.msra.mxu0 0.0
    %1748 = vmatprep.subr.mxu0 0.0
    %1749 = vmatpush1.msra.mxu0 0.0
    %1750 = vmatprep.subr.mxu0 0.0
    %1751 = vmatpush1.msra.mxu0 0.0
    %1752 = vmatprep.subr.mxu0 0.0
    %1753 = vmatpush1.msra.mxu0 0.0
    %1754 = vmatprep.subr.mxu0 0.0
    %1755 = vmatpush1.msra.mxu0 0.0
    %1756 = vmatprep.subr.mxu0 0.0
    %1757 = vmatpush1.msra.mxu0 0.0
    %1758 = vmatprep.subr.mxu0 0.0
    %1759 = vmatpush1.msra.mxu0 0.0
    %1760 = vmatprep.subr.mxu0 0.0
    %1761 = vmatpush1.msra.mxu0 0.0
    %1762 = vmatprep.subr.mxu0 0.0
    %1763 = vmatpush1.msra.mxu0 0.0
    %1764 = vmatprep.subr.mxu0 0.0
    %1765 = vmatpush1.msra.mxu0 0.0
    %1766 = vmatprep.subr.mxu0 0.0
    %1767 = vmatpush1.msra.mxu0 0.0
    %1768 = vmatprep.subr.mxu0 0.0
    %1769 = vmatpush1.msra.mxu0 0.0
    %1770 = vmatprep.subr.mxu0 0.0
    %1771 = vmatpush1.msra.mxu0 0.0
    %1772 = vmatprep.subr.mxu0 0.0
    %1773 = vmatpush1.msra.mxu0 0.0
    %1774 = vmatprep.mubr.f32.mxu0 0.0
    %1775 = vmatmul.mubr.f32.gmra.mrb[0].mxu0 %v1706
    %v1776 = vpop.f32.mrb[0].mxu0
    %v1777 = vadd.f32 0.0, %v1776
    %v1778 = vpop.f32.mrb[0].mxu0
    %1779 = vdwg.mxu0
    %1781 = vrot.lane.b32.xlu0 %v1777, 16
    %v1782 = vpop.permute.xlu0 %1781
    %v1784 = vsel %vm286, %v1610, %v1782
    %v1786 = vrot.slane %v1439, 5
    %v1787 = vrot.slane %v1444, 5
    %v1788 = vsel %vm625, %v1786, %v1787
    %1789 = vrot.lane.b32.xlu0 %v1788, 96
    %v1790 = vpop.permute.xlu0 %1789
    %v1791 = vsel %vm286, %v1788, 0
    %v1793 = vsel %vm286, %v1790, 0
    %1795 = vmatprep.subr.mxu0 0.0
    %1796 = vmatpush1.xpose.msra.mxu0 %v1793
    %1797 = vmatprep.subr.mxu0 0.0
    %1798 = vmatpush1.xpose.msra.mxu0 0.0
    %1799 = vmatprep.subr.mxu0 0.0
    %1800 = vmatpush1.xpose.msra.mxu0 0.0
    %1801 = vmatprep.subr.mxu0 0.0
    %1802 = vmatpush1.xpose.msra.mxu0 0.0
    %1803 = vmatprep.subr.mxu0 0.0
    %1804 = vmatpush1.xpose.msra.mxu0 0.0
    %1805 = vmatprep.subr.mxu0 0.0
    %1806 = vmatpush1.xpose.msra.mxu0 0.0
    %1807 = vmatprep.subr.mxu0 0.0
    %1808 = vmatpush1.xpose.msra.mxu0 0.0
    %1809 = vmatprep.subr.mxu0 0.0
    %1810 = vmatpush1.xpose.msra.mxu0 0.0
    %1811 = vmatprep.subr.mxu0 0.0
    %1812 = vmatpush1.xpose.msra.mxu0 0.0
    %1813 = vmatprep.subr.mxu0 0.0
    %1814 = vmatpush1.xpose.msra.mxu0 0.0
    %1815 = vmatprep.subr.mxu0 0.0
    %1816 = vmatpush1.xpose.msra.mxu0 0.0
    %1817 = vmatprep.subr.mxu0 0.0
    %1818 = vmatpush1.xpose.msra.mxu0 0.0
    %1819 = vmatprep.subr.mxu0 0.0
    %1820 = vmatpush1.xpose.msra.mxu0 0.0
    %1821 = vmatprep.subr.mxu0 0.0
    %1822 = vmatpush1.xpose.msra.mxu0 0.0
    %1823 = vmatprep.subr.mxu0 0.0
    %1824 = vmatpush1.xpose.msra.mxu0 0.0
    %1825 = vmatprep.subr.mxu0 0.0
    %1826 = vmatpush1.xpose.msra.mxu0 0.0
    %1827 = vmatprep.subr.mxu0 0.0
    %1828 = vmatpush1.xpose.msra.mxu0 0.0
    %1829 = vmatprep.subr.mxu0 0.0
    %1830 = vmatpush1.xpose.msra.mxu0 0.0
    %1831 = vmatprep.subr.mxu0 0.0
    %1832 = vmatpush1.xpose.msra.mxu0 0.0
    %1833 = vmatprep.subr.mxu0 0.0
    %1834 = vmatpush1.xpose.msra.mxu0 0.0
    %1835 = vmatprep.subr.mxu0 0.0
    %1836 = vmatpush1.xpose.msra.mxu0 0.0
    %1837 = vmatprep.subr.mxu0 0.0
    %1838 = vmatpush1.xpose.msra.mxu0 0.0
    %1839 = vmatprep.subr.mxu0 0.0
    %1840 = vmatpush1.xpose.msra.mxu0 0.0
    %1841 = vmatprep.subr.mxu0 0.0
    %1842 = vmatpush1.xpose.msra.mxu0 0.0
    %1843 = vmatprep.subr.mxu0 0.0
    %1844 = vmatpush1.xpose.msra.mxu0 0.0
    %1845 = vmatprep.subr.mxu0 0.0
    %1846 = vmatpush1.xpose.msra.mxu0 0.0
    %1847 = vmatprep.subr.mxu0 0.0
    %1848 = vmatpush1.xpose.msra.mxu0 0.0
    %1849 = vmatprep.subr.mxu0 0.0
    %1850 = vmatpush1.xpose.msra.mxu0 0.0
    %1851 = vmatprep.subr.mxu0 0.0
    %1852 = vmatpush1.xpose.msra.mxu0 0.0
    %1853 = vmatprep.subr.mxu0 0.0
    %1854 = vmatpush1.xpose.msra.mxu0 0.0
    %1855 = vmatprep.subr.mxu0 0.0
    %1856 = vmatpush1.xpose.msra.mxu0 0.0
    %1857 = vmatprep.subr.mxu0 0.0
    %1858 = vmatpush1.xpose.msra.mxu0 0.0
    %1859 = vmatprep.mubr.f32.mxu0 0.0
    %1860 = vmatmul.mubr.f32.gmra.mrb[0].mxu0 %v1791
    %v1861 = vpop.f32.mrb[0].mxu0
    %v1862 = vadd.f32 0.0, %v1861
    %v1863 = vpop.f32.mrb[0].mxu0
    %1864 = vdwg.mxu0
    %v1865 = vmul.f32 %v1862, 0.25
    %v1866 = vsel %vm362, %v1865, -inf
    %1867 = vmax.xlane.f32.xlu0 %v1866
    %v1868 = vpop.xlane.xlu0 %1867
    %v1869 = vsub.f32 %v1865, %v1868
    %v1870 = vmul.f32 %v1869, 1.442695
    %v1871 = vpow.pop %v1870
    %v1872 = vsel %vm362, %v1871, 0.0
    %1873 = vadd.xlane.f32.xlu0 %v1872
    %v1874 = vpop.xlane.xlu0 %1873
    %v1875 = vrcp.pop %v1874
    %v1876 = vmul.f32 %v1871, %v1875
    %1877 = vrot.lane.b32.xlu0 %v1788, 64
    %v1878 = vpop.permute.xlu0 %1877
    %v1880 = vsel %vm376, %v1876, 0
    %v1882 = vsel %vm56, %v1878, 0
    %1884 = vmatprep.subr.mxu0 0.0
    %1885 = vmatpush1.msra.mxu0 %v1882
    %1886 = vmatprep.subr.mxu0 0.0
    %1887 = vmatpush1.msra.mxu0 0.0
    %1888 = vmatprep.subr.mxu0 0.0
    %1889 = vmatpush1.msra.mxu0 0.0
    %1890 = vmatprep.subr.mxu0 0.0
    %1891 = vmatpush1.msra.mxu0 0.0
    %1892 = vmatprep.subr.mxu0 0.0
    %1893 = vmatpush1.msra.mxu0 0.0
    %1894 = vmatprep.subr.mxu0 0.0
    %1895 = vmatpush1.msra.mxu0 0.0
    %1896 = vmatprep.subr.mxu0 0.0
    %1897 = vmatpush1.msra.mxu0 0.0
    %1898 = vmatprep.subr.mxu0 0.0
    %1899 = vmatpush1.msra.mxu0 0.0
    %1900 = vmatprep.subr.mxu0 0.0
    %1901 = vmatpush1.msra.mxu0 0.0
    %1902 = vmatprep.subr.mxu0 0.0
    %1903 = vmatpush1.msra.mxu0 0.0
    %1904 = vmatprep.subr.mxu0 0.0
    %1905 = vmatpush1.msra.mxu0 0.0
    %1906 = vmatprep.subr.mxu0 0.0
    %1907 = vmatpush1.msra.mxu0 0.0
    %1908 = vmatprep.subr.mxu0 0.0
    %1909 = vmatpush1.msra.mxu0 0.0
    %1910 = vmatprep.subr.mxu0 0.0
    %1911 = vmatpush1.msra.mxu0 0.0
    %1912 = vmatprep.subr.mxu0 0.0
    %1913 = vmatpush1.msra.mxu0 0.0
    %1914 = vmatprep.subr.mxu0 0.0
    %1915 = vmatpush1.msra.mxu0 0.0
    %1916 = vmatprep.subr.mxu0 0.0
    %1917 = vmatpush1.msra.mxu0 0.0
    %1918 = vmatprep.subr.mxu0 0.0
    %1919 = vmatpush1.msra.mxu0 0.0
    %1920 = vmatprep.subr.mxu0 0.0
    %1921 = vmatpush1.msra.mxu0 0.0
    %1922 = vmatprep.subr.mxu0 0.0
    %1923 = vmatpush1.msra.mxu0 0.0
    %1924 = vmatprep.subr.mxu0 0.0
    %1925 = vmatpush1.msra.mxu0 0.0
    %1926 = vmatprep.subr.mxu0 0.0
    %1927 = vmatpush1.msra.mxu0 0.0
    %1928 = vmatprep.subr.mxu0 0.0
    %1929 = vmatpush1.msra.mxu0 0.0
    %1930 = vmatprep.subr.mxu0 0.0
    %1931 = vmatpush1.msra.mxu0 0.0
    %1932 = vmatprep.subr.mxu0 0.0
    %1933 = vmatpush1.msra.mxu0 0.0
    %1934 = vmatprep.subr.mxu0 0.0
    %1935 = vmatpush1.msra.mxu0 0.0
    %1936 = vmatprep.subr.mxu0 0.0
    %1937 = vmatpush1.msra.mxu0 0.0
    %1938 = vmatprep.subr.mxu0 0.0
    %1939 = vmatpush1.msra.mxu0 0.0
    %1940 = vmatprep.subr.mxu0 0.0
    %1941 = vmatpush1.msra.mxu0 0.0
    %1942 = vmatprep.subr.mxu0 0.0
    %1943 = vmatpush1.msra.mxu0 0.0
    %1944 = vmatprep.subr.mxu0 0.0
    %1945 = vmatpush1.msra.mxu0 0.0
    %1946 = vmatprep.subr.mxu0 0.0
    %1947 = vmatpush1.msra.mxu0 0.0
    %1948 = vmatprep.mubr.f32.mxu0 0.0
    %1949 = vmatmul.mubr.f32.gmra.mrb[0].mxu0 %v1880
    %v1950 = vpop.f32.mrb[0].mxu0
    %v1951 = vadd.f32 0.0, %v1950
    %v1952 = vpop.f32.mrb[0].mxu0
    %1953 = vdwg.mxu0
    %1954 = vrot.lane.b32.xlu0 %v1788, 112
    %v1955 = vpop.permute.xlu0 %1954
    %1956 = vrot.lane.b32.xlu0 %v1788, 80
    %v1957 = vpop.permute.xlu0 %1956
    %v1958 = vsel %vm286, %v1955, 0
    %v1960 = vsel %vm286, %v1957, 0
    %1962 = vmatprep.subr.mxu0 0.0
    %1963 = vmatpush1.xpose.msra.mxu0 %v1960
    %1964 = vmatprep.subr.mxu0 0.0
    %1965 = vmatpush1.xpose.msra.mxu0 0.0
    %1966 = vmatprep.subr.mxu0 0.0
    %1967 = vmatpush1.xpose.msra.mxu0 0.0
    %1968 = vmatprep.subr.mxu0 0.0
    %1969 = vmatpush1.xpose.msra.mxu0 0.0
    %1970 = vmatprep.subr.mxu0 0.0
    %1971 = vmatpush1.xpose.msra.mxu0 0.0
    %1972 = vmatprep.subr.mxu0 0.0
    %1973 = vmatpush1.xpose.msra.mxu0 0.0
    %1974 = vmatprep.subr.mxu0 0.0
    %1975 = vmatpush1.xpose.msra.mxu0 0.0
    %1976 = vmatprep.subr.mxu0 0.0
    %1977 = vmatpush1.xpose.msra.mxu0 0.0
    %1978 = vmatprep.subr.mxu0 0.0
    %1979 = vmatpush1.xpose.msra.mxu0 0.0
    %1980 = vmatprep.subr.mxu0 0.0
    %1981 = vmatpush1.xpose.msra.mxu0 0.0
    %1982 = vmatprep.subr.mxu0 0.0
    %1983 = vmatpush1.xpose.msra.mxu0 0.0
    %1984 = vmatprep.subr.mxu0 0.0
    %1985 = vmatpush1.xpose.msra.mxu0 0.0
    %1986 = vmatprep.subr.mxu0 0.0
    %1987 = vmatpush1.xpose.msra.mxu0 0.0
    %1988 = vmatprep.subr.mxu0 0.0
    %1989 = vmatpush1.xpose.msra.mxu0 0.0
    %1990 = vmatprep.subr.mxu0 0.0
    %1991 = vmatpush1.xpose.msra.mxu0 0.0
    %1992 = vmatprep.subr.mxu0 0.0
    %1993 = vmatpush1.xpose.msra.mxu0 0.0
    %1994 = vmatprep.subr.mxu0 0.0
    %1995 = vmatpush1.xpose.msra.mxu0 0.0
    %1996 = vmatprep.subr.mxu0 0.0
    %1997 = vmatpush1.xpose.msra.mxu0 0.0
    %1998 = vmatprep.subr.mxu0 0.0
    %1999 = vmatpush1.xpose.msra.mxu0 0.0
    %2000 = vmatprep.subr.mxu0 0.0
    %2001 = vmatpush1.xpose.msra.mxu0 0.0
    %2002 = vmatprep.subr.mxu0 0.0
    %2003 = vmatpush1.xpose.msra.mxu0 0.0
    %2004 = vmatprep.subr.mxu0 0.0
    %2005 = vmatpush1.xpose.msra.mxu0 0.0
    %2006 = vmatprep.subr.mxu0 0.0
    %2007 = vmatpush1.xpose.msra.mxu0 0.0
    %2008 = vmatprep.subr.mxu0 0.0
    %2009 = vmatpush1.xpose.msra.mxu0 0.0
    %2010 = vmatprep.subr.mxu0 0.0
    %2011 = vmatpush1.xpose.msra.mxu0 0.0
    %2012 = vmatprep.subr.mxu0 0.0
    %2013 = vmatpush1.xpose.msra.mxu0 0.0
    %2014 = vmatprep.subr.mxu0 0.0
    %2015 = vmatpush1.xpose.msra.mxu0 0.0
    %2016 = vmatprep.subr.mxu0 0.0
    %2017 = vmatpush1.xpose.msra.mxu0 0.0
    %2018 = vmatprep.subr.mxu0 0.0
    %2019 = vmatpush1.xpose.msra.mxu0 0.0
    %2020 = vmatprep.subr.mxu0 0.0
    %2021 = vmatpush1.xpose.msra.mxu0 0.0
    %2022 = vmatprep.subr.mxu0 0.0
    %2023 = vmatpush1.xpose.msra.mxu0 0.0
    %2024 = vmatprep.subr.mxu0 0.0
    %2025 = vmatpush1.xpose.msra.mxu0 0.0
    %2026 = vmatprep.mubr.f32.mxu0 0.0
    %2027 = vmatmul.mubr.f32.gmra.mrb[0].mxu0 %v1958
    %v2028 = vpop.f32.mrb[0].mxu0
    %v2029 = vadd.f32 0.0, %v2028
    %v2030 = vpop.f32.mrb[0].mxu0
    %2031 = vdwg.mxu0
    %v2032 = vmul.f32 %v2029, 0.25
    %v2033 = vsel %vm362, %v2032, -inf
    %2034 = vmax.xlane.f32.xlu0 %v2033
    %v2035 = vpop.xlane.xlu0 %2034
    %v2036 = vsub.f32 %v2032, %v2035
    %v2037 = vmul.f32 %v2036, 1.442695
    %v2038 = vpow.pop %v2037
    %v2039 = vsel %vm362, %v2038, 0.0
    %2040 = vadd.xlane.f32.xlu0 %v2039
    %v2041 = vpop.xlane.xlu0 %2040
    %v2042 = vrcp.pop %v2041
    %v2043 = vmul.f32 %v2038, %v2042
    %2044 = vrot.lane.b32.xlu0 %v1788, 48
    %v2045 = vpop.permute.xlu0 %2044
    %v2047 = vsel %vm376, %v2043, 0
    %v2049 = vsel %vm56, %v2045, 0
    %2051 = vmatprep.subr.mxu0 0.0
    %2052 = vmatpush1.msra.mxu0 %v2049
    %2053 = vmatprep.subr.mxu0 0.0
    %2054 = vmatpush1.msra.mxu0 0.0
    %2055 = vmatprep.subr.mxu0 0.0
    %2056 = vmatpush1.msra.mxu0 0.0
    %2057 = vmatprep.subr.mxu0 0.0
    %2058 = vmatpush1.msra.mxu0 0.0
    %2059 = vmatprep.subr.mxu0 0.0
    %2060 = vmatpush1.msra.mxu0 0.0
    %2061 = vmatprep.subr.mxu0 0.0
    %2062 = vmatpush1.msra.mxu0 0.0
    %2063 = vmatprep.subr.mxu0 0.0
    %2064 = vmatpush1.msra.mxu0 0.0
    %2065 = vmatprep.subr.mxu0 0.0
    %2066 = vmatpush1.msra.mxu0 0.0
    %2067 = vmatprep.subr.mxu0 0.0
    %2068 = vmatpush1.msra.mxu0 0.0
    %2069 = vmatprep.subr.mxu0 0.0
    %2070 = vmatpush1.msra.mxu0 0.0
    %2071 = vmatprep.subr.mxu0 0.0
    %2072 = vmatpush1.msra.mxu0 0.0
    %2073 = vmatprep.subr.mxu0 0.0
    %2074 = vmatpush1.msra.mxu0 0.0
    %2075 = vmatprep.subr.mxu0 0.0
    %2076 = vmatpush1.msra.mxu0 0.0
    %2077 = vmatprep.subr.mxu0 0.0
    %2078 = vmatpush1.msra.mxu0 0.0
    %2079 = vmatprep.subr.mxu0 0.0
    %2080 = vmatpush1.msra.mxu0 0.0
    %2081 = vmatprep.subr.mxu0 0.0
    %2082 = vmatpush1.msra.mxu0 0.0
    %2083 = vmatprep.subr.mxu0 0.0
    %2084 = vmatpush1.msra.mxu0 0.0
    %2085 = vmatprep.subr.mxu0 0.0
    %2086 = vmatpush1.msra.mxu0 0.0
    %2087 = vmatprep.subr.mxu0 0.0
    %2088 = vmatpush1.msra.mxu0 0.0
    %2089 = vmatprep.subr.mxu0 0.0
    %2090 = vmatpush1.msra.mxu0 0.0
    %2091 = vmatprep.subr.mxu0 0.0
    %2092 = vmatpush1.msra.mxu0 0.0
    %2093 = vmatprep.subr.mxu0 0.0
    %2094 = vmatpush1.msra.mxu0 0.0
    %2095 = vmatprep.subr.mxu0 0.0
    %2096 = vmatpush1.msra.mxu0 0.0
    %2097 = vmatprep.subr.mxu0 0.0
    %2098 = vmatpush1.msra.mxu0 0.0
    %2099 = vmatprep.subr.mxu0 0.0
    %2100 = vmatpush1.msra.mxu0 0.0
    %2101 = vmatprep.subr.mxu0 0.0
    %2102 = vmatpush1.msra.mxu0 0.0
    %2103 = vmatprep.subr.mxu0 0.0
    %2104 = vmatpush1.msra.mxu0 0.0
    %2105 = vmatprep.subr.mxu0 0.0
    %2106 = vmatpush1.msra.mxu0 0.0
    %2107 = vmatprep.subr.mxu0 0.0
    %2108 = vmatpush1.msra.mxu0 0.0
    %2109 = vmatprep.subr.mxu0 0.0
    %2110 = vmatpush1.msra.mxu0 0.0
    %2111 = vmatprep.subr.mxu0 0.0
    %2112 = vmatpush1.msra.mxu0 0.0
    %2113 = vmatprep.subr.mxu0 0.0
    %2114 = vmatpush1.msra.mxu0 0.0
    %2115 = vmatprep.mubr.f32.mxu0 0.0
    %2116 = vmatmul.mubr.f32.gmra.mrb[0].mxu0 %v2047
    %v2117 = vpop.f32.mrb[0].mxu0
    %v2118 = vadd.f32 0.0, %v2117
    %v2119 = vpop.f32.mrb[0].mxu0
    %2120 = vdwg.mxu0
    %2122 = vrot.lane.b32.xlu0 %v2118, 16
    %v2123 = vpop.permute.xlu0 %2122
    %v2125 = vsel %vm286, %v1951, %v2123
    %v2127 = vrot.slane %v2125, 3
    %v2129 = vsel %vm56, %v1784, %v2127
    %2134 = vrot.lane.b32.xlu0 %v1305, 32
    %v2135 = vpop.permute.xlu0 %2134
    %2136 = vrot.lane.b32.xlu0 %v1306, 32
    %v2137 = vpop.permute.xlu0 %2136
    %2138 = vrot.lane.b32.xlu0 %v1307, 32
    %v2139 = vpop.permute.xlu0 %2138
    %2140 = vrot.lane.b32.xlu0 %v1308, 32
    %v2141 = vpop.permute.xlu0 %2140
    %v2147 = vsel %vm157, %v2129, 0
    %v2149 = vsel %vm157, %v2127, 0
    %2151 = vmatprep.subr.mxu0 0.0
    %2152 = vmatpush1.msra.mxu0 %v2135
    %2153 = vmatprep.subr.mxu0 0.0
    %2154 = vmatpush1.msra.mxu0 %v2137
    %2155 = vmatprep.subr.mxu0 0.0
    %2156 = vmatpush1.msra.mxu0 %v2139
    %2157 = vmatprep.subr.mxu0 0.0
    %2158 = vmatpush1.msra.mxu0 %v2141
    %2159 = vmatprep.subr.mxu0 0.0
    %2160 = vmatpush1.msra.mxu0 0.0
    %2161 = vmatprep.subr.mxu0 0.0
    %2162 = vmatpush1.msra.mxu0 0.0
    %2163 = vmatprep.subr.mxu0 0.0
    %2164 = vmatpush1.msra.mxu0 0.0
    %2165 = vmatprep.subr.mxu0 0.0
    %2166 = vmatpush1.msra.mxu0 0.0
    %2167 = vmatprep.subr.mxu0 0.0
    %2168 = vmatpush1.msra.mxu0 0.0
    %2169 = vmatprep.subr.mxu0 0.0
    %2170 = vmatpush1.msra.mxu0 0.0
    %2171 = vmatprep.subr.mxu0 0.0
    %2172 = vmatpush1.msra.mxu0 0.0
    %2173 = vmatprep.subr.mxu0 0.0
    %2174 = vmatpush1.msra.mxu0 0.0
    %2175 = vmatprep.subr.mxu0 0.0
    %2176 = vmatpush1.msra.mxu0 0.0
    %2177 = vmatprep.subr.mxu0 0.0
    %2178 = vmatpush1.msra.mxu0 0.0
    %2179 = vmatprep.subr.mxu0 0.0
    %2180 = vmatpush1.msra.mxu0 0.0
    %2181 = vmatprep.subr.mxu0 0.0
    %2182 = vmatpush1.msra.mxu0 0.0
    %2183 = vmatprep.subr.mxu0 0.0
    %2184 = vmatpush1.msra.mxu0 0.0
    %2185 = vmatprep.subr.mxu0 0.0
    %2186 = vmatpush1.msra.mxu0 0.0
    %2187 = vmatprep.subr.mxu0 0.0
    %2188 = vmatpush1.msra.mxu0 0.0
    %2189 = vmatprep.subr.mxu0 0.0
    %2190 = vmatpush1.msra.mxu0 0.0
    %2191 = vmatprep.subr.mxu0 0.0
    %2192 = vmatpush1.msra.mxu0 0.0
    %2193 = vmatprep.subr.mxu0 0.0
    %2194 = vmatpush1.msra.mxu0 0.0
    %2195 = vmatprep.subr.mxu0 0.0
    %2196 = vmatpush1.msra.mxu0 0.0
    %2197 = vmatprep.subr.mxu0 0.0
    %2198 = vmatpush1.msra.mxu0 0.0
    %2199 = vmatprep.subr.mxu0 0.0
    %2200 = vmatpush1.msra.mxu0 0.0
    %2201 = vmatprep.subr.mxu0 0.0
    %2202 = vmatpush1.msra.mxu0 0.0
    %2203 = vmatprep.subr.mxu0 0.0
    %2204 = vmatpush1.msra.mxu0 0.0
    %2205 = vmatprep.subr.mxu0 0.0
    %2206 = vmatpush1.msra.mxu0 0.0
    %2207 = vmatprep.subr.mxu0 0.0
    %2208 = vmatpush1.msra.mxu0 0.0
    %2209 = vmatprep.subr.mxu0 0.0
    %2210 = vmatpush1.msra.mxu0 0.0
    %2211 = vmatprep.subr.mxu0 0.0
    %2212 = vmatpush1.msra.mxu0 0.0
    %2213 = vmatprep.subr.mxu0 0.0
    %2214 = vmatpush1.msra.mxu0 0.0
    %2215 = vmatprep.mubr.f32.mxu0 0.0
    %2216 = vmatmul.mubr.f32.gmra.mrb[0].mxu0 %v2147
    %v2217 = vpop.f32.mrb[0].mxu0
    %v2218 = vadd.f32 0.0, %v2217
    %v2219 = vpop.f32.mrb[0].mxu0
    %2220 = vmatprep.mubr.f32.mxu0 0.0
    %2221 = vmatmul.mubr.f32.gmra.mrb[0].mxu0 %v2149
    %v2222 = vpop.f32.mrb[0].mxu0
    %v2223 = vadd.f32 0.0, %v2222
    %v2224 = vpop.f32.mrb[0].mxu0
    %2225 = vdwg.mxu0
    %v2226 = vadd.f32 %v1302, %v2218
    %v2227 = vadd.f32 %v1303, %v2223
    %v2228 = vlaneseq
    %v2229 = vshrl.u32 %v2228, 7
    %v2230 = vsub.s32 3, %v2229
    %v2231 = vrot.slane %v1323, %v2230
    %v2232 = vadd.f32 %v2226, %v2231
    %v2233 = vadd.f32 %v2227, %v2231
    %v2234 = vsel %vm157, %v2232, 0.0
    %2235 = vadd.xlane.f32.xlu0 %v2234
    %v2236 = vpop.xlane.xlu0 %2235
    %v2237 = vsel %vm161, %v2233, 0.0
    %2238 = vadd.xlane.f32.xlu0 %v2237
    %v2239 = vpop.xlane.xlu0 %2238
    %v2240 = vmul.f32 %v2236, %v165
    %v2241 = vmul.f32 %v2239, %v165
    %v2242 = vsub.f32 %v2232, %v2240
    %v2243 = vsub.f32 %v2233, %v2241
    %v2244 = vmul.f32 %v2242, %v2242
    %v2245 = vmul.f32 %v2243, %v2243
    %v2246 = vsel %vm157, %v2244, 0.0
    %2247 = vadd.xlane.f32.xlu0 %v2246
    %v2248 = vpop.xlane.xlu0 %2247
    %v2249 = vsel %vm161, %v2245, 0.0
    %2250 = vadd.xlane.f32.xlu0 %v2249
    %v2251 = vpop.xlane.xlu0 %2250
    %v2252 = vmul.f32 %v2248, %v165
    %v2253 = vmul.f32 %v2251, %v165
    %v2254 = vadd.f32 %v2252, 1e-06
    %v2255 = vadd.f32 %v2253, 1e-06
    %v2256 = vrsqrt.pop %v2254
    %v2257 = vrsqrt.pop %v2255
    %v2258 = vmul.f32 %v2242, %v2256
    %v2259 = vmul.f32 %v2243, %v2257
    %v2260 = vlaneseq
    %v2261 = vshrl.u32 %v2260, 7
    %v2262 = vsub.s32 4, %v2261
    %v2263 = vrot.slane %v1323, %v2262
    %v2264 = vmul.f32 %v2258, %v2263
    %v2265 = vmul.f32 %v2259, %v2263
    %v2266 = vlaneseq
    %v2267 = vshrl.u32 %v2266, 7
    %v2268 = vsub.s32 5, %v2267
    %v2269 = vrot.slane %v1323, %v2268
    %v2270 = vadd.f32 %v2264, %v2269
    %v2271 = vadd.f32 %v2265, %v2269
    %v2272 = vlaneseq
    %v2273 = vshrl.u32 %v2272, 7
    %v2274 = vsub.s32 6, %v2273
    %v2275 = vrot.slane %v1323, %v2274
    %v2277 = vsel %vm157, %v2270, 0
    %v2280 = vsel %vm157, %v2271, 0
    %2282 = vmatprep.subr.mxu0 0.0
    %2283 = vmatpush1.msra.mxu0 %v1309
    %2284 = vmatprep.subr.mxu0 0.0
    %2285 = vmatpush1.msra.mxu0 %v1310
    %2286 = vmatprep.subr.mxu0 0.0
    %2287 = vmatpush1.msra.mxu0 %v1311
    %2288 = vmatprep.subr.mxu0 0.0
    %2289 = vmatpush1.msra.mxu0 %v1312
    %2290 = vmatprep.subr.mxu0 0.0
    %2291 = vmatpush1.msra.mxu0 0.0
    %2292 = vmatprep.subr.mxu0 0.0
    %2293 = vmatpush1.msra.mxu0 0.0
    %2294 = vmatprep.subr.mxu0 0.0
    %2295 = vmatpush1.msra.mxu0 0.0
    %2296 = vmatprep.subr.mxu0 0.0
    %2297 = vmatpush1.msra.mxu0 0.0
    %2298 = vmatprep.subr.mxu0 0.0
    %2299 = vmatpush1.msra.mxu0 0.0
    %2300 = vmatprep.subr.mxu0 0.0
    %2301 = vmatpush1.msra.mxu0 0.0
    %2302 = vmatprep.subr.mxu0 0.0
    %2303 = vmatpush1.msra.mxu0 0.0
    %2304 = vmatprep.subr.mxu0 0.0
    %2305 = vmatpush1.msra.mxu0 0.0
    %2306 = vmatprep.subr.mxu0 0.0
    %2307 = vmatpush1.msra.mxu0 0.0
    %2308 = vmatprep.subr.mxu0 0.0
    %2309 = vmatpush1.msra.mxu0 0.0
    %2310 = vmatprep.subr.mxu0 0.0
    %2311 = vmatpush1.msra.mxu0 0.0
    %2312 = vmatprep.subr.mxu0 0.0
    %2313 = vmatpush1.msra.mxu0 0.0
    %2314 = vmatprep.subr.mxu0 0.0
    %2315 = vmatpush1.msra.mxu0 0.0
    %2316 = vmatprep.subr.mxu0 0.0
    %2317 = vmatpush1.msra.mxu0 0.0
    %2318 = vmatprep.subr.mxu0 0.0
    %2319 = vmatpush1.msra.mxu0 0.0
    %2320 = vmatprep.subr.mxu0 0.0
    %2321 = vmatpush1.msra.mxu0 0.0
    %2322 = vmatprep.subr.mxu0 0.0
    %2323 = vmatpush1.msra.mxu0 0.0
    %2324 = vmatprep.subr.mxu0 0.0
    %2325 = vmatpush1.msra.mxu0 0.0
    %2326 = vmatprep.subr.mxu0 0.0
    %2327 = vmatpush1.msra.mxu0 0.0
    %2328 = vmatprep.subr.mxu0 0.0
    %2329 = vmatpush1.msra.mxu0 0.0
    %2330 = vmatprep.subr.mxu0 0.0
    %2331 = vmatpush1.msra.mxu0 0.0
    %2332 = vmatprep.subr.mxu0 0.0
    %2333 = vmatpush1.msra.mxu0 0.0
    %2334 = vmatprep.subr.mxu0 0.0
    %2335 = vmatpush1.msra.mxu0 0.0
    %2336 = vmatprep.subr.mxu0 0.0
    %2337 = vmatpush1.msra.mxu0 0.0
    %2338 = vmatprep.subr.mxu0 0.0
    %2339 = vmatpush1.msra.mxu0 0.0
    %2340 = vmatprep.subr.mxu0 0.0
    %2341 = vmatpush1.msra.mxu0 0.0
    %2342 = vmatprep.subr.mxu0 0.0
    %2343 = vmatpush1.msra.mxu0 0.0
    %2344 = vmatprep.subr.mxu0 0.0
    %2345 = vmatpush1.msra.mxu0 0.0
    %2346 = vmatprep.mubr.f32.mxu0 0.0
    %2347 = vmatmul.mubr.f32.gmra.mrb[0].mxu0 %v2277
    %v2348 = vpop.f32.mrb[0].mxu0
    %v2349 = vadd.f32 %v2275, %v2348
    %v2350 = vpop.f32.mrb[0].mxu0
    %2351 = vmatprep.mubr.f32.mxu0 0.0
    %2352 = vmatmul.mubr.f32.gmra.mrb[0].mxu0 %v2280
    %v2353 = vpop.f32.mrb[0].mxu0
    %v2354 = vadd.f32 %v2275, %v2353
    %v2355 = vpop.f32.mrb[0].mxu0
    %2356 = vdwg.mxu0
    %v2357 = vmul.f32 %v2349, %v2349
    %v2358 = vmul.f32 %v2354, %v2354
    %v2359 = vmul.f32 %v2349, %v2357
    %v2360 = vmul.f32 %v2354, %v2358
    %v2361 = vmul.f32 %v2359, 0.044715
    %v2362 = vmul.f32 %v2360, 0.044715
    %v2363 = vadd.f32 %v2349, %v2361
    %v2364 = vadd.f32 %v2354, %v2362
    %v2365 = vmul.f32 %v2363, 0.7978846
    %v2366 = vmul.f32 %v2364, 0.7978846
    %v2367 = vtanh.pop %v2365
    %v2368 = vtanh.pop %v2366
    %v2369 = vadd.f32 %v2367, 1.0
    %v2370 = vadd.f32 %v2368, 1.0
    %v2371 = vmul.f32 %v2369, 0.5
    %v2372 = vmul.f32 %v2370, 0.5
    %v2373 = vmul.f32 %v2349, %v2371
    %v2374 = vmul.f32 %v2354, %v2372
    %v2376 = vsel %vm58, %v2373, 0
    %v2379 = vsel %vm58, %v2374, 0
    %2381 = vmatprep.subr.mxu0 0.0
    %2382 = vmatpush1.msra.mxu0 %v1314
    %2383 = vmatprep.subr.mxu0 0.0
    %2384 = vmatpush1.msra.mxu0 %v1315
    %2385 = vmatprep.subr.mxu0 0.0
    %2386 = vmatpush1.msra.mxu0 %v1316
    %2387 = vmatprep.subr.mxu0 0.0
    %2388 = vmatpush1.msra.mxu0 %v1317
    %2389 = vmatprep.subr.mxu0 0.0
    %2390 = vmatpush1.msra.mxu0 %v1318
    %2391 = vmatprep.subr.mxu0 0.0
    %2392 = vmatpush1.msra.mxu0 %v1319
    %2393 = vmatprep.subr.mxu0 0.0
    %2394 = vmatpush1.msra.mxu0 %v1320
    %2395 = vmatprep.subr.mxu0 0.0
    %2396 = vmatpush1.msra.mxu0 %v1321
    %2397 = vmatprep.subr.mxu0 0.0
    %2398 = vmatpush1.msra.mxu0 0.0
    %2399 = vmatprep.subr.mxu0 0.0
    %2400 = vmatpush1.msra.mxu0 0.0
    %2401 = vmatprep.subr.mxu0 0.0
    %2402 = vmatpush1.msra.mxu0 0.0
    %2403 = vmatprep.subr.mxu0 0.0
    %2404 = vmatpush1.msra.mxu0 0.0
    %2405 = vmatprep.subr.mxu0 0.0
    %2406 = vmatpush1.msra.mxu0 0.0
    %2407 = vmatprep.subr.mxu0 0.0
    %2408 = vmatpush1.msra.mxu0 0.0
    %2409 = vmatprep.subr.mxu0 0.0
    %2410 = vmatpush1.msra.mxu0 0.0
    %2411 = vmatprep.subr.mxu0 0.0
    %2412 = vmatpush1.msra.mxu0 0.0
    %2413 = vmatprep.subr.mxu0 0.0
    %2414 = vmatpush1.msra.mxu0 0.0
    %2415 = vmatprep.subr.mxu0 0.0
    %2416 = vmatpush1.msra.mxu0 0.0
    %2417 = vmatprep.subr.mxu0 0.0
    %2418 = vmatpush1.msra.mxu0 0.0
    %2419 = vmatprep.subr.mxu0 0.0
    %2420 = vmatpush1.msra.mxu0 0.0
    %2421 = vmatprep.subr.mxu0 0.0
    %2422 = vmatpush1.msra.mxu0 0.0
    %2423 = vmatprep.subr.mxu0 0.0
    %2424 = vmatpush1.msra.mxu0 0.0
    %2425 = vmatprep.subr.mxu0 0.0
    %2426 = vmatpush1.msra.mxu0 0.0
    %2427 = vmatprep.subr.mxu0 0.0
    %2428 = vmatpush1.msra.mxu0 0.0
    %2429 = vmatprep.subr.mxu0 0.0
    %2430 = vmatpush1.msra.mxu0 0.0
    %2431 = vmatprep.subr.mxu0 0.0
    %2432 = vmatpush1.msra.mxu0 0.0
    %2433 = vmatprep.subr.mxu0 0.0
    %2434 = vmatpush1.msra.mxu0 0.0
    %2435 = vmatprep.subr.mxu0 0.0
    %2436 = vmatpush1.msra.mxu0 0.0
    %2437 = vmatprep.subr.mxu0 0.0
    %2438 = vmatpush1.msra.mxu0 0.0
    %2439 = vmatprep.subr.mxu0 0.0
    %2440 = vmatpush1.msra.mxu0 0.0
    %2441 = vmatprep.subr.mxu0 0.0
    %2442 = vmatpush1.msra.mxu0 0.0
    %2443 = vmatprep.subr.mxu0 0.0
    %2444 = vmatpush1.msra.mxu0 0.0
    %2445 = vmatprep.mubr.f32.mxu0 0.0
    %2446 = vmatmul.mubr.f32.gmra.mrb[0].mxu0 %v2376
    %v2447 = vpop.f32.mrb[0].mxu0
    %v2448 = vadd.f32 0.0, %v2447
    %v2449 = vpop.f32.mrb[0].mxu0
    %2450 = vmatprep.mubr.f32.mxu0 0.0
    %2451 = vmatmul.mubr.f32.gmra.mrb[0].mxu0 %v2379
    %v2452 = vpop.f32.mrb[0].mxu0
    %v2453 = vadd.f32 0.0, %v2452
    %v2454 = vpop.f32.mrb[0].mxu0
    %2455 = vdwg.mxu0
    %v2456 = vadd.f32 %v2232, %v2448
    %v2457 = vadd.f32 %v2233, %v2453
    %v2458 = vlaneseq
    %v2459 = vshrl.u32 %v2458, 7
    %v2460 = vsub.s32 7, %v2459
    %v2461 = vrot.slane %v1323, %v2460
    %v2462 = vadd.f32 %v2456, %v2461
    %v2463 = vadd.f32 %v2457, %v2461
    %v2464 = vld [vmem:[%s2 + $0x5] sm:$0x1]
    %v2465 = vld [vmem:[%s2 + $0x6] sm:$0x1]
    %v2466 = vsel %vm157, %v2462, 0.0
    %2467 = vadd.xlane.f32.xlu0 %v2466
    %v2468 = vpop.xlane.xlu0 %2467
    %v2469 = vsel %vm161, %v2463, 0.0
    %2470 = vadd.xlane.f32.xlu0 %v2469
    %v2471 = vpop.xlane.xlu0 %2470
    %v2472 = vmul.f32 %v2468, %v165
    %v2473 = vmul.f32 %v2471, %v165
    %v2474 = vsub.f32 %v2462, %v2472
    %v2475 = vsub.f32 %v2463, %v2473
    %v2476 = vmul.f32 %v2474, %v2474
    %v2477 = vmul.f32 %v2475, %v2475
    %v2478 = vsel %vm157, %v2476, 0.0
    %2479 = vadd.xlane.f32.xlu0 %v2478
    %v2480 = vpop.xlane.xlu0 %2479
    %v2481 = vsel %vm161, %v2477, 0.0
    %2482 = vadd.xlane.f32.xlu0 %v2481
    %v2483 = vpop.xlane.xlu0 %2482
    %v2484 = vmul.f32 %v2480, %v165
    %v2485 = vmul.f32 %v2483, %v165
    %v2486 = vadd.f32 %v2484, 1e-06
    %v2487 = vadd.f32 %v2485, 1e-06
    %v2488 = vrsqrt.pop %v2486
    %v2489 = vrsqrt.pop %v2487
    %v2490 = vmul.f32 %v2474, %v2488
    %v2491 = vmul.f32 %v2475, %v2489
    %v2492 = vlaneseq
    %v2493 = vshrl.u32 %v2492, 7
    %v2494 = vsub.s32 0, %v2493
    %v2495 = vrot.slane %v2464, %v2494
    %v2496 = vmul.f32 %v2490, %v2495
    %v2497 = vmul.f32 %v2491, %v2495
    %v2498 = vlaneseq
    %v2499 = vshrl.u32 %v2498, 7
    %v2500 = vsub.s32 0, %v2499
    %v2501 = vrot.slane %v2465, %v2500
    %v2502 = vadd.f32 %v2496, %v2501
    %v2503 = vadd.f32 %v2497, %v2501
    %vm2504 = vcmask 258049
    %2505 = vst.msk [vmem:[#allocation2 - $0x1] sm:$0x1e] %vm2504, %v2502
    %s2506 = scalar_lea.vmem [#allocation2], 4
    %vm2507 = vcmask 261126
    %2508 = vst.msk [vmem:[%s2506 - $0x6] sm:$0xc0] %vm2507, %v2502
    %2509 = vst.msk [vmem:[%s2506 + $0x2] sm:$0x3] %vm161, %v2503
    // Predicated region
    $region26: #{vit_wrapper_forward.1} parent=1 // pred_check
      _
    $region27: #{vit_wrapper_forward.1} parent=1 // pred_check_branch
      %2511 = sbr.rel (0) target = $region29
    $region28: #{vit_wrapper_forward.1} parent=1 // pred_region
      %s2513 = ssub.s32 128, 128
      %2514 = vsyncadd [#allocation3], %s2513
      %s2515 = sshll.u32 [#allocation2], 4
      %s2516 = int_to_ptr.vmem [resolvable:$true] %s2515
      %2521 = dma.vmem_to_hbm [thread:$0]  %s2516, 128, %s6, [#allocation3], 64, 64, 4
    $region29: #{vit_wrapper_forward.1} parent=1 // pred_fallthru
      _
    // Predicated region
    $region30: #{vit_wrapper_forward.1} parent=1 // pred_check
      _
    $region31: #{vit_wrapper_forward.1} parent=1 // pred_check_branch
      %2523 = sbr.rel (0) target = $region33
    $region32: #{vit_wrapper_forward.1} parent=1 // pred_region
      %2524 = dma.done [#allocation3], 128
    $region33: #{vit_wrapper_forward.1} parent=1 // pred_fallthru
      _
    %2525 = vsyncpa [#allocation3], 1

</llo_original>
